<compile_context>
chip_gen: v5e
topology: v5e:2x2
jax: 0.10.0
libtpu: 0.0.40
codegen_flags: <defaults>
</compile_context>

<pallas_src>
import jax
import jax.numpy as jnp
from jax import lax
from jax.experimental import pallas as pl
from jax.experimental.pallas import tpu as pltpu


_CONV_TILE_M = 1024        # pooled output positions per grid step (multiple of 8)
_FC_TILE_M = 512           # batch rows per grid step (multiple of 8)
_VMEM_LIMIT = 64 * 1024 * 1024


# ------------------------- Pallas kernels -------------------------

def _conv_relu_pool_kernel(pa_ref, pb_ref, pc_ref, pd_ref, w_ref, b_ref, o_ref):
    """Fused conv(as matmul) + bias + ReLU + 2x2 maxpool.

    pa..pd hold the im2col patch rows of the four positions of each 2x2 pooling
    window (identical pooled-row ordering).  Since bias-add and ReLU are
    monotone:  maxpool(relu(conv(x)+b)) == relu(max_k(patches_k @ W) + b).
    """
    w = w_ref[...]
    ya = jnp.dot(pa_ref[...], w, preferred_element_type=jnp.float32)
    yb = jnp.dot(pb_ref[...], w, preferred_element_type=jnp.float32)
    yc = jnp.dot(pc_ref[...], w, preferred_element_type=jnp.float32)
    yd = jnp.dot(pd_ref[...], w, preferred_element_type=jnp.float32)
    y = jnp.maximum(jnp.maximum(ya, yb), jnp.maximum(yc, yd)) + b_ref[...]
    o_ref[...] = jnp.maximum(y, 0.0)


def _mlp_head_kernel(x_ref, w1_ref, b1_ref, w2_ref, b2_ref, o_ref):
    """Fused fc1 + ReLU + fc2 + log_softmax; the fc1 activation stays in VMEM."""
    h = jnp.dot(x_ref[...], w1_ref[...], preferred_element_type=jnp.float32)
    h = jnp.maximum(h + b1_ref[...], 0.0)
    y = jnp.dot(h, w2_ref[...], preferred_element_type=jnp.float32) + b2_ref[...]
    m = jnp.max(y, axis=1, keepdims=True)
    z = y - m
    lse = jnp.log(jnp.sum(jnp.exp(z), axis=1, keepdims=True))
    o_ref[...] = z - lse


# ------------------------- pallas_call wrappers -------------------------

def _row_tile(m, target):
    # Full array if it already fits a single tile (allows non-multiple-of-8 M);
    # otherwise a fixed multiple-of-8 tile with a masked ragged edge.
    return m if m <= target else target


def conv_relu_pool(pa, pb, pc, pd, w, b, *, tile_m=_CONV_TILE_M):
    """pa..pd: (M, K) corner patch matrices; w: (K, Cout); b: (1, Cout)."""
    M, K = pa.shape
    Kw, cout = w.shape
    assert Kw == K and b.shape == (1, cout)
    tm = _row_tile(M, tile_m)
    row_spec = pl.BlockSpec((tm, K), lambda i: (i, 0))
    cost = pl.CostEstimate(
        flops=4 * 2 * M * K * cout,
        transcendentals=0,
        bytes_accessed=4 * (4 * M * K + K * cout + cout + M * cout))
    return pl.pallas_call(
        _conv_relu_pool_kernel,
        out_shape=jax.ShapeDtypeStruct((M, cout), jnp.float32),
        grid=(pl.cdiv(M, tm),),
        in_specs=[row_spec, row_spec, row_spec, row_spec,
                  pl.BlockSpec((K, cout), lambda i: (0, 0)),
                  pl.BlockSpec((1, cout), lambda i: (0, 0))],
        out_specs=pl.BlockSpec((tm, cout), lambda i: (i, 0)),
        compiler_params=pltpu.CompilerParams(
            dimension_semantics=("parallel",),
            vmem_limit_bytes=_VMEM_LIMIT),
        cost_estimate=cost,
    )(pa, pb, pc, pd, w, b)


def mlp_head(x, w1, b1, w2, b2, *, tile_m=_FC_TILE_M):
    """x: (M, K); w1: (K, H); b1: (1, H); w2: (H, Cout); b2: (1, Cout)."""
    M, K = x.shape
    _, H = w1.shape
    _, cout = w2.shape
    tm = _row_tile(M, tile_m)
    cost = pl.CostEstimate(
        flops=2 * M * K * H + 2 * M * H * cout,
        transcendentals=M * (cout + 1),
        bytes_accessed=4 * (M * K + K * H + H + H * cout + cout + M * cout))
    return pl.pallas_call(
        _mlp_head_kernel,
        out_shape=jax.ShapeDtypeStruct((M, cout), jnp.float32),
        grid=(pl.cdiv(M, tm),),
        in_specs=[pl.BlockSpec((tm, K), lambda i: (i, 0)),
                  pl.BlockSpec((K, H), lambda i: (0, 0)),
                  pl.BlockSpec((1, H), lambda i: (0, 0)),
                  pl.BlockSpec((H, cout), lambda i: (0, 0)),
                  pl.BlockSpec((1, cout), lambda i: (0, 0))],
        out_specs=pl.BlockSpec((tm, cout), lambda i: (i, 0)),
        compiler_params=pltpu.CompilerParams(
            dimension_semantics=("parallel",),
            vmem_limit_bytes=_VMEM_LIMIT),
        cost_estimate=cost,
    )(x, w1, b1, w2, b2)


# ------------------------- JAX glue -------------------------

def _pooled_corner_patches(x_nhwc, kh, kw):
    """im2col patches of the stride-1 (kh,kw) VALID conv, sampled at the four
    positions of each 2x2 maxpool window.

    Returns 4 arrays of shape (N*ph*pw, C*kh*kw); rows ordered (n, pi, pj),
    K ordered (c, ki, kj) -- matching torch weight.reshape(out_c, in_c*kh*kw).
    """
    N, H, W, C = x_nhwc.shape
    oh, ow = H - kh + 1, W - kw + 1
    ph, pw = oh // 2, ow // 2
    corners = []
    for di in (0, 1):
        for dj in (0, 1):
            p = lax.conv_general_dilated_patches(
                x_nhwc[:, di:, dj:, :],
                filter_shape=(kh, kw),
                window_strides=(2, 2),
                padding='VALID',
                dimension_numbers=('NHWC', 'HWIO', 'NHWC'),
                precision=lax.Precision.HIGHEST)
            p = p[:, :ph, :pw, :]                       # (N, ph, pw, C*kh*kw)
            corners.append(p.reshape(N * ph * pw, C * kh * kw))
    return corners, (ph, pw)


def init_params(key):
    ks = jax.random.split(key, 8)
    scale = 0.1
    return {
        "conv1_w": scale * jax.random.normal(ks[0], (10, 1, 5, 5), jnp.float32),
        "conv1_b": scale * jax.random.normal(ks[1], (10,), jnp.float32),
        "conv2_w": scale * jax.random.normal(ks[2], (50, 10, 5, 5), jnp.float32),
        "conv2_b": scale * jax.random.normal(ks[3], (50,), jnp.float32),
        "fc1_w": scale * jax.random.normal(ks[4], (256, 800), jnp.float32),
        "fc1_b": scale * jax.random.normal(ks[5], (256,), jnp.float32),
        "fc2_w": scale * jax.random.normal(ks[6], (10, 256), jnp.float32),
        "fc2_b": scale * jax.random.normal(ks[7], (10,), jnp.float32),
    }


def cnn_forward(params, x_nchw):
    """x_nchw: (N, 1, 28, 28) float32 -> (N, 10) log-probabilities."""
    N = x_nchw.shape[0]
    x = jnp.transpose(x_nchw, (0, 2, 3, 1))                 # NHWC (N, 28, 28, 1)

    # conv1 (1->10, k=5) + ReLU + maxpool 2x2, fused
    w1 = params["conv1_w"].reshape(10, 25).T                 # (25, 10)
    b1 = params["conv1_b"].reshape(1, 10)
    (pa, pb, pc, pd), (ph1, pw1) = _pooled_corner_patches(x, 5, 5)
    h1 = conv_relu_pool(pa, pb, pc, pd, w1, b1)              # (N*12*12, 10)
    h1 = h1.reshape(N, ph1, pw1, 10)                         # NHWC (N, 12, 12, 10)

    # conv2 (10->50, k=5) + ReLU + maxpool 2x2, fused
    w2 = params["conv2_w"].reshape(50, 250).T                # (250, 50)
    b2 = params["conv2_b"].reshape(1, 50)
    (qa, qb, qc, qd), (ph2, pw2) = _pooled_corner_patches(h1, 5, 5)
    h2 = conv_relu_pool(qa, qb, qc, qd, w2, b2)              # (N*4*4, 50)
    h2 = h2.reshape(N, ph2, pw2, 50)                         # NHWC (N, 4, 4, 50)

    # flatten in torch NCHW order: (N, 50, 4, 4) -> (N, 800)
    flat = jnp.transpose(h2, (0, 3, 1, 2)).reshape(N, 800)

    # fc1 (800->256) + ReLU + fc2 (256->10) + log_softmax, fused
    return mlp_head(flat,
                    params["fc1_w"].T, params["fc1_b"].reshape(1, 256),
                    params["fc2_w"].T, params["fc2_b"].reshape(1, 10))


def cnn_forward_ref(params, x_nchw):
    """Pure-XLA reference with the exact PyTorch forward semantics."""
    hp = lax.Precision.HIGHEST

    def conv(x, w, b):
        y = lax.conv_general_dilated(
            x, w, window_strides=(1, 1), padding='VALID',
            dimension_numbers=('NCHW', 'OIHW', 'NCHW'), precision=hp)
        return y + b.reshape(1, -1, 1, 1)

    def pool(x):
        return lax.reduce_window(x, -jnp.inf, lax.max,
                                 (1, 1, 2, 2), (1, 1, 2, 2), 'VALID')

    h = pool(jax.nn.relu(conv(x_nchw, params["conv1_w"], params["conv1_b"])))
    h = pool(jax.nn.relu(conv(h, params["conv2_w"], params["conv2_b"])))
    h = h.reshape(h.shape[0], -1)
    h = jax.nn.relu(jnp.dot(h, params["fc1_w"].T, precision=hp) + params["fc1_b"])
    y = jnp.dot(h, params["fc2_w"].T, precision=hp) + params["fc2_b"]
    return jax.nn.log_softmax(y, axis=1)


if __name__ == "__main__":
    key = jax.random.PRNGKey(0)
    k_x, k_p = jax.random.split(key)
    # Small MNIST-shaped batch (N=8 exercises both the multi-tile and the
    # ragged-edge path of the conv1 grid: M = 8*144 = 1152 rows, tile 1024).
    x = jax.random.normal(k_x, (8, 1, 28, 28), jnp.float32)
    params = init_params(k_p)

    fwd = jax.jit(cnn_forward)
    logp = jax.block_until_ready(fwd(params, x))

    assert logp.shape == (8, 10), logp.shape
    # log_softmax sanity: rows exponentiate + sum to 1
    row_sums = jnp.sum(jnp.exp(logp), axis=1)
    assert bool(jnp.all(jnp.abs(row_sums - 1.0) < 1e-4)), row_sums

    # Cross-check against a pure-XLA reference (loose tol: accumulation-order /
    # MXU-pass differences only; layout bugs would show up as O(1) errors).
    ref = jax.block_until_ready(jax.jit(cnn_forward_ref)(params, x))
    max_err = float(jnp.max(jnp.abs(logp - ref)))
    assert bool(jnp.allclose(logp, ref, atol=5e-2, rtol=5e-2)), max_err

    print("KERNEL_OK")
</pallas_src>

<mosaic_0001>
module attributes {stable_mosaic.version = 11 : i64} {
  func.func @_conv_relu_pool_kernel(%arg0: i32, %arg1: memref<1024x25xf32, #tpu.memory_space<vmem>>, %arg2: memref<1024x25xf32, #tpu.memory_space<vmem>>, %arg3: memref<1024x25xf32, #tpu.memory_space<vmem>>, %arg4: memref<1024x25xf32, #tpu.memory_space<vmem>>, %arg5: memref<25x10xf32, #tpu.memory_space<vmem>>, %arg6: memref<1x10xf32, #tpu.memory_space<vmem>>, %arg7: memref<1024x10xf32, #tpu.memory_space<vmem>>) attributes {dimension_semantics = [#tpu.dimension_semantics<parallel>], iteration_bounds = array<i64: 2>, scalar_prefetch = 0 : i64, scratch_operands = 0 : i64, tpu.core_type = #tpu.core_type<tc>, window_params = [{transform_indices = @transform_0, window_bounds = array<i64: 1024, 25>}, {transform_indices = @transform_1, window_bounds = array<i64: 1024, 25>}, {transform_indices = @transform_2, window_bounds = array<i64: 1024, 25>}, {transform_indices = @transform_3, window_bounds = array<i64: 1024, 25>}, {pipeline_mode = #tpu.pipeline_mode<synchronous>, transform_indices = @transform_4, window_bounds = array<i64: 25, 10>}, {pipeline_mode = #tpu.pipeline_mode<synchronous>, transform_indices = @transform_5, window_bounds = array<i64: 1, 10>}, {transform_indices = @transform_6, window_bounds = array<i64: 1024, 10>}]} {
    %c0 = arith.constant 0 : index
    %c0_0 = arith.constant 0 : index
    %0 = vector.load %arg5[%c0, %c0_0] : memref<25x10xf32, #tpu.memory_space<vmem>>, vector<25x10xf32>
    %c0_1 = arith.constant 0 : index
    %c0_2 = arith.constant 0 : index
    %1 = vector.load %arg1[%c0_1, %c0_2] : memref<1024x25xf32, #tpu.memory_space<vmem>>, vector<1024x25xf32>
    %cst = arith.constant dense<0.000000e+00> : vector<1024x10xf32>
    %2 = tpu.matmul %1, %0, %cst {dimension_numbers = #tpu.dot_dimension_numbers<[1], [0], [0], [1], [0, 0, 1, 1], [], []>} : vector<1024x25xf32>, vector<25x10xf32>, vector<1024x10xf32> -> vector<1024x10xf32>
    %c0_3 = arith.constant 0 : index
    %c0_4 = arith.constant 0 : index
    %3 = vector.load %arg2[%c0_3, %c0_4] : memref<1024x25xf32, #tpu.memory_space<vmem>>, vector<1024x25xf32>
    %cst_5 = arith.constant dense<0.000000e+00> : vector<1024x10xf32>
    %4 = tpu.matmul %3, %0, %cst_5 {dimension_numbers = #tpu.dot_dimension_numbers<[1], [0], [0], [1], [0, 0, 1, 1], [], []>} : vector<1024x25xf32>, vector<25x10xf32>, vector<1024x10xf32> -> vector<1024x10xf32>
    %c0_6 = arith.constant 0 : index
    %c0_7 = arith.constant 0 : index
    %5 = vector.load %arg3[%c0_6, %c0_7] : memref<1024x25xf32, #tpu.memory_space<vmem>>, vector<1024x25xf32>
    %cst_8 = arith.constant dense<0.000000e+00> : vector<1024x10xf32>
    %6 = tpu.matmul %5, %0, %cst_8 {dimension_numbers = #tpu.dot_dimension_numbers<[1], [0], [0], [1], [0, 0, 1, 1], [], []>} : vector<1024x25xf32>, vector<25x10xf32>, vector<1024x10xf32> -> vector<1024x10xf32>
    %c0_9 = arith.constant 0 : index
    %c0_10 = arith.constant 0 : index
    %7 = vector.load %arg4[%c0_9, %c0_10] : memref<1024x25xf32, #tpu.memory_space<vmem>>, vector<1024x25xf32>
    %cst_11 = arith.constant dense<0.000000e+00> : vector<1024x10xf32>
    %8 = tpu.matmul %7, %0, %cst_11 {dimension_numbers = #tpu.dot_dimension_numbers<[1], [0], [0], [1], [0, 0, 1, 1], [], []>} : vector<1024x25xf32>, vector<25x10xf32>, vector<1024x10xf32> -> vector<1024x10xf32>
    %9 = arith.maximumf %2, %4 : vector<1024x10xf32>
    %10 = arith.maximumf %6, %8 : vector<1024x10xf32>
    %11 = arith.maximumf %9, %10 : vector<1024x10xf32>
    %c0_12 = arith.constant 0 : index
    %c0_13 = arith.constant 0 : index
    %12 = vector.load %arg6[%c0_12, %c0_13] : memref<1x10xf32, #tpu.memory_space<vmem>>, vector<1x10xf32>
    %13 = vector.broadcast %12 : vector<1x10xf32> to vector<1024x10xf32>
    %14 = arith.addf %11, %13 : vector<1024x10xf32>
    %cst_14 = arith.constant 0.000000e+00 : f32
    %15 = vector.broadcast %cst_14 : f32 to vector<1024x10xf32>
    %16 = arith.maximumf %14, %15 : vector<1024x10xf32>
    %c0_15 = arith.constant 0 : index
    %c0_16 = arith.constant 0 : index
    %17 = vector.load %arg7[%c0_15, %c0_16] : memref<1024x10xf32, #tpu.memory_space<vmem>>, vector<1024x10xf32>
    tpu.vector_store %arg7[%c0_15, %c0_16], %16 {strides = array<i32>} : memref<1024x10xf32, #tpu.memory_space<vmem>>, vector<1024x10xf32>,
    return
  }
  func.func @transform_0(%arg0: i32) -> (i32, i32) {
    %c0_i32 = arith.constant 0 : i32
    %c0_i32_0 = arith.constant 0 : i32
    return %arg0, %c0_i32 : i32, i32
  }
  func.func @transform_1(%arg0: i32) -> (i32, i32) {
    %c0_i32 = arith.constant 0 : i32
    %c0_i32_0 = arith.constant 0 : i32
    return %arg0, %c0_i32 : i32, i32
  }
  func.func @transform_2(%arg0: i32) -> (i32, i32) {
    %c0_i32 = arith.constant 0 : i32
    %c0_i32_0 = arith.constant 0 : i32
    return %arg0, %c0_i32 : i32, i32
  }
  func.func @transform_3(%arg0: i32) -> (i32, i32) {
    %c0_i32 = arith.constant 0 : i32
    %c0_i32_0 = arith.constant 0 : i32
    return %arg0, %c0_i32 : i32, i32
  }
  func.func @transform_4(%arg0: i32) -> (i32, i32) {
    %c0_i32 = arith.constant 0 : i32
    %c0_i32_0 = arith.constant 0 : i32
    %c0_i32_1 = arith.constant 0 : i32
    return %c0_i32, %c0_i32_0 : i32, i32
  }
  func.func @transform_5(%arg0: i32) -> (i32, i32) {
    %c0_i32 = arith.constant 0 : i32
    %c0_i32_0 = arith.constant 0 : i32
    %c0_i32_1 = arith.constant 0 : i32
    return %c0_i32, %c0_i32_0 : i32, i32
  }
  func.func @transform_6(%arg0: i32) -> (i32, i32) {
    %c0_i32 = arith.constant 0 : i32
    %c0_i32_0 = arith.constant 0 : i32
    return %arg0, %c0_i32 : i32, i32
  }
}

module attributes {stable_mosaic.version = 11 : i64} {
  func.func @_conv_relu_pool_kernel(%arg0: i32, %arg1: memref<128x250xf32, #tpu.memory_space<vmem>>, %arg2: memref<128x250xf32, #tpu.memory_space<vmem>>, %arg3: memref<128x250xf32, #tpu.memory_space<vmem>>, %arg4: memref<128x250xf32, #tpu.memory_space<vmem>>, %arg5: memref<250x50xf32, #tpu.memory_space<vmem>>, %arg6: memref<1x50xf32, #tpu.memory_space<vmem>>, %arg7: memref<128x50xf32, #tpu.memory_space<vmem>>) attributes {dimension_semantics = [#tpu.dimension_semantics<parallel>], iteration_bounds = array<i64: 1>, scalar_prefetch = 0 : i64, scratch_operands = 0 : i64, tpu.core_type = #tpu.core_type<tc>, window_params = [{transform_indices = @transform_0, window_bounds = array<i64: 128, 250>}, {transform_indices = @transform_1, window_bounds = array<i64: 128, 250>}, {transform_indices = @transform_2, window_bounds = array<i64: 128, 250>}, {transform_indices = @transform_3, window_bounds = array<i64: 128, 250>}, {pipeline_mode = #tpu.pipeline_mode<synchronous>, transform_indices = @transform_4, window_bounds = array<i64: 250, 50>}, {pipeline_mode = #tpu.pipeline_mode<synchronous>, transform_indices = @transform_5, window_bounds = array<i64: 1, 50>}, {transform_indices = @transform_6, window_bounds = array<i64: 128, 50>}]} {
    %c0 = arith.constant 0 : index
    %c0_0 = arith.constant 0 : index
    %0 = vector.load %arg5[%c0, %c0_0] : memref<250x50xf32, #tpu.memory_space<vmem>>, vector<250x50xf32>
    %c0_1 = arith.constant 0 : index
    %c0_2 = arith.constant 0 : index
    %1 = vector.load %arg1[%c0_1, %c0_2] : memref<128x250xf32, #tpu.memory_space<vmem>>, vector<128x250xf32>
    %cst = arith.constant dense<0.000000e+00> : vector<128x50xf32>
    %2 = tpu.matmul %1, %0, %cst {dimension_numbers = #tpu.dot_dimension_numbers<[1], [0], [0], [1], [0, 0, 1, 1], [], []>} : vector<128x250xf32>, vector<250x50xf32>, vector<128x50xf32> -> vector<128x50xf32>
    %c0_3 = arith.constant 0 : index
    %c0_4 = arith.constant 0 : index
    %3 = vector.load %arg2[%c0_3, %c0_4] : memref<128x250xf32, #tpu.memory_space<vmem>>, vector<128x250xf32>
    %cst_5 = arith.constant dense<0.000000e+00> : vector<128x50xf32>
    %4 = tpu.matmul %3, %0, %cst_5 {dimension_numbers = #tpu.dot_dimension_numbers<[1], [0], [0], [1], [0, 0, 1, 1], [], []>} : vector<128x250xf32>, vector<250x50xf32>, vector<128x50xf32> -> vector<128x50xf32>
    %c0_6 = arith.constant 0 : index
    %c0_7 = arith.constant 0 : index
    %5 = vector.load %arg3[%c0_6, %c0_7] : memref<128x250xf32, #tpu.memory_space<vmem>>, vector<128x250xf32>
    %cst_8 = arith.constant dense<0.000000e+00> : vector<128x50xf32>
    %6 = tpu.matmul %5, %0, %cst_8 {dimension_numbers = #tpu.dot_dimension_numbers<[1], [0], [0], [1], [0, 0, 1, 1], [], []>} : vector<128x250xf32>, vector<250x50xf32>, vector<128x50xf32> -> vector<128x50xf32>
    %c0_9 = arith.constant 0 : index
    %c0_10 = arith.constant 0 : index
    %7 = vector.load %arg4[%c0_9, %c0_10] : memref<128x250xf32, #tpu.memory_space<vmem>>, vector<128x250xf32>
    %cst_11 = arith.constant dense<0.000000e+00> : vector<128x50xf32>
    %8 = tpu.matmul %7, %0, %cst_11 {dimension_numbers = #tpu.dot_dimension_numbers<[1], [0], [0], [1], [0, 0, 1, 1], [], []>} : vector<128x250xf32>, vector<250x50xf32>, vector<128x50xf32> -> vector<128x50xf32>
    %9 = arith.maximumf %2, %4 : vector<128x50xf32>
    %10 = arith.maximumf %6, %8 : vector<128x50xf32>
    %11 = arith.maximumf %9, %10 : vector<128x50xf32>
    %c0_12 = arith.constant 0 : index
    %c0_13 = arith.constant 0 : index
    %12 = vector.load %arg6[%c0_12, %c0_13] : memref<1x50xf32, #tpu.memory_space<vmem>>, vector<1x50xf32>
    %13 = vector.broadcast %12 : vector<1x50xf32> to vector<128x50xf32>
    %14 = arith.addf %11, %13 : vector<128x50xf32>
    %cst_14 = arith.constant 0.000000e+00 : f32
    %15 = vector.broadcast %cst_14 : f32 to vector<128x50xf32>
    %16 = arith.maximumf %14, %15 : vector<128x50xf32>
    %c0_15 = arith.constant 0 : index
    %c0_16 = arith.constant 0 : index
    %17 = vector.load %arg7[%c0_15, %c0_16] : memref<128x50xf32, #tpu.memory_space<vmem>>, vector<128x50xf32>
    tpu.vector_store %arg7[%c0_15, %c0_16], %16 {strides = array<i32>} : memref<128x50xf32, #tpu.memory_space<vmem>>, vector<128x50xf32>,
    return
  }
  func.func @transform_0(%arg0: i32) -> (i32, i32) {
    %c0_i32 = arith.constant 0 : i32
    %c0_i32_0 = arith.constant 0 : i32
    return %arg0, %c0_i32 : i32, i32
  }
  func.func @transform_1(%arg0: i32) -> (i32, i32) {
    %c0_i32 = arith.constant 0 : i32
    %c0_i32_0 = arith.constant 0 : i32
    return %arg0, %c0_i32 : i32, i32
  }
  func.func @transform_2(%arg0: i32) -> (i32, i32) {
    %c0_i32 = arith.constant 0 : i32
    %c0_i32_0 = arith.constant 0 : i32
    return %arg0, %c0_i32 : i32, i32
  }
  func.func @transform_3(%arg0: i32) -> (i32, i32) {
    %c0_i32 = arith.constant 0 : i32
    %c0_i32_0 = arith.constant 0 : i32
    return %arg0, %c0_i32 : i32, i32
  }
  func.func @transform_4(%arg0: i32) -> (i32, i32) {
    %c0_i32 = arith.constant 0 : i32
    %c0_i32_0 = arith.constant 0 : i32
    %c0_i32_1 = arith.constant 0 : i32
    return %c0_i32, %c0_i32_0 : i32, i32
  }
  func.func @transform_5(%arg0: i32) -> (i32, i32) {
    %c0_i32 = arith.constant 0 : i32
    %c0_i32_0 = arith.constant 0 : i32
    %c0_i32_1 = arith.constant 0 : i32
    return %c0_i32, %c0_i32_0 : i32, i32
  }
  func.func @transform_6(%arg0: i32) -> (i32, i32) {
    %c0_i32 = arith.constant 0 : i32
    %c0_i32_0 = arith.constant 0 : i32
    return %arg0, %c0_i32 : i32, i32
  }
}

module attributes {stable_mosaic.version = 11 : i64} {
  func.func @_mlp_head_kernel(%arg0: i32, %arg1: memref<8x800xf32, #tpu.memory_space<vmem>>, %arg2: memref<800x256xf32, #tpu.memory_space<vmem>>, %arg3: memref<1x256xf32, #tpu.memory_space<vmem>>, %arg4: memref<256x10xf32, #tpu.memory_space<vmem>>, %arg5: memref<1x10xf32, #tpu.memory_space<vmem>>, %arg6: memref<8x10xf32, #tpu.memory_space<vmem>>) attributes {dimension_semantics = [#tpu.dimension_semantics<parallel>], iteration_bounds = array<i64: 1>, scalar_prefetch = 0 : i64, scratch_operands = 0 : i64, tpu.core_type = #tpu.core_type<tc>, window_params = [{transform_indices = @transform_0, window_bounds = array<i64: 8, 800>}, {pipeline_mode = #tpu.pipeline_mode<synchronous>, transform_indices = @transform_1, window_bounds = array<i64: 800, 256>}, {pipeline_mode = #tpu.pipeline_mode<synchronous>, transform_indices = @transform_2, window_bounds = array<i64: 1, 256>}, {pipeline_mode = #tpu.pipeline_mode<synchronous>, transform_indices = @transform_3, window_bounds = array<i64: 256, 10>}, {pipeline_mode = #tpu.pipeline_mode<synchronous>, transform_indices = @transform_4, window_bounds = array<i64: 1, 10>}, {transform_indices = @transform_5, window_bounds = array<i64: 8, 10>}]} {
    %c0 = arith.constant 0 : index
    %c0_0 = arith.constant 0 : index
    %0 = vector.load %arg1[%c0, %c0_0] : memref<8x800xf32, #tpu.memory_space<vmem>>, vector<8x800xf32>
    %c0_1 = arith.constant 0 : index
    %c0_2 = arith.constant 0 : index
    %1 = vector.load %arg2[%c0_1, %c0_2] : memref<800x256xf32, #tpu.memory_space<vmem>>, vector<800x256xf32>
    %cst = arith.constant dense<0.000000e+00> : vector<8x256xf32>
    %2 = tpu.matmul %0, %1, %cst {dimension_numbers = #tpu.dot_dimension_numbers<[1], [0], [0], [1], [0, 0, 1, 1], [], []>} : vector<8x800xf32>, vector<800x256xf32>, vector<8x256xf32> -> vector<8x256xf32>
    %c0_3 = arith.constant 0 : index
    %c0_4 = arith.constant 0 : index
    %3 = vector.load %arg3[%c0_3, %c0_4] : memref<1x256xf32, #tpu.memory_space<vmem>>, vector<1x256xf32>
    %4 = vector.broadcast %3 : vector<1x256xf32> to vector<8x256xf32>
    %5 = arith.addf %2, %4 : vector<8x256xf32>
    %cst_5 = arith.constant 0.000000e+00 : f32
    %6 = vector.broadcast %cst_5 : f32 to vector<8x256xf32>
    %7 = arith.maximumf %5, %6 : vector<8x256xf32>
    %c0_6 = arith.constant 0 : index
    %c0_7 = arith.constant 0 : index
    %8 = vector.load %arg4[%c0_6, %c0_7] : memref<256x10xf32, #tpu.memory_space<vmem>>, vector<256x10xf32>
    %cst_8 = arith.constant dense<0.000000e+00> : vector<8x10xf32>
    %9 = tpu.matmul %7, %8, %cst_8 {dimension_numbers = #tpu.dot_dimension_numbers<[1], [0], [0], [1], [0, 0, 1, 1], [], []>} : vector<8x256xf32>, vector<256x10xf32>, vector<8x10xf32> -> vector<8x10xf32>
    %c0_9 = arith.constant 0 : index
    %c0_10 = arith.constant 0 : index
    %10 = vector.load %arg5[%c0_9, %c0_10] : memref<1x10xf32, #tpu.memory_space<vmem>>, vector<1x10xf32>
    %11 = vector.broadcast %10 : vector<1x10xf32> to vector<8x10xf32>
    %12 = arith.addf %9, %11 : vector<8x10xf32>
    %cst_11 = arith.constant dense<0xFF800000> : vector<8xf32>
    %13 = vector.multi_reduction <maximumf>, %12, %cst_11 [1] : vector<8x10xf32> to vector<8xf32>
    %14 = vector.shape_cast %13 : vector<8xf32> to vector<8x1xf32>
    %15 = vector.broadcast %14 : vector<8x1xf32> to vector<8x10xf32>
    %16 = arith.subf %12, %15 : vector<8x10xf32>
    %17 = math.exp %16 : vector<8x10xf32>
    %cst_12 = arith.constant dense<0.000000e+00> : vector<8xf32>
    %18 = vector.multi_reduction <add>, %17, %cst_12 [1] : vector<8x10xf32> to vector<8xf32>
    %19 = vector.shape_cast %18 : vector<8xf32> to vector<8x1xf32>
    %20 = math.log %19 : vector<8x1xf32>
    %21 = vector.broadcast %20 : vector<8x1xf32> to vector<8x10xf32>
    %22 = arith.subf %16, %21 : vector<8x10xf32>
    %c0_13 = arith.constant 0 : index
    %c0_14 = arith.constant 0 : index
    %23 = vector.load %arg6[%c0_13, %c0_14] : memref<8x10xf32, #tpu.memory_space<vmem>>, vector<8x10xf32>
    tpu.vector_store %arg6[%c0_13, %c0_14], %22 {strides = array<i32>} : memref<8x10xf32, #tpu.memory_space<vmem>>, vector<8x10xf32>,
    return
  }
  func.func @transform_0(%arg0: i32) -> (i32, i32) {
    %c0_i32 = arith.constant 0 : i32
    %c0_i32_0 = arith.constant 0 : i32
    return %arg0, %c0_i32 : i32, i32
  }
  func.func @transform_1(%arg0: i32) -> (i32, i32) {
    %c0_i32 = arith.constant 0 : i32
    %c0_i32_0 = arith.constant 0 : i32
    %c0_i32_1 = arith.constant 0 : i32
    return %c0_i32, %c0_i32_0 : i32, i32
  }
  func.func @transform_2(%arg0: i32) -> (i32, i32) {
    %c0_i32 = arith.constant 0 : i32
    %c0_i32_0 = arith.constant 0 : i32
    %c0_i32_1 = arith.constant 0 : i32
    return %c0_i32, %c0_i32_0 : i32, i32
  }
  func.func @transform_3(%arg0: i32) -> (i32, i32) {
    %c0_i32 = arith.constant 0 : i32
    %c0_i32_0 = arith.constant 0 : i32
    %c0_i32_1 = arith.constant 0 : i32
    return %c0_i32, %c0_i32_0 : i32, i32
  }
  func.func @transform_4(%arg0: i32) -> (i32, i32) {
    %c0_i32 = arith.constant 0 : i32
    %c0_i32_0 = arith.constant 0 : i32
    %c0_i32_1 = arith.constant 0 : i32
    return %c0_i32, %c0_i32_0 : i32, i32
  }
  func.func @transform_5(%arg0: i32) -> (i32, i32) {
    %c0_i32 = arith.constant 0 : i32
    %c0_i32_0 = arith.constant 0 : i32
    return %arg0, %c0_i32 : i32, i32
  }
}

</mosaic_0001>

<llo_original>
// kernel: cnn_forward.3
$region0: #{cnn_forward.3}
  #allocation0 [shape = 'u32[]', space=smem, size = 0x4, offset = 0x4, fixed_abs, tag = 'smem constant byte address 0x4 - core index']
  #allocation1 [shape = 'u32[72,128]{1,0:T(1,128)}', space=vmem, size = 0x9000, scoped, tag = 'internal scratch']
  %s0 = inlined_call_operand.vmem [shape: f32[1152,25], index: 0, kind: input, shape index: {}]
  %s1 = inlined_call_operand.vmem [shape: f32[1152,25], index: 1, kind: input, shape index: {}]
  %s2 = inlined_call_operand.vmem [shape: f32[1152,25], index: 2, kind: input, shape index: {}]
  %s3 = inlined_call_operand.vmem [shape: f32[1152,25], index: 3, kind: input, shape index: {}]
  %s4 = inlined_call_operand.vmem [shape: f32[25,10], index: 4, kind: input, shape index: {}]
  %s5 = inlined_call_operand.vmem [shape: f32[1,10], index: 5, kind: input, shape index: {}]
  %s6 = inlined_call_operand.vmem [shape: f32[1152,10], index: 6, kind: output, shape index: {}]
  %s7 = sld [smem:[#allocation0]]
  $region105: #{cnn_forward.3} parent=0
    _
  %s9 = ssub.s32 1, %s7
  %s10 = scalar_select 0, %s9, %s7
  $region1: #{cnn_forward.3} parent=0
    #allocation2 [shape = 'u8[1048576]{0}', space=vmem, size = 0x100000, scoped, tag = 'output window, operand 0']
    loop: start=0, step=1, limit=4
    $region2: #{cnn_forward.3} parent=1 // loop_pre_header
      _
    $region3: #{cnn_forward.3} parent=1 // loop_header
      %s12 = sphi 0, %s16
      %p13 = scmp.ge.s32.totalorder %s12, 4
      %s22 = sphi 0, %s24
      %s25 = sphi 0, %s22
      %s26 = sphi 0, %s25
      %s42 = sphi 0, %s26
      %s48 = sphi 0, %s50
      %s51 = sphi 0, %s48
      %s52 = sphi 0, %s51
      %s68 = sphi 0, %s52
      %s74 = sphi 0, %s76
      %s77 = sphi 0, %s74
      %s78 = sphi 0, %s77
      %s94 = sphi 0, %s78
      %s100 = sphi 0, %s102
      %s103 = sphi 0, %s100
      %s104 = sphi 0, %s103
      %s120 = sphi 0, %s104
      %s124 = sphi 0, %s124
      %s126 = sphi 0, %s124
      %s127 = sphi 0, %s126
      %s141 = sphi 0, %s127
      %s145 = sphi 0, %s145
      %s147 = sphi 0, %s145
      %s148 = sphi 0, %s147
      %s162 = sphi 0, %s148
      %s168 = sphi 0, %s170
      %s171 = sphi 0, %s168
      %s172 = sphi 0, %s171
      %s188 = sphi 0, %s172
    $region4: #{cnn_forward.3} parent=1 // loop_header_branch
      %15 = sbr.rel (%p13) target = $region8
    $region5: #{cnn_forward.3} parent=1 // loop_body
      %s17 = ssub.s32 %s12, 1
      %s18 = ssub.s32 %s12, 2
      %s19 = sadd.s32 %s12, 1
      %s20 = ssub.s32 %s12, %s19
      %p21 = scmp.eq.s32.totalorder %s20, 0
      %s23 = sadd.s32 %s22, 1
      %s24 = scalar_select %p21, %s22, %s23
      %p27 = pneg %p21
      %p28 = scmp.eq.s32.totalorder %s12, 1
      %p29 = por %p27, %p28
      %p30 = scmp.ne.s32.totalorder %s22, %s25
      %p31 = scmp.eq.s32.totalorder %s12, 0
      %p32 = por %p30, %p31
      %p33 = scmp.ne.s32.totalorder %s22, %s25
      %p34 = scmp.eq.s32.totalorder %s17, 1
      %p35 = por %p33, %p34
      %p36 = scmp.ne.s32.totalorder %s25, %s26
      %p37 = scmp.eq.s32.totalorder %s17, 0
      %p38 = por %p36, %p37
      %p39 = scmp.ne.s32.totalorder %s25, %s26
      %p40 = scmp.eq.s32.totalorder %s18, 1
      %p41 = por %p39, %p40
      %p43 = scmp.ne.s32.totalorder %s26, %s42
      %p44 = scmp.eq.s32.totalorder %s18, 0
      %p45 = por %p43, %p44
      %s46 = ssub.s32 %s12, %s19
      %p47 = scmp.eq.s32.totalorder %s46, 0
      %s49 = sadd.s32 %s48, 1
      %s50 = scalar_select %p47, %s48, %s49
      %p53 = pneg %p47
      %p54 = scmp.eq.s32.totalorder %s12, 1
      %p55 = por %p53, %p54
      %p56 = scmp.ne.s32.totalorder %s48, %s51
      %p57 = scmp.eq.s32.totalorder %s12, 0
      %p58 = por %p56, %p57
      %p59 = scmp.ne.s32.totalorder %s48, %s51
      %p60 = scmp.eq.s32.totalorder %s17, 1
      %p61 = por %p59, %p60
      %p62 = scmp.ne.s32.totalorder %s51, %s52
      %p63 = scmp.eq.s32.totalorder %s17, 0
      %p64 = por %p62, %p63
      %p65 = scmp.ne.s32.totalorder %s51, %s52
      %p66 = scmp.eq.s32.totalorder %s18, 1
      %p67 = por %p65, %p66
      %p69 = scmp.ne.s32.totalorder %s52, %s68
      %p70 = scmp.eq.s32.totalorder %s18, 0
      %p71 = por %p69, %p70
      %s72 = ssub.s32 %s12, %s19
      %p73 = scmp.eq.s32.totalorder %s72, 0
      %s75 = sadd.s32 %s74, 1
      %s76 = scalar_select %p73, %s74, %s75
      %p79 = pneg %p73
      %p80 = scmp.eq.s32.totalorder %s12, 1
      %p81 = por %p79, %p80
      %p82 = scmp.ne.s32.totalorder %s74, %s77
      %p83 = scmp.eq.s32.totalorder %s12, 0
      %p84 = por %p82, %p83
      %p85 = scmp.ne.s32.totalorder %s74, %s77
      %p86 = scmp.eq.s32.totalorder %s17, 1
      %p87 = por %p85, %p86
      %p88 = scmp.ne.s32.totalorder %s77, %s78
      %p89 = scmp.eq.s32.totalorder %s17, 0
      %p90 = por %p88, %p89
      %p91 = scmp.ne.s32.totalorder %s77, %s78
      %p92 = scmp.eq.s32.totalorder %s18, 1
      %p93 = por %p91, %p92
      %p95 = scmp.ne.s32.totalorder %s78, %s94
      %p96 = scmp.eq.s32.totalorder %s18, 0
      %p97 = por %p95, %p96
      %s98 = ssub.s32 %s12, %s19
      %p99 = scmp.eq.s32.totalorder %s98, 0
      %s101 = sadd.s32 %s100, 1
      %s102 = scalar_select %p99, %s100, %s101
      %p105 = pneg %p99
      %p106 = scmp.eq.s32.totalorder %s12, 1
      %p107 = por %p105, %p106
      %p108 = scmp.ne.s32.totalorder %s100, %s103
      %p109 = scmp.eq.s32.totalorder %s12, 0
      %p110 = por %p108, %p109
      %p111 = scmp.ne.s32.totalorder %s100, %s103
      %p112 = scmp.eq.s32.totalorder %s17, 1
      %p113 = por %p111, %p112
      %p114 = scmp.ne.s32.totalorder %s103, %s104
      %p115 = scmp.eq.s32.totalorder %s17, 0
      %p116 = por %p114, %p115
      %p117 = scmp.ne.s32.totalorder %s103, %s104
      %p118 = scmp.eq.s32.totalorder %s18, 1
      %p119 = por %p117, %p118
      %p121 = scmp.ne.s32.totalorder %s104, %s120
      %p122 = scmp.eq.s32.totalorder %s18, 0
      %p123 = por %p121, %p122
      %s125 = sadd.s32 %s124, 1
      %p128 = scmp.eq.s32.totalorder %s12, 1
      %p129 = scmp.ne.s32.totalorder %s124, %s126
      %p130 = scmp.eq.s32.totalorder %s12, 0
      %p131 = por %p129, %p130
      %p132 = scmp.ne.s32.totalorder %s124, %s126
      %p133 = scmp.eq.s32.totalorder %s17, 1
      %p134 = por %p132, %p133
      %p135 = scmp.ne.s32.totalorder %s126, %s127
      %p136 = scmp.eq.s32.totalorder %s17, 0
      %p137 = por %p135, %p136
      %p138 = scmp.ne.s32.totalorder %s126, %s127
      %p139 = scmp.eq.s32.totalorder %s18, 1
      %p140 = por %p138, %p139
      %p142 = scmp.ne.s32.totalorder %s127, %s141
      %p143 = scmp.eq.s32.totalorder %s18, 0
      %p144 = por %p142, %p143
      %s146 = sadd.s32 %s145, 1
      %p149 = scmp.eq.s32.totalorder %s12, 1
      %p150 = scmp.ne.s32.totalorder %s145, %s147
      %p151 = scmp.eq.s32.totalorder %s12, 0
      %p152 = por %p150, %p151
      %p153 = scmp.ne.s32.totalorder %s145, %s147
      %p154 = scmp.eq.s32.totalorder %s17, 1
      %p155 = por %p153, %p154
      %p156 = scmp.ne.s32.totalorder %s147, %s148
      %p157 = scmp.eq.s32.totalorder %s17, 0
      %p158 = por %p156, %p157
      %p159 = scmp.ne.s32.totalorder %s147, %s148
      %p160 = scmp.eq.s32.totalorder %s18, 1
      %p161 = por %p159, %p160
      %p163 = scmp.ne.s32.totalorder %s148, %s162
      %p164 = scmp.eq.s32.totalorder %s18, 0
      %p165 = por %p163, %p164
      %s166 = ssub.s32 %s12, %s19
      %p167 = scmp.eq.s32.totalorder %s166, 0
      %s169 = sadd.s32 %s168, 1
      %s170 = scalar_select %p167, %s168, %s169
      %p173 = pneg %p167
      %p174 = scmp.eq.s32.totalorder %s12, 1
      %p175 = por %p173, %p174
      %p176 = scmp.ne.s32.totalorder %s168, %s171
      %p177 = scmp.eq.s32.totalorder %s12, 0
      %p178 = por %p176, %p177
      %p179 = scmp.ne.s32.totalorder %s168, %s171
      %p180 = scmp.eq.s32.totalorder %s17, 1
      %p181 = por %p179, %p180
      %p182 = scmp.ne.s32.totalorder %s171, %s172
      %p183 = scmp.eq.s32.totalorder %s17, 0
      %p184 = por %p182, %p183
      %p185 = scmp.ne.s32.totalorder %s171, %s172
      %p186 = scmp.eq.s32.totalorder %s18, 1
      %p187 = por %p185, %p186
      %p189 = scmp.ne.s32.totalorder %s172, %s188
      %p190 = scmp.eq.s32.totalorder %s18, 0
      %p191 = por %p189, %p190
      %p192 = scmp.le.s32.totalorder 1, %s12
      %p193 = scmp.lt.s32.totalorder %s12, 3
      %p194 = pnand %p192, %p193
      %p195 = pneg %p194
      // Predicated region
      $region9: #{cnn_forward.3} parent=5 // pred_check
        _
      $region10: #{cnn_forward.3} parent=5 // pred_check_branch
        %197 = sbr.rel (%p194) target = $region12
      $region11: #{cnn_forward.3} parent=5 // pred_region
        %s198 = ssub.s32 %s12, 1
        // Predicated region
        $region13: #{cnn_forward.3} parent=11 // pred_check
          %p199 = pneg %p137
        $region14: #{cnn_forward.3} parent=11 // pred_check_branch
          %201 = sbr.rel (%p199) target = $region16
        $region15: #{cnn_forward.3} parent=11 // pred_region
          _
        $region16: #{cnn_forward.3} parent=11 // pred_fallthru
          _
        // Predicated region
        $region17: #{cnn_forward.3} parent=11 // pred_check
          %p202 = pneg %p158
        $region18: #{cnn_forward.3} parent=11 // pred_check_branch
          %204 = sbr.rel (%p202) target = $region20
        $region19: #{cnn_forward.3} parent=11 // pred_region
          _
        $region20: #{cnn_forward.3} parent=11 // pred_fallthru
          _
      $region12: #{cnn_forward.3} parent=5 // pred_fallthru
        _
      %p205 = scmp.lt.s32.totalorder %s12, 2
      // Predicated region
      $region21: #{cnn_forward.3} parent=5 // pred_check
        %p206 = pneg %p205
      $region22: #{cnn_forward.3} parent=5 // pred_check_branch
        %208 = sbr.rel (%p206) target = $region24
      $region23: #{cnn_forward.3} parent=5 // pred_region
        // Predicated region
        $region25: #{cnn_forward.3} parent=23 // pred_check
          %p209 = pneg %p32
        $region26: #{cnn_forward.3} parent=23 // pred_check_branch
          %211 = sbr.rel (%p209) target = $region28
        $region27: #{cnn_forward.3} parent=23 // pred_region
          %s212 = smul.u32 128, %s12
          %s213 = ssub.s32 144, %s212
          %p214 = scmp.lt.s32.totalorder %s213, 128
          %s215 = scalar_select %p214, %s213, 128
          %s216 = smul.u32 8, %s215
          %p217 = scmp.lt.s32.totalorder %s212, 143
          %s218 = scalar_select %p217, %s212, 143
          %s219 = smul.addr %s218, 8
          %s220 = scalar_lea.vmem %s0, %s219
          %s221 = smul.u32 128, %s12
          %s222 = ssub.s32 144, %s221
          %p223 = scmp.lt.s32.totalorder %s222, 128
          %s224 = scalar_select %p223, %s222, 128
          %s225 = smul.u32 8, %s224
        $region28: #{cnn_forward.3} parent=23 // pred_fallthru
          _
        // Predicated region
        $region29: #{cnn_forward.3} parent=23 // pred_check
          %p226 = pneg %p58
        $region30: #{cnn_forward.3} parent=23 // pred_check_branch
          %228 = sbr.rel (%p226) target = $region32
        $region31: #{cnn_forward.3} parent=23 // pred_region
          %s229 = smul.u32 128, %s12
          %s230 = ssub.s32 144, %s229
          %p231 = scmp.lt.s32.totalorder %s230, 128
          %s232 = scalar_select %p231, %s230, 128
          %s233 = smul.u32 8, %s232
          %p234 = scmp.lt.s32.totalorder %s229, 143
          %s235 = scalar_select %p234, %s229, 143
          %s236 = smul.addr %s235, 8
          %s237 = scalar_lea.vmem %s1, %s236
          %s238 = smul.u32 128, %s12
          %s239 = ssub.s32 144, %s238
          %p240 = scmp.lt.s32.totalorder %s239, 128
          %s241 = scalar_select %p240, %s239, 128
          %s242 = smul.u32 8, %s241
        $region32: #{cnn_forward.3} parent=23 // pred_fallthru
          _
        // Predicated region
        $region33: #{cnn_forward.3} parent=23 // pred_check
          %p243 = pneg %p84
        $region34: #{cnn_forward.3} parent=23 // pred_check_branch
          %245 = sbr.rel (%p243) target = $region36
        $region35: #{cnn_forward.3} parent=23 // pred_region
          %s246 = smul.u32 128, %s12
          %s247 = ssub.s32 144, %s246
          %p248 = scmp.lt.s32.totalorder %s247, 128
          %s249 = scalar_select %p248, %s247, 128
          %s250 = smul.u32 8, %s249
          %p251 = scmp.lt.s32.totalorder %s246, 143
          %s252 = scalar_select %p251, %s246, 143
          %s253 = smul.addr %s252, 8
          %s254 = scalar_lea.vmem %s2, %s253
          %s255 = smul.u32 128, %s12
          %s256 = ssub.s32 144, %s255
          %p257 = scmp.lt.s32.totalorder %s256, 128
          %s258 = scalar_select %p257, %s256, 128
          %s259 = smul.u32 8, %s258
        $region36: #{cnn_forward.3} parent=23 // pred_fallthru
          _
        // Predicated region
        $region37: #{cnn_forward.3} parent=23 // pred_check
          %p260 = pneg %p110
        $region38: #{cnn_forward.3} parent=23 // pred_check_branch
          %262 = sbr.rel (%p260) target = $region40
        $region39: #{cnn_forward.3} parent=23 // pred_region
          %s263 = smul.u32 128, %s12
          %s264 = ssub.s32 144, %s263
          %p265 = scmp.lt.s32.totalorder %s264, 128
          %s266 = scalar_select %p265, %s264, 128
          %s267 = smul.u32 8, %s266
          %p268 = scmp.lt.s32.totalorder %s263, 143
          %s269 = scalar_select %p268, %s263, 143
          %s270 = smul.addr %s269, 8
          %s271 = scalar_lea.vmem %s3, %s270
          %s272 = smul.u32 128, %s12
          %s273 = ssub.s32 144, %s272
          %p274 = scmp.lt.s32.totalorder %s273, 128
          %s275 = scalar_select %p274, %s273, 128
          %s276 = smul.u32 8, %s275
        $region40: #{cnn_forward.3} parent=23 // pred_fallthru
          _
      $region24: #{cnn_forward.3} parent=5 // pred_fallthru
        _
      %p277 = scmp.le.s32.totalorder 1, %s12
      %p278 = scmp.lt.s32.totalorder %s12, 3
      %p279 = pnand %p277, %p278
      %p280 = pneg %p279
      // Predicated region
      $region41: #{cnn_forward.3} parent=5 // pred_check
        _
      $region42: #{cnn_forward.3} parent=5 // pred_check_branch
        %282 = sbr.rel (%p279) target = $region44
      $region43: #{cnn_forward.3} parent=5 // pred_region
        %s283 = ssub.s32 %s12, 1
        %s284 = smul.u32 128, %s17
        %s285 = ssub.s32 144, %s284
        %p286 = scmp.lt.s32.totalorder %s285, 128
        %s287 = scalar_select %p286, %s285, 128
        %s288 = smul.u32 8, %s287
        %p289 = scmp.lt.s32.totalorder %s284, 143
        %s290 = scalar_select %p289, %s284, 143
        %s291 = smul.addr %s290, 8
        %s292 = scalar_lea.vmem %s0, %s291
        %p293 = pneg %p38
        %p294 = pneg %p35
        %s295 = smul.u32 128, %s17
        %s296 = ssub.s32 144, %s295
        %p297 = scmp.lt.s32.totalorder %s296, 128
        %s298 = scalar_select %p297, %s296, 128
        %s299 = smul.u32 8, %s298
        %p300 = scmp.lt.s32.totalorder %s295, 143
        %s301 = scalar_select %p300, %s295, 143
        %s302 = smul.addr %s301, 8
        %s303 = scalar_lea.vmem %s1, %s302
        %p304 = pneg %p64
        %p305 = pneg %p61
        %s306 = smul.u32 128, %s17
        %s307 = ssub.s32 144, %s306
        %p308 = scmp.lt.s32.totalorder %s307, 128
        %s309 = scalar_select %p308, %s307, 128
        %s310 = smul.u32 8, %s309
        %p311 = scmp.lt.s32.totalorder %s306, 143
        %s312 = scalar_select %p311, %s306, 143
        %s313 = smul.addr %s312, 8
        %s314 = scalar_lea.vmem %s2, %s313
        %p315 = pneg %p90
        %p316 = pneg %p87
        %s317 = smul.u32 128, %s17
        %s318 = ssub.s32 144, %s317
        %p319 = scmp.lt.s32.totalorder %s318, 128
        %s320 = scalar_select %p319, %s318, 128
        %s321 = smul.u32 8, %s320
        %p322 = scmp.lt.s32.totalorder %s317, 143
        %s323 = scalar_select %p322, %s317, 143
        %s324 = smul.addr %s323, 8
        %s325 = scalar_lea.vmem %s3, %s324
        %p326 = pneg %p116
        %p327 = pneg %p113
        %p328 = pneg %p137
        %p329 = pneg %p134
        %p330 = pneg %p158
        %p331 = pneg %p155
        %p332 = pneg %p184
        %p333 = pneg %p181
        %s334 = sand.u32 %s171, 1
        %s335 = sand.u32 %s171, 1
        %s336 = smul.addr %s335, 1024
        %s337 = scalar_lea.vmem [#allocation2], %s336
        %s338 = smul.u32 128, %s17
        %s339 = ssub.s32 144, %s338
        %p340 = scmp.lt.s32.totalorder %s339, 128
        %s341 = scalar_select %p340, %s339, 128
        %s342 = smul.u32 8, %s341
        %p343 = scmp.lt.s32.totalorder %s338, 143
        %s344 = scalar_select %p343, %s338, 143
        %s345 = smul.addr %s344, 8
        %s346 = scalar_lea.vmem %s0, %s345
        %s347 = smul.u32 128, %s17
        %s348 = ssub.s32 144, %s347
        %p349 = scmp.lt.s32.totalorder %s348, 128
        %s350 = scalar_select %p349, %s348, 128
        %s351 = smul.u32 8, %s350
        %s352 = smul.u32 128, %s17
        %s353 = ssub.s32 144, %s352
        %p354 = scmp.lt.s32.totalorder %s353, 128
        %s355 = scalar_select %p354, %s353, 128
        %s356 = smul.u32 8, %s355
        %p357 = scmp.lt.s32.totalorder %s352, 143
        %s358 = scalar_select %p357, %s352, 143
        %s359 = smul.addr %s358, 8
        %s360 = scalar_lea.vmem %s1, %s359
        %s361 = smul.u32 128, %s17
        %s362 = ssub.s32 144, %s361
        %p363 = scmp.lt.s32.totalorder %s362, 128
        %s364 = scalar_select %p363, %s362, 128
        %s365 = smul.u32 8, %s364
        %s366 = smul.u32 128, %s17
        %s367 = ssub.s32 144, %s366
        %p368 = scmp.lt.s32.totalorder %s367, 128
        %s369 = scalar_select %p368, %s367, 128
        %s370 = smul.u32 8, %s369
        %p371 = scmp.lt.s32.totalorder %s366, 143
        %s372 = scalar_select %p371, %s366, 143
        %s373 = smul.addr %s372, 8
        %s374 = scalar_lea.vmem %s2, %s373
        %s375 = smul.u32 128, %s17
        %s376 = ssub.s32 144, %s375
        %p377 = scmp.lt.s32.totalorder %s376, 128
        %s378 = scalar_select %p377, %s376, 128
        %s379 = smul.u32 8, %s378
        %s380 = smul.u32 128, %s17
        %s381 = ssub.s32 144, %s380
        %p382 = scmp.lt.s32.totalorder %s381, 128
        %s383 = scalar_select %p382, %s381, 128
        %s384 = smul.u32 8, %s383
        %p385 = scmp.lt.s32.totalorder %s380, 143
        %s386 = scalar_select %p385, %s380, 143
        %s387 = smul.addr %s386, 8
        %s388 = scalar_lea.vmem %s3, %s387
        %s389 = smul.u32 128, %s17
        %s390 = ssub.s32 144, %s389
        %p391 = scmp.lt.s32.totalorder %s390, 128
        %s392 = scalar_select %p391, %s390, 128
        %s393 = smul.u32 8, %s392
        %s394 = smul.u32 128, %s17
        %s395 = ssub.s32 144, %s394
        %p396 = scmp.lt.s32.totalorder %s395, 128
        %s397 = scalar_select %p396, %s395, 128
        %s398 = smul.u32 8, %s397
        %v399 = vld [vmem:[%s4] sm:$0xff]
        %v400 = vld [vmem:[%s4 + $0x8] sm:$0xff]
        %v401 = vld [vmem:[%s4 + $0x10] sm:$0xff]
        %v402 = vld [vmem:[%s4 + $0x18] sm:$0x1]
        %v403 = vld [vmem:[%s346] sm:$0xff]
        %v404 = vld [vmem:[%s346 + $0x8] sm:$0xff]
        %v405 = vld [vmem:[%s346 + $0x10] sm:$0xff]
        %v406 = vld [vmem:[%s346 + $0x18] sm:$0xff]
        %v407 = vld [vmem:[%s346 + $0x20] sm:$0xff]
        %v408 = vld [vmem:[%s346 + $0x28] sm:$0xff]
        %v409 = vld [vmem:[%s346 + $0x30] sm:$0xff]
        %v410 = vld [vmem:[%s346 + $0x38] sm:$0xff]
        %v411 = vld [vmem:[%s346 + $0x40] sm:$0xff]
        %v412 = vld [vmem:[%s346 + $0x48] sm:$0xff]
        %v413 = vld [vmem:[%s346 + $0x50] sm:$0xff]
        %v414 = vld [vmem:[%s346 + $0x58] sm:$0xff]
        %v415 = vld [vmem:[%s346 + $0x60] sm:$0xff]
        %v416 = vld [vmem:[%s346 + $0x68] sm:$0xff]
        %v417 = vld [vmem:[%s346 + $0x70] sm:$0xff]
        %v418 = vld [vmem:[%s346 + $0x78] sm:$0xff]
        %v419 = vld [vmem:[%s346 + $0x80] sm:$0xff]
        %v420 = vld [vmem:[%s346 + $0x88] sm:$0xff]
        %v421 = vld [vmem:[%s346 + $0x90] sm:$0xff]
        %v422 = vld [vmem:[%s346 + $0x98] sm:$0xff]
        %v423 = vld [vmem:[%s346 + $0xa0] sm:$0xff]
        %v424 = vld [vmem:[%s346 + $0xa8] sm:$0xff]
        %v425 = vld [vmem:[%s346 + $0xb0] sm:$0xff]
        %v426 = vld [vmem:[%s346 + $0xb8] sm:$0xff]
        %v427 = vld [vmem:[%s346 + $0xc0] sm:$0xff]
        %v428 = vld [vmem:[%s346 + $0xc8] sm:$0xff]
        %v429 = vld [vmem:[%s346 + $0xd0] sm:$0xff]
        %v430 = vld [vmem:[%s346 + $0xd8] sm:$0xff]
        %v431 = vld [vmem:[%s346 + $0xe0] sm:$0xff]
        %v432 = vld [vmem:[%s346 + $0xe8] sm:$0xff]
        %v433 = vld [vmem:[%s346 + $0xf0] sm:$0xff]
        %v434 = vld [vmem:[%s346 + $0xf8] sm:$0xff]
        %v435 = vld [vmem:[%s346 + $0x100] sm:$0xff]
        %v436 = vld [vmem:[%s346 + $0x108] sm:$0xff]
        %v437 = vld [vmem:[%s346 + $0x110] sm:$0xff]
        %v438 = vld [vmem:[%s346 + $0x118] sm:$0xff]
        %v439 = vld [vmem:[%s346 + $0x120] sm:$0xff]
        %v440 = vld [vmem:[%s346 + $0x128] sm:$0xff]
        %v441 = vld [vmem:[%s346 + $0x130] sm:$0xff]
        %v442 = vld [vmem:[%s346 + $0x138] sm:$0xff]
        %v443 = vld [vmem:[%s346 + $0x140] sm:$0xff]
        %v444 = vld [vmem:[%s346 + $0x148] sm:$0xff]
        %v445 = vld [vmem:[%s346 + $0x150] sm:$0xff]
        %v446 = vld [vmem:[%s346 + $0x158] sm:$0xff]
        %v447 = vld [vmem:[%s346 + $0x160] sm:$0xff]
        %v448 = vld [vmem:[%s346 + $0x168] sm:$0xff]
        %v449 = vld [vmem:[%s346 + $0x170] sm:$0xff]
        %v450 = vld [vmem:[%s346 + $0x178] sm:$0xff]
        %v451 = vld [vmem:[%s346 + $0x180] sm:$0xff]
        %v452 = vld [vmem:[%s346 + $0x188] sm:$0xff]
        %v453 = vld [vmem:[%s346 + $0x190] sm:$0xff]
        %v454 = vld [vmem:[%s346 + $0x198] sm:$0xff]
        %v455 = vld [vmem:[%s346 + $0x1a0] sm:$0xff]
        %v456 = vld [vmem:[%s346 + $0x1a8] sm:$0xff]
        %v457 = vld [vmem:[%s346 + $0x1b0] sm:$0xff]
        %v458 = vld [vmem:[%s346 + $0x1b8] sm:$0xff]
        %v459 = vld [vmem:[%s346 + $0x1c0] sm:$0xff]
        %v460 = vld [vmem:[%s346 + $0x1c8] sm:$0xff]
        %v461 = vld [vmem:[%s346 + $0x1d0] sm:$0xff]
        %v462 = vld [vmem:[%s346 + $0x1d8] sm:$0xff]
        %v463 = vld [vmem:[%s346 + $0x1e0] sm:$0xff]
        %v464 = vld [vmem:[%s346 + $0x1e8] sm:$0xff]
        %v465 = vld [vmem:[%s346 + $0x1f0] sm:$0xff]
        %v466 = vld [vmem:[%s346 + $0x1f8] sm:$0xff]
        %v467 = vld [vmem:[%s346 + $0x200] sm:$0xff]
        %v468 = vld [vmem:[%s346 + $0x208] sm:$0xff]
        %v469 = vld [vmem:[%s346 + $0x210] sm:$0xff]
        %v470 = vld [vmem:[%s346 + $0x218] sm:$0xff]
        %v471 = vld [vmem:[%s346 + $0x220] sm:$0xff]
        %v472 = vld [vmem:[%s346 + $0x228] sm:$0xff]
        %v473 = vld [vmem:[%s346 + $0x230] sm:$0xff]
        %v474 = vld [vmem:[%s346 + $0x238] sm:$0xff]
        %v475 = vld [vmem:[%s346 + $0x240] sm:$0xff]
        %v476 = vld [vmem:[%s346 + $0x248] sm:$0xff]
        %v477 = vld [vmem:[%s346 + $0x250] sm:$0xff]
        %v478 = vld [vmem:[%s346 + $0x258] sm:$0xff]
        %v479 = vld [vmem:[%s346 + $0x260] sm:$0xff]
        %v480 = vld [vmem:[%s346 + $0x268] sm:$0xff]
        %v481 = vld [vmem:[%s346 + $0x270] sm:$0xff]
        %v482 = vld [vmem:[%s346 + $0x278] sm:$0xff]
        %v483 = vld [vmem:[%s346 + $0x280] sm:$0xff]
        %v484 = vld [vmem:[%s346 + $0x288] sm:$0xff]
        %v485 = vld [vmem:[%s346 + $0x290] sm:$0xff]
        %v486 = vld [vmem:[%s346 + $0x298] sm:$0xff]
        %v487 = vld [vmem:[%s346 + $0x2a0] sm:$0xff]
        %v488 = vld [vmem:[%s346 + $0x2a8] sm:$0xff]
        %v489 = vld [vmem:[%s346 + $0x2b0] sm:$0xff]
        %v490 = vld [vmem:[%s346 + $0x2b8] sm:$0xff]
        %v491 = vld [vmem:[%s346 + $0x2c0] sm:$0xff]
        %v492 = vld [vmem:[%s346 + $0x2c8] sm:$0xff]
        %v493 = vld [vmem:[%s346 + $0x2d0] sm:$0xff]
        %v494 = vld [vmem:[%s346 + $0x2d8] sm:$0xff]
        %v495 = vld [vmem:[%s346 + $0x2e0] sm:$0xff]
        %v496 = vld [vmem:[%s346 + $0x2e8] sm:$0xff]
        %v497 = vld [vmem:[%s346 + $0x2f0] sm:$0xff]
        %v498 = vld [vmem:[%s346 + $0x2f8] sm:$0xff]
        %v499 = vld [vmem:[%s346 + $0x300] sm:$0xff]
        %v500 = vld [vmem:[%s346 + $0x308] sm:$0xff]
        %v501 = vld [vmem:[%s346 + $0x310] sm:$0xff]
        %v502 = vld [vmem:[%s346 + $0x318] sm:$0xff]
        %v503 = vld [vmem:[%s346 + $0x320] sm:$0xff]
        %v504 = vld [vmem:[%s346 + $0x328] sm:$0xff]
        %v505 = vld [vmem:[%s346 + $0x330] sm:$0xff]
        %v506 = vld [vmem:[%s346 + $0x338] sm:$0xff]
        %v507 = vld [vmem:[%s346 + $0x340] sm:$0xff]
        %v508 = vld [vmem:[%s346 + $0x348] sm:$0xff]
        %v509 = vld [vmem:[%s346 + $0x350] sm:$0xff]
        %v510 = vld [vmem:[%s346 + $0x358] sm:$0xff]
        %v511 = vld [vmem:[%s346 + $0x360] sm:$0xff]
        %v512 = vld [vmem:[%s346 + $0x368] sm:$0xff]
        %v513 = vld [vmem:[%s346 + $0x370] sm:$0xff]
        %v514 = vld [vmem:[%s346 + $0x378] sm:$0xff]
        %v515 = vld [vmem:[%s346 + $0x380] sm:$0xff]
        %v516 = vld [vmem:[%s346 + $0x388] sm:$0xff]
        %v517 = vld [vmem:[%s346 + $0x390] sm:$0xff]
        %v518 = vld [vmem:[%s346 + $0x398] sm:$0xff]
        %v519 = vld [vmem:[%s346 + $0x3a0] sm:$0xff]
        %v520 = vld [vmem:[%s346 + $0x3a8] sm:$0xff]
        %v521 = vld [vmem:[%s346 + $0x3b0] sm:$0xff]
        %v522 = vld [vmem:[%s346 + $0x3b8] sm:$0xff]
        %v523 = vld [vmem:[%s346 + $0x3c0] sm:$0xff]
        %v524 = vld [vmem:[%s346 + $0x3c8] sm:$0xff]
        %v525 = vld [vmem:[%s346 + $0x3d0] sm:$0xff]
        %v526 = vld [vmem:[%s346 + $0x3d8] sm:$0xff]
        %v527 = vld [vmem:[%s346 + $0x3e0] sm:$0xff]
        %v528 = vld [vmem:[%s346 + $0x3e8] sm:$0xff]
        %v529 = vld [vmem:[%s346 + $0x3f0] sm:$0xff]
        %v530 = vld [vmem:[%s346 + $0x3f8] sm:$0xff]
        %vm531 = vcmask 203776
        %v533 = vsel %vm531, %v403, 0
        %v536 = vsel %vm531, %v404, 0
        %v539 = vsel %vm531, %v405, 0
        %v542 = vsel %vm531, %v406, 0
        %v545 = vsel %vm531, %v407, 0
        %v548 = vsel %vm531, %v408, 0
        %v551 = vsel %vm531, %v409, 0
        %v554 = vsel %vm531, %v410, 0
        %v557 = vsel %vm531, %v411, 0
        %v560 = vsel %vm531, %v412, 0
        %v563 = vsel %vm531, %v413, 0
        %v566 = vsel %vm531, %v414, 0
        %v569 = vsel %vm531, %v415, 0
        %v572 = vsel %vm531, %v416, 0
        %v575 = vsel %vm531, %v417, 0
        %v578 = vsel %vm531, %v418, 0
        %v581 = vsel %vm531, %v419, 0
        %v584 = vsel %vm531, %v420, 0
        %v587 = vsel %vm531, %v421, 0
        %v590 = vsel %vm531, %v422, 0
        %v593 = vsel %vm531, %v423, 0
        %v596 = vsel %vm531, %v424, 0
        %v599 = vsel %vm531, %v425, 0
        %v602 = vsel %vm531, %v426, 0
        %v605 = vsel %vm531, %v427, 0
        %v608 = vsel %vm531, %v428, 0
        %v611 = vsel %vm531, %v429, 0
        %v614 = vsel %vm531, %v430, 0
        %v617 = vsel %vm531, %v431, 0
        %v620 = vsel %vm531, %v432, 0
        %v623 = vsel %vm531, %v433, 0
        %v626 = vsel %vm531, %v434, 0
        %v629 = vsel %vm531, %v435, 0
        %v632 = vsel %vm531, %v436, 0
        %v635 = vsel %vm531, %v437, 0
        %v638 = vsel %vm531, %v438, 0
        %v641 = vsel %vm531, %v439, 0
        %v644 = vsel %vm531, %v440, 0
        %v647 = vsel %vm531, %v441, 0
        %v650 = vsel %vm531, %v442, 0
        %v653 = vsel %vm531, %v443, 0
        %v656 = vsel %vm531, %v444, 0
        %v659 = vsel %vm531, %v445, 0
        %v662 = vsel %vm531, %v446, 0
        %v665 = vsel %vm531, %v447, 0
        %v668 = vsel %vm531, %v448, 0
        %v671 = vsel %vm531, %v449, 0
        %v674 = vsel %vm531, %v450, 0
        %v677 = vsel %vm531, %v451, 0
        %v680 = vsel %vm531, %v452, 0
        %v683 = vsel %vm531, %v453, 0
        %v686 = vsel %vm531, %v454, 0
        %v689 = vsel %vm531, %v455, 0
        %v692 = vsel %vm531, %v456, 0
        %v695 = vsel %vm531, %v457, 0
        %v698 = vsel %vm531, %v458, 0
        %v701 = vsel %vm531, %v459, 0
        %v704 = vsel %vm531, %v460, 0
        %v707 = vsel %vm531, %v461, 0
        %v710 = vsel %vm531, %v462, 0
        %v713 = vsel %vm531, %v463, 0
        %v716 = vsel %vm531, %v464, 0
        %v719 = vsel %vm531, %v465, 0
        %v722 = vsel %vm531, %v466, 0
        %v725 = vsel %vm531, %v467, 0
        %v728 = vsel %vm531, %v468, 0
        %v731 = vsel %vm531, %v469, 0
        %v734 = vsel %vm531, %v470, 0
        %v737 = vsel %vm531, %v471, 0
        %v740 = vsel %vm531, %v472, 0
        %v743 = vsel %vm531, %v473, 0
        %v746 = vsel %vm531, %v474, 0
        %v749 = vsel %vm531, %v475, 0
        %v752 = vsel %vm531, %v476, 0
        %v755 = vsel %vm531, %v477, 0
        %v758 = vsel %vm531, %v478, 0
        %v761 = vsel %vm531, %v479, 0
        %v764 = vsel %vm531, %v480, 0
        %v767 = vsel %vm531, %v481, 0
        %v770 = vsel %vm531, %v482, 0
        %v773 = vsel %vm531, %v483, 0
        %v776 = vsel %vm531, %v484, 0
        %v779 = vsel %vm531, %v485, 0
        %v782 = vsel %vm531, %v486, 0
        %v785 = vsel %vm531, %v487, 0
        %v788 = vsel %vm531, %v488, 0
        %v791 = vsel %vm531, %v489, 0
        %v794 = vsel %vm531, %v490, 0
        %v797 = vsel %vm531, %v491, 0
        %v800 = vsel %vm531, %v492, 0
        %v803 = vsel %vm531, %v493, 0
        %v806 = vsel %vm531, %v494, 0
        %v809 = vsel %vm531, %v495, 0
        %v812 = vsel %vm531, %v496, 0
        %v815 = vsel %vm531, %v497, 0
        %v818 = vsel %vm531, %v498, 0
        %v821 = vsel %vm531, %v499, 0
        %v824 = vsel %vm531, %v500, 0
        %v827 = vsel %vm531, %v501, 0
        %v830 = vsel %vm531, %v502, 0
        %v833 = vsel %vm531, %v503, 0
        %v836 = vsel %vm531, %v504, 0
        %v839 = vsel %vm531, %v505, 0
        %v842 = vsel %vm531, %v506, 0
        %v845 = vsel %vm531, %v507, 0
        %v848 = vsel %vm531, %v508, 0
        %v851 = vsel %vm531, %v509, 0
        %v854 = vsel %vm531, %v510, 0
        %v857 = vsel %vm531, %v511, 0
        %v860 = vsel %vm531, %v512, 0
        %v863 = vsel %vm531, %v513, 0
        %v866 = vsel %vm531, %v514, 0
        %v869 = vsel %vm531, %v515, 0
        %v872 = vsel %vm531, %v516, 0
        %v875 = vsel %vm531, %v517, 0
        %v878 = vsel %vm531, %v518, 0
        %v881 = vsel %vm531, %v519, 0
        %v884 = vsel %vm531, %v520, 0
        %v887 = vsel %vm531, %v521, 0
        %v890 = vsel %vm531, %v522, 0
        %v893 = vsel %vm531, %v523, 0
        %v896 = vsel %vm531, %v524, 0
        %v899 = vsel %vm531, %v525, 0
        %v902 = vsel %vm531, %v526, 0
        %v905 = vsel %vm531, %v527, 0
        %v908 = vsel %vm531, %v528, 0
        %v911 = vsel %vm531, %v529, 0
        %v914 = vsel %vm531, %v530, 0
        %vm916 = vcmask 1040384
        %v918 = vsel %vm916, %v402, 0
        %920 = vmatpush.msra.mxu0 0.0
        %921 = vmatpush.msra.mxu0 0.0
        %922 = vmatpush.msra.mxu0 0.0
        %923 = vmatpush.msra.mxu0 0.0
        %924 = vmatpush.msra.mxu0 0.0
        %925 = vmatpush.msra.mxu0 0.0
        %926 = vmatpush.msra.mxu0 0.0
        %927 = vmatpush.msra.mxu0 0.0
        %928 = vmatpush.msra.mxu0 0.0
        %929 = vmatpush.msra.mxu0 0.0
        %930 = vmatpush.msra.mxu0 0.0
        %931 = vmatpush.msra.mxu0 0.0
        %932 = vmatpush.msra.mxu0 %v918
        %933 = vmatpush.msra.mxu0 %v401
        %934 = vmatpush.msra.mxu0 %v400
        %935 = vmatpush.msra.mxu0 %v399
        %936 = vmatmul.f32.gmra.mxu0 %v533
        %v937 = vpop.f32.mrf.mxu0
        %v938 = vadd.f32 0.0, %v937
        %939 = vmatmul.f32.gmra.mxu0 %v536
        %v940 = vpop.f32.mrf.mxu0
        %v941 = vadd.f32 0.0, %v940
        %942 = vmatmul.f32.gmra.mxu0 %v539
        %v943 = vpop.f32.mrf.mxu0
        %v944 = vadd.f32 0.0, %v943
        %945 = vmatmul.f32.gmra.mxu0 %v542
        %v946 = vpop.f32.mrf.mxu0
        %v947 = vadd.f32 0.0, %v946
        %948 = vmatmul.f32.gmra.mxu0 %v545
        %v949 = vpop.f32.mrf.mxu0
        %v950 = vadd.f32 0.0, %v949
        %951 = vmatmul.f32.gmra.mxu0 %v548
        %v952 = vpop.f32.mrf.mxu0
        %v953 = vadd.f32 0.0, %v952
        %954 = vmatmul.f32.gmra.mxu0 %v551
        %v955 = vpop.f32.mrf.mxu0
        %v956 = vadd.f32 0.0, %v955
        %957 = vmatmul.f32.gmra.mxu0 %v554
        %v958 = vpop.f32.mrf.mxu0
        %v959 = vadd.f32 0.0, %v958
        %960 = vmatmul.f32.gmra.mxu0 %v557
        %v961 = vpop.f32.mrf.mxu0
        %v962 = vadd.f32 0.0, %v961
        %963 = vmatmul.f32.gmra.mxu0 %v560
        %v964 = vpop.f32.mrf.mxu0
        %v965 = vadd.f32 0.0, %v964
        %966 = vmatmul.f32.gmra.mxu0 %v563
        %v967 = vpop.f32.mrf.mxu0
        %v968 = vadd.f32 0.0, %v967
        %969 = vmatmul.f32.gmra.mxu0 %v566
        %v970 = vpop.f32.mrf.mxu0
        %v971 = vadd.f32 0.0, %v970
        %972 = vmatmul.f32.gmra.mxu0 %v569
        %v973 = vpop.f32.mrf.mxu0
        %v974 = vadd.f32 0.0, %v973
        %975 = vmatmul.f32.gmra.mxu0 %v572
        %v976 = vpop.f32.mrf.mxu0
        %v977 = vadd.f32 0.0, %v976
        %978 = vmatmul.f32.gmra.mxu0 %v575
        %v979 = vpop.f32.mrf.mxu0
        %v980 = vadd.f32 0.0, %v979
        %981 = vmatmul.f32.gmra.mxu0 %v578
        %v982 = vpop.f32.mrf.mxu0
        %v983 = vadd.f32 0.0, %v982
        %984 = vmatmul.f32.gmra.mxu0 %v581
        %v985 = vpop.f32.mrf.mxu0
        %v986 = vadd.f32 0.0, %v985
        %987 = vmatmul.f32.gmra.mxu0 %v584
        %v988 = vpop.f32.mrf.mxu0
        %v989 = vadd.f32 0.0, %v988
        %990 = vmatmul.f32.gmra.mxu0 %v587
        %v991 = vpop.f32.mrf.mxu0
        %v992 = vadd.f32 0.0, %v991
        %993 = vmatmul.f32.gmra.mxu0 %v590
        %v994 = vpop.f32.mrf.mxu0
        %v995 = vadd.f32 0.0, %v994
        %996 = vmatmul.f32.gmra.mxu0 %v593
        %v997 = vpop.f32.mrf.mxu0
        %v998 = vadd.f32 0.0, %v997
        %999 = vmatmul.f32.gmra.mxu0 %v596
        %v1000 = vpop.f32.mrf.mxu0
        %v1001 = vadd.f32 0.0, %v1000
        %1002 = vmatmul.f32.gmra.mxu0 %v599
        %v1003 = vpop.f32.mrf.mxu0
        %v1004 = vadd.f32 0.0, %v1003
        %1005 = vmatmul.f32.gmra.mxu0 %v602
        %v1006 = vpop.f32.mrf.mxu0
        %v1007 = vadd.f32 0.0, %v1006
        %1008 = vmatmul.f32.gmra.mxu0 %v605
        %v1009 = vpop.f32.mrf.mxu0
        %v1010 = vadd.f32 0.0, %v1009
        %1011 = vmatmul.f32.gmra.mxu0 %v608
        %v1012 = vpop.f32.mrf.mxu0
        %v1013 = vadd.f32 0.0, %v1012
        %1014 = vmatmul.f32.gmra.mxu0 %v611
        %v1015 = vpop.f32.mrf.mxu0
        %v1016 = vadd.f32 0.0, %v1015
        %1017 = vmatmul.f32.gmra.mxu0 %v614
        %v1018 = vpop.f32.mrf.mxu0
        %v1019 = vadd.f32 0.0, %v1018
        %1020 = vmatmul.f32.gmra.mxu0 %v617
        %v1021 = vpop.f32.mrf.mxu0
        %v1022 = vadd.f32 0.0, %v1021
        %1023 = vmatmul.f32.gmra.mxu0 %v620
        %v1024 = vpop.f32.mrf.mxu0
        %v1025 = vadd.f32 0.0, %v1024
        %1026 = vmatmul.f32.gmra.mxu0 %v623
        %v1027 = vpop.f32.mrf.mxu0
        %v1028 = vadd.f32 0.0, %v1027
        %1029 = vmatmul.f32.gmra.mxu0 %v626
        %v1030 = vpop.f32.mrf.mxu0
        %v1031 = vadd.f32 0.0, %v1030
        %1032 = vmatmul.f32.gmra.mxu0 %v629
        %v1033 = vpop.f32.mrf.mxu0
        %v1034 = vadd.f32 0.0, %v1033
        %1035 = vmatmul.f32.gmra.mxu0 %v632
        %v1036 = vpop.f32.mrf.mxu0
        %v1037 = vadd.f32 0.0, %v1036
        %1038 = vmatmul.f32.gmra.mxu0 %v635
        %v1039 = vpop.f32.mrf.mxu0
        %v1040 = vadd.f32 0.0, %v1039
        %1041 = vmatmul.f32.gmra.mxu0 %v638
        %v1042 = vpop.f32.mrf.mxu0
        %v1043 = vadd.f32 0.0, %v1042
        %1044 = vmatmul.f32.gmra.mxu0 %v641
        %v1045 = vpop.f32.mrf.mxu0
        %v1046 = vadd.f32 0.0, %v1045
        %1047 = vmatmul.f32.gmra.mxu0 %v644
        %v1048 = vpop.f32.mrf.mxu0
        %v1049 = vadd.f32 0.0, %v1048
        %1050 = vmatmul.f32.gmra.mxu0 %v647
        %v1051 = vpop.f32.mrf.mxu0
        %v1052 = vadd.f32 0.0, %v1051
        %1053 = vmatmul.f32.gmra.mxu0 %v650
        %v1054 = vpop.f32.mrf.mxu0
        %v1055 = vadd.f32 0.0, %v1054
        %1056 = vmatmul.f32.gmra.mxu0 %v653
        %v1057 = vpop.f32.mrf.mxu0
        %v1058 = vadd.f32 0.0, %v1057
        %1059 = vmatmul.f32.gmra.mxu0 %v656
        %v1060 = vpop.f32.mrf.mxu0
        %v1061 = vadd.f32 0.0, %v1060
        %1062 = vmatmul.f32.gmra.mxu0 %v659
        %v1063 = vpop.f32.mrf.mxu0
        %v1064 = vadd.f32 0.0, %v1063
        %1065 = vmatmul.f32.gmra.mxu0 %v662
        %v1066 = vpop.f32.mrf.mxu0
        %v1067 = vadd.f32 0.0, %v1066
        %1068 = vmatmul.f32.gmra.mxu0 %v665
        %v1069 = vpop.f32.mrf.mxu0
        %v1070 = vadd.f32 0.0, %v1069
        %1071 = vmatmul.f32.gmra.mxu0 %v668
        %v1072 = vpop.f32.mrf.mxu0
        %v1073 = vadd.f32 0.0, %v1072
        %1074 = vmatmul.f32.gmra.mxu0 %v671
        %v1075 = vpop.f32.mrf.mxu0
        %v1076 = vadd.f32 0.0, %v1075
        %1077 = vmatmul.f32.gmra.mxu0 %v674
        %v1078 = vpop.f32.mrf.mxu0
        %v1079 = vadd.f32 0.0, %v1078
        %1080 = vmatmul.f32.gmra.mxu0 %v677
        %v1081 = vpop.f32.mrf.mxu0
        %v1082 = vadd.f32 0.0, %v1081
        %1083 = vmatmul.f32.gmra.mxu0 %v680
        %v1084 = vpop.f32.mrf.mxu0
        %v1085 = vadd.f32 0.0, %v1084
        %1086 = vmatmul.f32.gmra.mxu0 %v683
        %v1087 = vpop.f32.mrf.mxu0
        %v1088 = vadd.f32 0.0, %v1087
        %1089 = vmatmul.f32.gmra.mxu0 %v686
        %v1090 = vpop.f32.mrf.mxu0
        %v1091 = vadd.f32 0.0, %v1090
        %1092 = vmatmul.f32.gmra.mxu0 %v689
        %v1093 = vpop.f32.mrf.mxu0
        %v1094 = vadd.f32 0.0, %v1093
        %1095 = vmatmul.f32.gmra.mxu0 %v692
        %v1096 = vpop.f32.mrf.mxu0
        %v1097 = vadd.f32 0.0, %v1096
        %1098 = vmatmul.f32.gmra.mxu0 %v695
        %v1099 = vpop.f32.mrf.mxu0
        %v1100 = vadd.f32 0.0, %v1099
        %1101 = vmatmul.f32.gmra.mxu0 %v698
        %v1102 = vpop.f32.mrf.mxu0
        %v1103 = vadd.f32 0.0, %v1102
        %1104 = vmatmul.f32.gmra.mxu0 %v701
        %v1105 = vpop.f32.mrf.mxu0
        %v1106 = vadd.f32 0.0, %v1105
        %1107 = vmatmul.f32.gmra.mxu0 %v704
        %v1108 = vpop.f32.mrf.mxu0
        %v1109 = vadd.f32 0.0, %v1108
        %1110 = vmatmul.f32.gmra.mxu0 %v707
        %v1111 = vpop.f32.mrf.mxu0
        %v1112 = vadd.f32 0.0, %v1111
        %1113 = vmatmul.f32.gmra.mxu0 %v710
        %v1114 = vpop.f32.mrf.mxu0
        %v1115 = vadd.f32 0.0, %v1114
        %1116 = vmatmul.f32.gmra.mxu0 %v713
        %v1117 = vpop.f32.mrf.mxu0
        %v1118 = vadd.f32 0.0, %v1117
        %1119 = vmatmul.f32.gmra.mxu0 %v716
        %v1120 = vpop.f32.mrf.mxu0
        %v1121 = vadd.f32 0.0, %v1120
        %1122 = vmatmul.f32.gmra.mxu0 %v719
        %v1123 = vpop.f32.mrf.mxu0
        %v1124 = vadd.f32 0.0, %v1123
        %1125 = vmatmul.f32.gmra.mxu0 %v722
        %v1126 = vpop.f32.mrf.mxu0
        %v1127 = vadd.f32 0.0, %v1126
        %1128 = vmatmul.f32.gmra.mxu0 %v725
        %v1129 = vpop.f32.mrf.mxu0
        %v1130 = vadd.f32 0.0, %v1129
        %1131 = vmatmul.f32.gmra.mxu0 %v728
        %v1132 = vpop.f32.mrf.mxu0
        %v1133 = vadd.f32 0.0, %v1132
        %1134 = vmatmul.f32.gmra.mxu0 %v731
        %v1135 = vpop.f32.mrf.mxu0
        %v1136 = vadd.f32 0.0, %v1135
        %1137 = vmatmul.f32.gmra.mxu0 %v734
        %v1138 = vpop.f32.mrf.mxu0
        %v1139 = vadd.f32 0.0, %v1138
        %1140 = vmatmul.f32.gmra.mxu0 %v737
        %v1141 = vpop.f32.mrf.mxu0
        %v1142 = vadd.f32 0.0, %v1141
        %1143 = vmatmul.f32.gmra.mxu0 %v740
        %v1144 = vpop.f32.mrf.mxu0
        %v1145 = vadd.f32 0.0, %v1144
        %1146 = vmatmul.f32.gmra.mxu0 %v743
        %v1147 = vpop.f32.mrf.mxu0
        %v1148 = vadd.f32 0.0, %v1147
        %1149 = vmatmul.f32.gmra.mxu0 %v746
        %v1150 = vpop.f32.mrf.mxu0
        %v1151 = vadd.f32 0.0, %v1150
        %1152 = vmatmul.f32.gmra.mxu0 %v749
        %v1153 = vpop.f32.mrf.mxu0
        %v1154 = vadd.f32 0.0, %v1153
        %1155 = vmatmul.f32.gmra.mxu0 %v752
        %v1156 = vpop.f32.mrf.mxu0
        %v1157 = vadd.f32 0.0, %v1156
        %1158 = vmatmul.f32.gmra.mxu0 %v755
        %v1159 = vpop.f32.mrf.mxu0
        %v1160 = vadd.f32 0.0, %v1159
        %1161 = vmatmul.f32.gmra.mxu0 %v758
        %v1162 = vpop.f32.mrf.mxu0
        %v1163 = vadd.f32 0.0, %v1162
        %1164 = vmatmul.f32.gmra.mxu0 %v761
        %v1165 = vpop.f32.mrf.mxu0
        %v1166 = vadd.f32 0.0, %v1165
        %1167 = vmatmul.f32.gmra.mxu0 %v764
        %v1168 = vpop.f32.mrf.mxu0
        %v1169 = vadd.f32 0.0, %v1168
        %1170 = vmatmul.f32.gmra.mxu0 %v767
        %v1171 = vpop.f32.mrf.mxu0
        %v1172 = vadd.f32 0.0, %v1171
        %1173 = vmatmul.f32.gmra.mxu0 %v770
        %v1174 = vpop.f32.mrf.mxu0
        %v1175 = vadd.f32 0.0, %v1174
        %1176 = vmatmul.f32.gmra.mxu0 %v773
        %v1177 = vpop.f32.mrf.mxu0
        %v1178 = vadd.f32 0.0, %v1177
        %1179 = vmatmul.f32.gmra.mxu0 %v776
        %v1180 = vpop.f32.mrf.mxu0
        %v1181 = vadd.f32 0.0, %v1180
        %1182 = vmatmul.f32.gmra.mxu0 %v779
        %v1183 = vpop.f32.mrf.mxu0
        %v1184 = vadd.f32 0.0, %v1183
        %1185 = vmatmul.f32.gmra.mxu0 %v782
        %v1186 = vpop.f32.mrf.mxu0
        %v1187 = vadd.f32 0.0, %v1186
        %1188 = vmatmul.f32.gmra.mxu0 %v785
        %v1189 = vpop.f32.mrf.mxu0
        %v1190 = vadd.f32 0.0, %v1189
        %1191 = vmatmul.f32.gmra.mxu0 %v788
        %v1192 = vpop.f32.mrf.mxu0
        %v1193 = vadd.f32 0.0, %v1192
        %1194 = vmatmul.f32.gmra.mxu0 %v791
        %v1195 = vpop.f32.mrf.mxu0
        %v1196 = vadd.f32 0.0, %v1195
        %1197 = vmatmul.f32.gmra.mxu0 %v794
        %v1198 = vpop.f32.mrf.mxu0
        %v1199 = vadd.f32 0.0, %v1198
        %1200 = vmatmul.f32.gmra.mxu0 %v797
        %v1201 = vpop.f32.mrf.mxu0
        %v1202 = vadd.f32 0.0, %v1201
        %1203 = vmatmul.f32.gmra.mxu0 %v800
        %v1204 = vpop.f32.mrf.mxu0
        %v1205 = vadd.f32 0.0, %v1204
        %1206 = vmatmul.f32.gmra.mxu0 %v803
        %v1207 = vpop.f32.mrf.mxu0
        %v1208 = vadd.f32 0.0, %v1207
        %1209 = vmatmul.f32.gmra.mxu0 %v806
        %v1210 = vpop.f32.mrf.mxu0
        %v1211 = vadd.f32 0.0, %v1210
        %1212 = vmatmul.f32.gmra.mxu0 %v809
        %v1213 = vpop.f32.mrf.mxu0
        %v1214 = vadd.f32 0.0, %v1213
        %1215 = vmatmul.f32.gmra.mxu0 %v812
        %v1216 = vpop.f32.mrf.mxu0
        %v1217 = vadd.f32 0.0, %v1216
        %1218 = vmatmul.f32.gmra.mxu0 %v815
        %v1219 = vpop.f32.mrf.mxu0
        %v1220 = vadd.f32 0.0, %v1219
        %1221 = vmatmul.f32.gmra.mxu0 %v818
        %v1222 = vpop.f32.mrf.mxu0
        %v1223 = vadd.f32 0.0, %v1222
        %1224 = vmatmul.f32.gmra.mxu0 %v821
        %v1225 = vpop.f32.mrf.mxu0
        %v1226 = vadd.f32 0.0, %v1225
        %1227 = vmatmul.f32.gmra.mxu0 %v824
        %v1228 = vpop.f32.mrf.mxu0
        %v1229 = vadd.f32 0.0, %v1228
        %1230 = vmatmul.f32.gmra.mxu0 %v827
        %v1231 = vpop.f32.mrf.mxu0
        %v1232 = vadd.f32 0.0, %v1231
        %1233 = vmatmul.f32.gmra.mxu0 %v830
        %v1234 = vpop.f32.mrf.mxu0
        %v1235 = vadd.f32 0.0, %v1234
        %1236 = vmatmul.f32.gmra.mxu0 %v833
        %v1237 = vpop.f32.mrf.mxu0
        %v1238 = vadd.f32 0.0, %v1237
        %1239 = vmatmul.f32.gmra.mxu0 %v836
        %v1240 = vpop.f32.mrf.mxu0
        %v1241 = vadd.f32 0.0, %v1240
        %1242 = vmatmul.f32.gmra.mxu0 %v839
        %v1243 = vpop.f32.mrf.mxu0
        %v1244 = vadd.f32 0.0, %v1243
        %1245 = vmatmul.f32.gmra.mxu0 %v842
        %v1246 = vpop.f32.mrf.mxu0
        %v1247 = vadd.f32 0.0, %v1246
        %1248 = vmatmul.f32.gmra.mxu0 %v845
        %v1249 = vpop.f32.mrf.mxu0
        %v1250 = vadd.f32 0.0, %v1249
        %1251 = vmatmul.f32.gmra.mxu0 %v848
        %v1252 = vpop.f32.mrf.mxu0
        %v1253 = vadd.f32 0.0, %v1252
        %1254 = vmatmul.f32.gmra.mxu0 %v851
        %v1255 = vpop.f32.mrf.mxu0
        %v1256 = vadd.f32 0.0, %v1255
        %1257 = vmatmul.f32.gmra.mxu0 %v854
        %v1258 = vpop.f32.mrf.mxu0
        %v1259 = vadd.f32 0.0, %v1258
        %1260 = vmatmul.f32.gmra.mxu0 %v857
        %v1261 = vpop.f32.mrf.mxu0
        %v1262 = vadd.f32 0.0, %v1261
        %1263 = vmatmul.f32.gmra.mxu0 %v860
        %v1264 = vpop.f32.mrf.mxu0
        %v1265 = vadd.f32 0.0, %v1264
        %1266 = vmatmul.f32.gmra.mxu0 %v863
        %v1267 = vpop.f32.mrf.mxu0
        %v1268 = vadd.f32 0.0, %v1267
        %1269 = vmatmul.f32.gmra.mxu0 %v866
        %v1270 = vpop.f32.mrf.mxu0
        %v1271 = vadd.f32 0.0, %v1270
        %1272 = vmatmul.f32.gmra.mxu0 %v869
        %v1273 = vpop.f32.mrf.mxu0
        %v1274 = vadd.f32 0.0, %v1273
        %1275 = vmatmul.f32.gmra.mxu0 %v872
        %v1276 = vpop.f32.mrf.mxu0
        %v1277 = vadd.f32 0.0, %v1276
        %1278 = vmatmul.f32.gmra.mxu0 %v875
        %v1279 = vpop.f32.mrf.mxu0
        %v1280 = vadd.f32 0.0, %v1279
        %1281 = vmatmul.f32.gmra.mxu0 %v878
        %v1282 = vpop.f32.mrf.mxu0
        %v1283 = vadd.f32 0.0, %v1282
        %1284 = vmatmul.f32.gmra.mxu0 %v881
        %v1285 = vpop.f32.mrf.mxu0
        %v1286 = vadd.f32 0.0, %v1285
        %1287 = vmatmul.f32.gmra.mxu0 %v884
        %v1288 = vpop.f32.mrf.mxu0
        %v1289 = vadd.f32 0.0, %v1288
        %1290 = vmatmul.f32.gmra.mxu0 %v887
        %v1291 = vpop.f32.mrf.mxu0
        %v1292 = vadd.f32 0.0, %v1291
        %1293 = vmatmul.f32.gmra.mxu0 %v890
        %v1294 = vpop.f32.mrf.mxu0
        %v1295 = vadd.f32 0.0, %v1294
        %1296 = vmatmul.f32.gmra.mxu0 %v893
        %v1297 = vpop.f32.mrf.mxu0
        %v1298 = vadd.f32 0.0, %v1297
        %1299 = vmatmul.f32.gmra.mxu0 %v896
        %v1300 = vpop.f32.mrf.mxu0
        %v1301 = vadd.f32 0.0, %v1300
        %1302 = vmatmul.f32.gmra.mxu0 %v899
        %v1303 = vpop.f32.mrf.mxu0
        %v1304 = vadd.f32 0.0, %v1303
        %1305 = vmatmul.f32.gmra.mxu0 %v902
        %v1306 = vpop.f32.mrf.mxu0
        %v1307 = vadd.f32 0.0, %v1306
        %1308 = vmatmul.f32.gmra.mxu0 %v905
        %v1309 = vpop.f32.mrf.mxu0
        %v1310 = vadd.f32 0.0, %v1309
        %1311 = vmatmul.f32.gmra.mxu0 %v908
        %v1312 = vpop.f32.mrf.mxu0
        %v1313 = vadd.f32 0.0, %v1312
        %1314 = vmatmul.f32.gmra.mxu0 %v911
        %v1315 = vpop.f32.mrf.mxu0
        %v1316 = vadd.f32 0.0, %v1315
        %1317 = vmatmul.f32.gmra.mxu0 %v914
        %v1318 = vpop.f32.mrf.mxu0
        %v1319 = vadd.f32 0.0, %v1318
        %1320 = vdwg.mxu0
        %v1321 = vld [vmem:[%s360] sm:$0xff]
        %v1322 = vld [vmem:[%s360 + $0x8] sm:$0xff]
        %v1323 = vld [vmem:[%s360 + $0x10] sm:$0xff]
        %v1324 = vld [vmem:[%s360 + $0x18] sm:$0xff]
        %v1325 = vld [vmem:[%s360 + $0x20] sm:$0xff]
        %v1326 = vld [vmem:[%s360 + $0x28] sm:$0xff]
        %v1327 = vld [vmem:[%s360 + $0x30] sm:$0xff]
        %v1328 = vld [vmem:[%s360 + $0x38] sm:$0xff]
        %v1329 = vld [vmem:[%s360 + $0x40] sm:$0xff]
        %v1330 = vld [vmem:[%s360 + $0x48] sm:$0xff]
        %v1331 = vld [vmem:[%s360 + $0x50] sm:$0xff]
        %v1332 = vld [vmem:[%s360 + $0x58] sm:$0xff]
        %v1333 = vld [vmem:[%s360 + $0x60] sm:$0xff]
        %v1334 = vld [vmem:[%s360 + $0x68] sm:$0xff]
        %v1335 = vld [vmem:[%s360 + $0x70] sm:$0xff]
        %v1336 = vld [vmem:[%s360 + $0x78] sm:$0xff]
        %v1337 = vld [vmem:[%s360 + $0x80] sm:$0xff]
        %v1338 = vld [vmem:[%s360 + $0x88] sm:$0xff]
        %v1339 = vld [vmem:[%s360 + $0x90] sm:$0xff]
        %v1340 = vld [vmem:[%s360 + $0x98] sm:$0xff]
        %v1341 = vld [vmem:[%s360 + $0xa0] sm:$0xff]
        %v1342 = vld [vmem:[%s360 + $0xa8] sm:$0xff]
        %v1343 = vld [vmem:[%s360 + $0xb0] sm:$0xff]
        %v1344 = vld [vmem:[%s360 + $0xb8] sm:$0xff]
        %v1345 = vld [vmem:[%s360 + $0xc0] sm:$0xff]
        %v1346 = vld [vmem:[%s360 + $0xc8] sm:$0xff]
        %v1347 = vld [vmem:[%s360 + $0xd0] sm:$0xff]
        %v1348 = vld [vmem:[%s360 + $0xd8] sm:$0xff]
        %v1349 = vld [vmem:[%s360 + $0xe0] sm:$0xff]
        %v1350 = vld [vmem:[%s360 + $0xe8] sm:$0xff]
        %v1351 = vld [vmem:[%s360 + $0xf0] sm:$0xff]
        %v1352 = vld [vmem:[%s360 + $0xf8] sm:$0xff]
        %v1353 = vld [vmem:[%s360 + $0x100] sm:$0xff]
        %v1354 = vld [vmem:[%s360 + $0x108] sm:$0xff]
        %v1355 = vld [vmem:[%s360 + $0x110] sm:$0xff]
        %v1356 = vld [vmem:[%s360 + $0x118] sm:$0xff]
        %v1357 = vld [vmem:[%s360 + $0x120] sm:$0xff]
        %v1358 = vld [vmem:[%s360 + $0x128] sm:$0xff]
        %v1359 = vld [vmem:[%s360 + $0x130] sm:$0xff]
        %v1360 = vld [vmem:[%s360 + $0x138] sm:$0xff]
        %v1361 = vld [vmem:[%s360 + $0x140] sm:$0xff]
        %v1362 = vld [vmem:[%s360 + $0x148] sm:$0xff]
        %v1363 = vld [vmem:[%s360 + $0x150] sm:$0xff]
        %v1364 = vld [vmem:[%s360 + $0x158] sm:$0xff]
        %v1365 = vld [vmem:[%s360 + $0x160] sm:$0xff]
        %v1366 = vld [vmem:[%s360 + $0x168] sm:$0xff]
        %v1367 = vld [vmem:[%s360 + $0x170] sm:$0xff]
        %v1368 = vld [vmem:[%s360 + $0x178] sm:$0xff]
        %v1369 = vld [vmem:[%s360 + $0x180] sm:$0xff]
        %v1370 = vld [vmem:[%s360 + $0x188] sm:$0xff]
        %v1371 = vld [vmem:[%s360 + $0x190] sm:$0xff]
        %v1372 = vld [vmem:[%s360 + $0x198] sm:$0xff]
        %v1373 = vld [vmem:[%s360 + $0x1a0] sm:$0xff]
        %v1374 = vld [vmem:[%s360 + $0x1a8] sm:$0xff]
        %v1375 = vld [vmem:[%s360 + $0x1b0] sm:$0xff]
        %v1376 = vld [vmem:[%s360 + $0x1b8] sm:$0xff]
        %v1377 = vld [vmem:[%s360 + $0x1c0] sm:$0xff]
        %v1378 = vld [vmem:[%s360 + $0x1c8] sm:$0xff]
        %v1379 = vld [vmem:[%s360 + $0x1d0] sm:$0xff]
        %v1380 = vld [vmem:[%s360 + $0x1d8] sm:$0xff]
        %v1381 = vld [vmem:[%s360 + $0x1e0] sm:$0xff]
        %v1382 = vld [vmem:[%s360 + $0x1e8] sm:$0xff]
        %v1383 = vld [vmem:[%s360 + $0x1f0] sm:$0xff]
        %v1384 = vld [vmem:[%s360 + $0x1f8] sm:$0xff]
        %v1385 = vld [vmem:[%s360 + $0x200] sm:$0xff]
        %v1386 = vld [vmem:[%s360 + $0x208] sm:$0xff]
        %v1387 = vld [vmem:[%s360 + $0x210] sm:$0xff]
        %v1388 = vld [vmem:[%s360 + $0x218] sm:$0xff]
        %v1389 = vld [vmem:[%s360 + $0x220] sm:$0xff]
        %v1390 = vld [vmem:[%s360 + $0x228] sm:$0xff]
        %v1391 = vld [vmem:[%s360 + $0x230] sm:$0xff]
        %v1392 = vld [vmem:[%s360 + $0x238] sm:$0xff]
        %v1393 = vld [vmem:[%s360 + $0x240] sm:$0xff]
        %v1394 = vld [vmem:[%s360 + $0x248] sm:$0xff]
        %v1395 = vld [vmem:[%s360 + $0x250] sm:$0xff]
        %v1396 = vld [vmem:[%s360 + $0x258] sm:$0xff]
        %v1397 = vld [vmem:[%s360 + $0x260] sm:$0xff]
        %v1398 = vld [vmem:[%s360 + $0x268] sm:$0xff]
        %v1399 = vld [vmem:[%s360 + $0x270] sm:$0xff]
        %v1400 = vld [vmem:[%s360 + $0x278] sm:$0xff]
        %v1401 = vld [vmem:[%s360 + $0x280] sm:$0xff]
        %v1402 = vld [vmem:[%s360 + $0x288] sm:$0xff]
        %v1403 = vld [vmem:[%s360 + $0x290] sm:$0xff]
        %v1404 = vld [vmem:[%s360 + $0x298] sm:$0xff]
        %v1405 = vld [vmem:[%s360 + $0x2a0] sm:$0xff]
        %v1406 = vld [vmem:[%s360 + $0x2a8] sm:$0xff]
        %v1407 = vld [vmem:[%s360 + $0x2b0] sm:$0xff]
        %v1408 = vld [vmem:[%s360 + $0x2b8] sm:$0xff]
        %v1409 = vld [vmem:[%s360 + $0x2c0] sm:$0xff]
        %v1410 = vld [vmem:[%s360 + $0x2c8] sm:$0xff]
        %v1411 = vld [vmem:[%s360 + $0x2d0] sm:$0xff]
        %v1412 = vld [vmem:[%s360 + $0x2d8] sm:$0xff]
        %v1413 = vld [vmem:[%s360 + $0x2e0] sm:$0xff]
        %v1414 = vld [vmem:[%s360 + $0x2e8] sm:$0xff]
        %v1415 = vld [vmem:[%s360 + $0x2f0] sm:$0xff]
        %v1416 = vld [vmem:[%s360 + $0x2f8] sm:$0xff]
        %v1417 = vld [vmem:[%s360 + $0x300] sm:$0xff]
        %v1418 = vld [vmem:[%s360 + $0x308] sm:$0xff]
        %v1419 = vld [vmem:[%s360 + $0x310] sm:$0xff]
        %v1420 = vld [vmem:[%s360 + $0x318] sm:$0xff]
        %v1421 = vld [vmem:[%s360 + $0x320] sm:$0xff]
        %v1422 = vld [vmem:[%s360 + $0x328] sm:$0xff]
        %v1423 = vld [vmem:[%s360 + $0x330] sm:$0xff]
        %v1424 = vld [vmem:[%s360 + $0x338] sm:$0xff]
        %v1425 = vld [vmem:[%s360 + $0x340] sm:$0xff]
        %v1426 = vld [vmem:[%s360 + $0x348] sm:$0xff]
        %v1427 = vld [vmem:[%s360 + $0x350] sm:$0xff]
        %v1428 = vld [vmem:[%s360 + $0x358] sm:$0xff]
        %v1429 = vld [vmem:[%s360 + $0x360] sm:$0xff]
        %v1430 = vld [vmem:[%s360 + $0x368] sm:$0xff]
        %v1431 = vld [vmem:[%s360 + $0x370] sm:$0xff]
        %v1432 = vld [vmem:[%s360 + $0x378] sm:$0xff]
        %v1433 = vld [vmem:[%s360 + $0x380] sm:$0xff]
        %v1434 = vld [vmem:[%s360 + $0x388] sm:$0xff]
        %v1435 = vld [vmem:[%s360 + $0x390] sm:$0xff]
        %v1436 = vld [vmem:[%s360 + $0x398] sm:$0xff]
        %v1437 = vld [vmem:[%s360 + $0x3a0] sm:$0xff]
        %v1438 = vld [vmem:[%s360 + $0x3a8] sm:$0xff]
        %v1439 = vld [vmem:[%s360 + $0x3b0] sm:$0xff]
        %v1440 = vld [vmem:[%s360 + $0x3b8] sm:$0xff]
        %v1441 = vld [vmem:[%s360 + $0x3c0] sm:$0xff]
        %v1442 = vld [vmem:[%s360 + $0x3c8] sm:$0xff]
        %v1443 = vld [vmem:[%s360 + $0x3d0] sm:$0xff]
        %v1444 = vld [vmem:[%s360 + $0x3d8] sm:$0xff]
        %v1445 = vld [vmem:[%s360 + $0x3e0] sm:$0xff]
        %v1446 = vld [vmem:[%s360 + $0x3e8] sm:$0xff]
        %v1447 = vld [vmem:[%s360 + $0x3f0] sm:$0xff]
        %v1448 = vld [vmem:[%s360 + $0x3f8] sm:$0xff]
        %v1450 = vsel %vm531, %v1321, 0
        %v1453 = vsel %vm531, %v1322, 0
        %v1456 = vsel %vm531, %v1323, 0
        %v1459 = vsel %vm531, %v1324, 0
        %v1462 = vsel %vm531, %v1325, 0
        %v1465 = vsel %vm531, %v1326, 0
        %v1468 = vsel %vm531, %v1327, 0
        %v1471 = vsel %vm531, %v1328, 0
        %v1474 = vsel %vm531, %v1329, 0
        %v1477 = vsel %vm531, %v1330, 0
        %v1480 = vsel %vm531, %v1331, 0
        %v1483 = vsel %vm531, %v1332, 0
        %v1486 = vsel %vm531, %v1333, 0
        %v1489 = vsel %vm531, %v1334, 0
        %v1492 = vsel %vm531, %v1335, 0
        %v1495 = vsel %vm531, %v1336, 0
        %v1498 = vsel %vm531, %v1337, 0
        %v1501 = vsel %vm531, %v1338, 0
        %v1504 = vsel %vm531, %v1339, 0
        %v1507 = vsel %vm531, %v1340, 0
        %v1510 = vsel %vm531, %v1341, 0
        %v1513 = vsel %vm531, %v1342, 0
        %v1516 = vsel %vm531, %v1343, 0
        %v1519 = vsel %vm531, %v1344, 0
        %v1522 = vsel %vm531, %v1345, 0
        %v1525 = vsel %vm531, %v1346, 0
        %v1528 = vsel %vm531, %v1347, 0
        %v1531 = vsel %vm531, %v1348, 0
        %v1534 = vsel %vm531, %v1349, 0
        %v1537 = vsel %vm531, %v1350, 0
        %v1540 = vsel %vm531, %v1351, 0
        %v1543 = vsel %vm531, %v1352, 0
        %v1546 = vsel %vm531, %v1353, 0
        %v1549 = vsel %vm531, %v1354, 0
        %v1552 = vsel %vm531, %v1355, 0
        %v1555 = vsel %vm531, %v1356, 0
        %v1558 = vsel %vm531, %v1357, 0
        %v1561 = vsel %vm531, %v1358, 0
        %v1564 = vsel %vm531, %v1359, 0
        %v1567 = vsel %vm531, %v1360, 0
        %v1570 = vsel %vm531, %v1361, 0
        %v1573 = vsel %vm531, %v1362, 0
        %v1576 = vsel %vm531, %v1363, 0
        %v1579 = vsel %vm531, %v1364, 0
        %v1582 = vsel %vm531, %v1365, 0
        %v1585 = vsel %vm531, %v1366, 0
        %v1588 = vsel %vm531, %v1367, 0
        %v1591 = vsel %vm531, %v1368, 0
        %v1594 = vsel %vm531, %v1369, 0
        %v1597 = vsel %vm531, %v1370, 0
        %v1600 = vsel %vm531, %v1371, 0
        %v1603 = vsel %vm531, %v1372, 0
        %v1606 = vsel %vm531, %v1373, 0
        %v1609 = vsel %vm531, %v1374, 0
        %v1612 = vsel %vm531, %v1375, 0
        %v1615 = vsel %vm531, %v1376, 0
        %v1618 = vsel %vm531, %v1377, 0
        %v1621 = vsel %vm531, %v1378, 0
        %v1624 = vsel %vm531, %v1379, 0
        %v1627 = vsel %vm531, %v1380, 0
        %v1630 = vsel %vm531, %v1381, 0
        %v1633 = vsel %vm531, %v1382, 0
        %v1636 = vsel %vm531, %v1383, 0
        %v1639 = vsel %vm531, %v1384, 0
        %v1642 = vsel %vm531, %v1385, 0
        %v1645 = vsel %vm531, %v1386, 0
        %v1648 = vsel %vm531, %v1387, 0
        %v1651 = vsel %vm531, %v1388, 0
        %v1654 = vsel %vm531, %v1389, 0
        %v1657 = vsel %vm531, %v1390, 0
        %v1660 = vsel %vm531, %v1391, 0
        %v1663 = vsel %vm531, %v1392, 0
        %v1666 = vsel %vm531, %v1393, 0
        %v1669 = vsel %vm531, %v1394, 0
        %v1672 = vsel %vm531, %v1395, 0
        %v1675 = vsel %vm531, %v1396, 0
        %v1678 = vsel %vm531, %v1397, 0
        %v1681 = vsel %vm531, %v1398, 0
        %v1684 = vsel %vm531, %v1399, 0
        %v1687 = vsel %vm531, %v1400, 0
        %v1690 = vsel %vm531, %v1401, 0
        %v1693 = vsel %vm531, %v1402, 0
        %v1696 = vsel %vm531, %v1403, 0
        %v1699 = vsel %vm531, %v1404, 0
        %v1702 = vsel %vm531, %v1405, 0
        %v1705 = vsel %vm531, %v1406, 0
        %v1708 = vsel %vm531, %v1407, 0
        %v1711 = vsel %vm531, %v1408, 0
        %v1714 = vsel %vm531, %v1409, 0
        %v1717 = vsel %vm531, %v1410, 0
        %v1720 = vsel %vm531, %v1411, 0
        %v1723 = vsel %vm531, %v1412, 0
        %v1726 = vsel %vm531, %v1413, 0
        %v1729 = vsel %vm531, %v1414, 0
        %v1732 = vsel %vm531, %v1415, 0
        %v1735 = vsel %vm531, %v1416, 0
        %v1738 = vsel %vm531, %v1417, 0
        %v1741 = vsel %vm531, %v1418, 0
        %v1744 = vsel %vm531, %v1419, 0
        %v1747 = vsel %vm531, %v1420, 0
        %v1750 = vsel %vm531, %v1421, 0
        %v1753 = vsel %vm531, %v1422, 0
        %v1756 = vsel %vm531, %v1423, 0
        %v1759 = vsel %vm531, %v1424, 0
        %v1762 = vsel %vm531, %v1425, 0
        %v1765 = vsel %vm531, %v1426, 0
        %v1768 = vsel %vm531, %v1427, 0
        %v1771 = vsel %vm531, %v1428, 0
        %v1774 = vsel %vm531, %v1429, 0
        %v1777 = vsel %vm531, %v1430, 0
        %v1780 = vsel %vm531, %v1431, 0
        %v1783 = vsel %vm531, %v1432, 0
        %v1786 = vsel %vm531, %v1433, 0
        %v1789 = vsel %vm531, %v1434, 0
        %v1792 = vsel %vm531, %v1435, 0
        %v1795 = vsel %vm531, %v1436, 0
        %v1798 = vsel %vm531, %v1437, 0
        %v1801 = vsel %vm531, %v1438, 0
        %v1804 = vsel %vm531, %v1439, 0
        %v1807 = vsel %vm531, %v1440, 0
        %v1810 = vsel %vm531, %v1441, 0
        %v1813 = vsel %vm531, %v1442, 0
        %v1816 = vsel %vm531, %v1443, 0
        %v1819 = vsel %vm531, %v1444, 0
        %v1822 = vsel %vm531, %v1445, 0
        %v1825 = vsel %vm531, %v1446, 0
        %v1828 = vsel %vm531, %v1447, 0
        %v1831 = vsel %vm531, %v1448, 0
        %1833 = vmatpush.msra.mxu0 0.0
        %1834 = vmatpush.msra.mxu0 0.0
        %1835 = vmatpush.msra.mxu0 0.0
        %1836 = vmatpush.msra.mxu0 0.0
        %1837 = vmatpush.msra.mxu0 0.0
        %1838 = vmatpush.msra.mxu0 0.0
        %1839 = vmatpush.msra.mxu0 0.0
        %1840 = vmatpush.msra.mxu0 0.0
        %1841 = vmatpush.msra.mxu0 0.0
        %1842 = vmatpush.msra.mxu0 0.0
        %1843 = vmatpush.msra.mxu0 0.0
        %1844 = vmatpush.msra.mxu0 0.0
        %1845 = vmatpush.msra.mxu0 %v918
        %1846 = vmatpush.msra.mxu0 %v401
        %1847 = vmatpush.msra.mxu0 %v400
        %1848 = vmatpush.msra.mxu0 %v399
        %1849 = vmatmul.f32.gmra.mxu0 %v1450
        %v1850 = vpop.f32.mrf.mxu0
        %v1851 = vadd.f32 0.0, %v1850
        %1852 = vmatmul.f32.gmra.mxu0 %v1453
        %v1853 = vpop.f32.mrf.mxu0
        %v1854 = vadd.f32 0.0, %v1853
        %1855 = vmatmul.f32.gmra.mxu0 %v1456
        %v1856 = vpop.f32.mrf.mxu0
        %v1857 = vadd.f32 0.0, %v1856
        %1858 = vmatmul.f32.gmra.mxu0 %v1459
        %v1859 = vpop.f32.mrf.mxu0
        %v1860 = vadd.f32 0.0, %v1859
        %1861 = vmatmul.f32.gmra.mxu0 %v1462
        %v1862 = vpop.f32.mrf.mxu0
        %v1863 = vadd.f32 0.0, %v1862
        %1864 = vmatmul.f32.gmra.mxu0 %v1465
        %v1865 = vpop.f32.mrf.mxu0
        %v1866 = vadd.f32 0.0, %v1865
        %1867 = vmatmul.f32.gmra.mxu0 %v1468
        %v1868 = vpop.f32.mrf.mxu0
        %v1869 = vadd.f32 0.0, %v1868
        %1870 = vmatmul.f32.gmra.mxu0 %v1471
        %v1871 = vpop.f32.mrf.mxu0
        %v1872 = vadd.f32 0.0, %v1871
        %1873 = vmatmul.f32.gmra.mxu0 %v1474
        %v1874 = vpop.f32.mrf.mxu0
        %v1875 = vadd.f32 0.0, %v1874
        %1876 = vmatmul.f32.gmra.mxu0 %v1477
        %v1877 = vpop.f32.mrf.mxu0
        %v1878 = vadd.f32 0.0, %v1877
        %1879 = vmatmul.f32.gmra.mxu0 %v1480
        %v1880 = vpop.f32.mrf.mxu0
        %v1881 = vadd.f32 0.0, %v1880
        %1882 = vmatmul.f32.gmra.mxu0 %v1483
        %v1883 = vpop.f32.mrf.mxu0
        %v1884 = vadd.f32 0.0, %v1883
        %1885 = vmatmul.f32.gmra.mxu0 %v1486
        %v1886 = vpop.f32.mrf.mxu0
        %v1887 = vadd.f32 0.0, %v1886
        %1888 = vmatmul.f32.gmra.mxu0 %v1489
        %v1889 = vpop.f32.mrf.mxu0
        %v1890 = vadd.f32 0.0, %v1889
        %1891 = vmatmul.f32.gmra.mxu0 %v1492
        %v1892 = vpop.f32.mrf.mxu0
        %v1893 = vadd.f32 0.0, %v1892
        %1894 = vmatmul.f32.gmra.mxu0 %v1495
        %v1895 = vpop.f32.mrf.mxu0
        %v1896 = vadd.f32 0.0, %v1895
        %1897 = vmatmul.f32.gmra.mxu0 %v1498
        %v1898 = vpop.f32.mrf.mxu0
        %v1899 = vadd.f32 0.0, %v1898
        %1900 = vmatmul.f32.gmra.mxu0 %v1501
        %v1901 = vpop.f32.mrf.mxu0
        %v1902 = vadd.f32 0.0, %v1901
        %1903 = vmatmul.f32.gmra.mxu0 %v1504
        %v1904 = vpop.f32.mrf.mxu0
        %v1905 = vadd.f32 0.0, %v1904
        %1906 = vmatmul.f32.gmra.mxu0 %v1507
        %v1907 = vpop.f32.mrf.mxu0
        %v1908 = vadd.f32 0.0, %v1907
        %1909 = vmatmul.f32.gmra.mxu0 %v1510
        %v1910 = vpop.f32.mrf.mxu0
        %v1911 = vadd.f32 0.0, %v1910
        %1912 = vmatmul.f32.gmra.mxu0 %v1513
        %v1913 = vpop.f32.mrf.mxu0
        %v1914 = vadd.f32 0.0, %v1913
        %1915 = vmatmul.f32.gmra.mxu0 %v1516
        %v1916 = vpop.f32.mrf.mxu0
        %v1917 = vadd.f32 0.0, %v1916
        %1918 = vmatmul.f32.gmra.mxu0 %v1519
        %v1919 = vpop.f32.mrf.mxu0
        %v1920 = vadd.f32 0.0, %v1919
        %1921 = vmatmul.f32.gmra.mxu0 %v1522
        %v1922 = vpop.f32.mrf.mxu0
        %v1923 = vadd.f32 0.0, %v1922
        %1924 = vmatmul.f32.gmra.mxu0 %v1525
        %v1925 = vpop.f32.mrf.mxu0
        %v1926 = vadd.f32 0.0, %v1925
        %1927 = vmatmul.f32.gmra.mxu0 %v1528
        %v1928 = vpop.f32.mrf.mxu0
        %v1929 = vadd.f32 0.0, %v1928
        %1930 = vmatmul.f32.gmra.mxu0 %v1531
        %v1931 = vpop.f32.mrf.mxu0
        %v1932 = vadd.f32 0.0, %v1931
        %1933 = vmatmul.f32.gmra.mxu0 %v1534
        %v1934 = vpop.f32.mrf.mxu0
        %v1935 = vadd.f32 0.0, %v1934
        %1936 = vmatmul.f32.gmra.mxu0 %v1537
        %v1937 = vpop.f32.mrf.mxu0
        %v1938 = vadd.f32 0.0, %v1937
        %1939 = vmatmul.f32.gmra.mxu0 %v1540
        %v1940 = vpop.f32.mrf.mxu0
        %v1941 = vadd.f32 0.0, %v1940
        %1942 = vmatmul.f32.gmra.mxu0 %v1543
        %v1943 = vpop.f32.mrf.mxu0
        %v1944 = vadd.f32 0.0, %v1943
        %1945 = vmatmul.f32.gmra.mxu0 %v1546
        %v1946 = vpop.f32.mrf.mxu0
        %v1947 = vadd.f32 0.0, %v1946
        %1948 = vmatmul.f32.gmra.mxu0 %v1549
        %v1949 = vpop.f32.mrf.mxu0
        %v1950 = vadd.f32 0.0, %v1949
        %1951 = vmatmul.f32.gmra.mxu0 %v1552
        %v1952 = vpop.f32.mrf.mxu0
        %v1953 = vadd.f32 0.0, %v1952
        %1954 = vmatmul.f32.gmra.mxu0 %v1555
        %v1955 = vpop.f32.mrf.mxu0
        %v1956 = vadd.f32 0.0, %v1955
        %1957 = vmatmul.f32.gmra.mxu0 %v1558
        %v1958 = vpop.f32.mrf.mxu0
        %v1959 = vadd.f32 0.0, %v1958
        %1960 = vmatmul.f32.gmra.mxu0 %v1561
        %v1961 = vpop.f32.mrf.mxu0
        %v1962 = vadd.f32 0.0, %v1961
        %1963 = vmatmul.f32.gmra.mxu0 %v1564
        %v1964 = vpop.f32.mrf.mxu0
        %v1965 = vadd.f32 0.0, %v1964
        %1966 = vmatmul.f32.gmra.mxu0 %v1567
        %v1967 = vpop.f32.mrf.mxu0
        %v1968 = vadd.f32 0.0, %v1967
        %1969 = vmatmul.f32.gmra.mxu0 %v1570
        %v1970 = vpop.f32.mrf.mxu0
        %v1971 = vadd.f32 0.0, %v1970
        %1972 = vmatmul.f32.gmra.mxu0 %v1573
        %v1973 = vpop.f32.mrf.mxu0
        %v1974 = vadd.f32 0.0, %v1973
        %1975 = vmatmul.f32.gmra.mxu0 %v1576
        %v1976 = vpop.f32.mrf.mxu0
        %v1977 = vadd.f32 0.0, %v1976
        %1978 = vmatmul.f32.gmra.mxu0 %v1579
        %v1979 = vpop.f32.mrf.mxu0
        %v1980 = vadd.f32 0.0, %v1979
        %1981 = vmatmul.f32.gmra.mxu0 %v1582
        %v1982 = vpop.f32.mrf.mxu0
        %v1983 = vadd.f32 0.0, %v1982
        %1984 = vmatmul.f32.gmra.mxu0 %v1585
        %v1985 = vpop.f32.mrf.mxu0
        %v1986 = vadd.f32 0.0, %v1985
        %1987 = vmatmul.f32.gmra.mxu0 %v1588
        %v1988 = vpop.f32.mrf.mxu0
        %v1989 = vadd.f32 0.0, %v1988
        %1990 = vmatmul.f32.gmra.mxu0 %v1591
        %v1991 = vpop.f32.mrf.mxu0
        %v1992 = vadd.f32 0.0, %v1991
        %1993 = vmatmul.f32.gmra.mxu0 %v1594
        %v1994 = vpop.f32.mrf.mxu0
        %v1995 = vadd.f32 0.0, %v1994
        %1996 = vmatmul.f32.gmra.mxu0 %v1597
        %v1997 = vpop.f32.mrf.mxu0
        %v1998 = vadd.f32 0.0, %v1997
        %1999 = vmatmul.f32.gmra.mxu0 %v1600
        %v2000 = vpop.f32.mrf.mxu0
        %v2001 = vadd.f32 0.0, %v2000
        %2002 = vmatmul.f32.gmra.mxu0 %v1603
        %v2003 = vpop.f32.mrf.mxu0
        %v2004 = vadd.f32 0.0, %v2003
        %2005 = vmatmul.f32.gmra.mxu0 %v1606
        %v2006 = vpop.f32.mrf.mxu0
        %v2007 = vadd.f32 0.0, %v2006
        %2008 = vmatmul.f32.gmra.mxu0 %v1609
        %v2009 = vpop.f32.mrf.mxu0
        %v2010 = vadd.f32 0.0, %v2009
        %2011 = vmatmul.f32.gmra.mxu0 %v1612
        %v2012 = vpop.f32.mrf.mxu0
        %v2013 = vadd.f32 0.0, %v2012
        %2014 = vmatmul.f32.gmra.mxu0 %v1615
        %v2015 = vpop.f32.mrf.mxu0
        %v2016 = vadd.f32 0.0, %v2015
        %2017 = vmatmul.f32.gmra.mxu0 %v1618
        %v2018 = vpop.f32.mrf.mxu0
        %v2019 = vadd.f32 0.0, %v2018
        %2020 = vmatmul.f32.gmra.mxu0 %v1621
        %v2021 = vpop.f32.mrf.mxu0
        %v2022 = vadd.f32 0.0, %v2021
        %2023 = vmatmul.f32.gmra.mxu0 %v1624
        %v2024 = vpop.f32.mrf.mxu0
        %v2025 = vadd.f32 0.0, %v2024
        %2026 = vmatmul.f32.gmra.mxu0 %v1627
        %v2027 = vpop.f32.mrf.mxu0
        %v2028 = vadd.f32 0.0, %v2027
        %2029 = vmatmul.f32.gmra.mxu0 %v1630
        %v2030 = vpop.f32.mrf.mxu0
        %v2031 = vadd.f32 0.0, %v2030
        %2032 = vmatmul.f32.gmra.mxu0 %v1633
        %v2033 = vpop.f32.mrf.mxu0
        %v2034 = vadd.f32 0.0, %v2033
        %2035 = vmatmul.f32.gmra.mxu0 %v1636
        %v2036 = vpop.f32.mrf.mxu0
        %v2037 = vadd.f32 0.0, %v2036
        %2038 = vmatmul.f32.gmra.mxu0 %v1639
        %v2039 = vpop.f32.mrf.mxu0
        %v2040 = vadd.f32 0.0, %v2039
        %2041 = vmatmul.f32.gmra.mxu0 %v1642
        %v2042 = vpop.f32.mrf.mxu0
        %v2043 = vadd.f32 0.0, %v2042
        %2044 = vmatmul.f32.gmra.mxu0 %v1645
        %v2045 = vpop.f32.mrf.mxu0
        %v2046 = vadd.f32 0.0, %v2045
        %2047 = vmatmul.f32.gmra.mxu0 %v1648
        %v2048 = vpop.f32.mrf.mxu0
        %v2049 = vadd.f32 0.0, %v2048
        %2050 = vmatmul.f32.gmra.mxu0 %v1651
        %v2051 = vpop.f32.mrf.mxu0
        %v2052 = vadd.f32 0.0, %v2051
        %2053 = vmatmul.f32.gmra.mxu0 %v1654
        %v2054 = vpop.f32.mrf.mxu0
        %v2055 = vadd.f32 0.0, %v2054
        %2056 = vmatmul.f32.gmra.mxu0 %v1657
        %v2057 = vpop.f32.mrf.mxu0
        %v2058 = vadd.f32 0.0, %v2057
        %2059 = vmatmul.f32.gmra.mxu0 %v1660
        %v2060 = vpop.f32.mrf.mxu0
        %v2061 = vadd.f32 0.0, %v2060
        %2062 = vmatmul.f32.gmra.mxu0 %v1663
        %v2063 = vpop.f32.mrf.mxu0
        %v2064 = vadd.f32 0.0, %v2063
        %2065 = vmatmul.f32.gmra.mxu0 %v1666
        %v2066 = vpop.f32.mrf.mxu0
        %v2067 = vadd.f32 0.0, %v2066
        %2068 = vmatmul.f32.gmra.mxu0 %v1669
        %v2069 = vpop.f32.mrf.mxu0
        %v2070 = vadd.f32 0.0, %v2069
        %2071 = vmatmul.f32.gmra.mxu0 %v1672
        %v2072 = vpop.f32.mrf.mxu0
        %v2073 = vadd.f32 0.0, %v2072
        %2074 = vmatmul.f32.gmra.mxu0 %v1675
        %v2075 = vpop.f32.mrf.mxu0
        %v2076 = vadd.f32 0.0, %v2075
        %2077 = vmatmul.f32.gmra.mxu0 %v1678
        %v2078 = vpop.f32.mrf.mxu0
        %v2079 = vadd.f32 0.0, %v2078
        %2080 = vmatmul.f32.gmra.mxu0 %v1681
        %v2081 = vpop.f32.mrf.mxu0
        %v2082 = vadd.f32 0.0, %v2081
        %2083 = vmatmul.f32.gmra.mxu0 %v1684
        %v2084 = vpop.f32.mrf.mxu0
        %v2085 = vadd.f32 0.0, %v2084
        %2086 = vmatmul.f32.gmra.mxu0 %v1687
        %v2087 = vpop.f32.mrf.mxu0
        %v2088 = vadd.f32 0.0, %v2087
        %2089 = vmatmul.f32.gmra.mxu0 %v1690
        %v2090 = vpop.f32.mrf.mxu0
        %v2091 = vadd.f32 0.0, %v2090
        %2092 = vmatmul.f32.gmra.mxu0 %v1693
        %v2093 = vpop.f32.mrf.mxu0
        %v2094 = vadd.f32 0.0, %v2093
        %2095 = vmatmul.f32.gmra.mxu0 %v1696
        %v2096 = vpop.f32.mrf.mxu0
        %v2097 = vadd.f32 0.0, %v2096
        %2098 = vmatmul.f32.gmra.mxu0 %v1699
        %v2099 = vpop.f32.mrf.mxu0
        %v2100 = vadd.f32 0.0, %v2099
        %2101 = vmatmul.f32.gmra.mxu0 %v1702
        %v2102 = vpop.f32.mrf.mxu0
        %v2103 = vadd.f32 0.0, %v2102
        %2104 = vmatmul.f32.gmra.mxu0 %v1705
        %v2105 = vpop.f32.mrf.mxu0
        %v2106 = vadd.f32 0.0, %v2105
        %2107 = vmatmul.f32.gmra.mxu0 %v1708
        %v2108 = vpop.f32.mrf.mxu0
        %v2109 = vadd.f32 0.0, %v2108
        %2110 = vmatmul.f32.gmra.mxu0 %v1711
        %v2111 = vpop.f32.mrf.mxu0
        %v2112 = vadd.f32 0.0, %v2111
        %2113 = vmatmul.f32.gmra.mxu0 %v1714
        %v2114 = vpop.f32.mrf.mxu0
        %v2115 = vadd.f32 0.0, %v2114
        %2116 = vmatmul.f32.gmra.mxu0 %v1717
        %v2117 = vpop.f32.mrf.mxu0
        %v2118 = vadd.f32 0.0, %v2117
        %2119 = vmatmul.f32.gmra.mxu0 %v1720
        %v2120 = vpop.f32.mrf.mxu0
        %v2121 = vadd.f32 0.0, %v2120
        %2122 = vmatmul.f32.gmra.mxu0 %v1723
        %v2123 = vpop.f32.mrf.mxu0
        %v2124 = vadd.f32 0.0, %v2123
        %2125 = vmatmul.f32.gmra.mxu0 %v1726
        %v2126 = vpop.f32.mrf.mxu0
        %v2127 = vadd.f32 0.0, %v2126
        %2128 = vmatmul.f32.gmra.mxu0 %v1729
        %v2129 = vpop.f32.mrf.mxu0
        %v2130 = vadd.f32 0.0, %v2129
        %2131 = vmatmul.f32.gmra.mxu0 %v1732
        %v2132 = vpop.f32.mrf.mxu0
        %v2133 = vadd.f32 0.0, %v2132
        %2134 = vmatmul.f32.gmra.mxu0 %v1735
        %v2135 = vpop.f32.mrf.mxu0
        %v2136 = vadd.f32 0.0, %v2135
        %2137 = vmatmul.f32.gmra.mxu0 %v1738
        %v2138 = vpop.f32.mrf.mxu0
        %v2139 = vadd.f32 0.0, %v2138
        %2140 = vmatmul.f32.gmra.mxu0 %v1741
        %v2141 = vpop.f32.mrf.mxu0
        %v2142 = vadd.f32 0.0, %v2141
        %2143 = vmatmul.f32.gmra.mxu0 %v1744
        %v2144 = vpop.f32.mrf.mxu0
        %v2145 = vadd.f32 0.0, %v2144
        %2146 = vmatmul.f32.gmra.mxu0 %v1747
        %v2147 = vpop.f32.mrf.mxu0
        %v2148 = vadd.f32 0.0, %v2147
        %2149 = vmatmul.f32.gmra.mxu0 %v1750
        %v2150 = vpop.f32.mrf.mxu0
        %v2151 = vadd.f32 0.0, %v2150
        %2152 = vmatmul.f32.gmra.mxu0 %v1753
        %v2153 = vpop.f32.mrf.mxu0
        %v2154 = vadd.f32 0.0, %v2153
        %2155 = vmatmul.f32.gmra.mxu0 %v1756
        %v2156 = vpop.f32.mrf.mxu0
        %v2157 = vadd.f32 0.0, %v2156
        %2158 = vmatmul.f32.gmra.mxu0 %v1759
        %v2159 = vpop.f32.mrf.mxu0
        %v2160 = vadd.f32 0.0, %v2159
        %2161 = vmatmul.f32.gmra.mxu0 %v1762
        %v2162 = vpop.f32.mrf.mxu0
        %v2163 = vadd.f32 0.0, %v2162
        %2164 = vmatmul.f32.gmra.mxu0 %v1765
        %v2165 = vpop.f32.mrf.mxu0
        %v2166 = vadd.f32 0.0, %v2165
        %2167 = vmatmul.f32.gmra.mxu0 %v1768
        %v2168 = vpop.f32.mrf.mxu0
        %v2169 = vadd.f32 0.0, %v2168
        %2170 = vmatmul.f32.gmra.mxu0 %v1771
        %v2171 = vpop.f32.mrf.mxu0
        %v2172 = vadd.f32 0.0, %v2171
        %2173 = vmatmul.f32.gmra.mxu0 %v1774
        %v2174 = vpop.f32.mrf.mxu0
        %v2175 = vadd.f32 0.0, %v2174
        %2176 = vmatmul.f32.gmra.mxu0 %v1777
        %v2177 = vpop.f32.mrf.mxu0
        %v2178 = vadd.f32 0.0, %v2177
        %2179 = vmatmul.f32.gmra.mxu0 %v1780
        %v2180 = vpop.f32.mrf.mxu0
        %v2181 = vadd.f32 0.0, %v2180
        %2182 = vmatmul.f32.gmra.mxu0 %v1783
        %v2183 = vpop.f32.mrf.mxu0
        %v2184 = vadd.f32 0.0, %v2183
        %2185 = vmatmul.f32.gmra.mxu0 %v1786
        %v2186 = vpop.f32.mrf.mxu0
        %v2187 = vadd.f32 0.0, %v2186
        %2188 = vmatmul.f32.gmra.mxu0 %v1789
        %v2189 = vpop.f32.mrf.mxu0
        %v2190 = vadd.f32 0.0, %v2189
        %2191 = vmatmul.f32.gmra.mxu0 %v1792
        %v2192 = vpop.f32.mrf.mxu0
        %v2193 = vadd.f32 0.0, %v2192
        %2194 = vmatmul.f32.gmra.mxu0 %v1795
        %v2195 = vpop.f32.mrf.mxu0
        %v2196 = vadd.f32 0.0, %v2195
        %2197 = vmatmul.f32.gmra.mxu0 %v1798
        %v2198 = vpop.f32.mrf.mxu0
        %v2199 = vadd.f32 0.0, %v2198
        %2200 = vmatmul.f32.gmra.mxu0 %v1801
        %v2201 = vpop.f32.mrf.mxu0
        %v2202 = vadd.f32 0.0, %v2201
        %2203 = vmatmul.f32.gmra.mxu0 %v1804
        %v2204 = vpop.f32.mrf.mxu0
        %v2205 = vadd.f32 0.0, %v2204
        %2206 = vmatmul.f32.gmra.mxu0 %v1807
        %v2207 = vpop.f32.mrf.mxu0
        %v2208 = vadd.f32 0.0, %v2207
        %2209 = vmatmul.f32.gmra.mxu0 %v1810
        %v2210 = vpop.f32.mrf.mxu0
        %v2211 = vadd.f32 0.0, %v2210
        %2212 = vmatmul.f32.gmra.mxu0 %v1813
        %v2213 = vpop.f32.mrf.mxu0
        %v2214 = vadd.f32 0.0, %v2213
        %2215 = vmatmul.f32.gmra.mxu0 %v1816
        %v2216 = vpop.f32.mrf.mxu0
        %v2217 = vadd.f32 0.0, %v2216
        %2218 = vmatmul.f32.gmra.mxu0 %v1819
        %v2219 = vpop.f32.mrf.mxu0
        %v2220 = vadd.f32 0.0, %v2219
        %2221 = vmatmul.f32.gmra.mxu0 %v1822
        %v2222 = vpop.f32.mrf.mxu0
        %v2223 = vadd.f32 0.0, %v2222
        %2224 = vmatmul.f32.gmra.mxu0 %v1825
        %v2225 = vpop.f32.mrf.mxu0
        %v2226 = vadd.f32 0.0, %v2225
        %2227 = vmatmul.f32.gmra.mxu0 %v1828
        %v2228 = vpop.f32.mrf.mxu0
        %v2229 = vadd.f32 0.0, %v2228
        %2230 = vmatmul.f32.gmra.mxu0 %v1831
        %v2231 = vpop.f32.mrf.mxu0
        %v2232 = vadd.f32 0.0, %v2231
        %2233 = vdwg.mxu0
        %v2234 = vld [vmem:[%s374] sm:$0xff]
        %v2235 = vld [vmem:[%s374 + $0x8] sm:$0xff]
        %v2236 = vld [vmem:[%s374 + $0x10] sm:$0xff]
        %v2237 = vld [vmem:[%s374 + $0x18] sm:$0xff]
        %v2238 = vld [vmem:[%s374 + $0x20] sm:$0xff]
        %v2239 = vld [vmem:[%s374 + $0x28] sm:$0xff]
        %v2240 = vld [vmem:[%s374 + $0x30] sm:$0xff]
        %v2241 = vld [vmem:[%s374 + $0x38] sm:$0xff]
        %v2242 = vld [vmem:[%s374 + $0x40] sm:$0xff]
        %v2243 = vld [vmem:[%s374 + $0x48] sm:$0xff]
        %v2244 = vld [vmem:[%s374 + $0x50] sm:$0xff]
        %v2245 = vld [vmem:[%s374 + $0x58] sm:$0xff]
        %v2246 = vld [vmem:[%s374 + $0x60] sm:$0xff]
        %v2247 = vld [vmem:[%s374 + $0x68] sm:$0xff]
        %v2248 = vld [vmem:[%s374 + $0x70] sm:$0xff]
        %v2249 = vld [vmem:[%s374 + $0x78] sm:$0xff]
        %v2250 = vld [vmem:[%s374 + $0x80] sm:$0xff]
        %v2251 = vld [vmem:[%s374 + $0x88] sm:$0xff]
        %v2252 = vld [vmem:[%s374 + $0x90] sm:$0xff]
        %v2253 = vld [vmem:[%s374 + $0x98] sm:$0xff]
        %v2254 = vld [vmem:[%s374 + $0xa0] sm:$0xff]
        %v2255 = vld [vmem:[%s374 + $0xa8] sm:$0xff]
        %v2256 = vld [vmem:[%s374 + $0xb0] sm:$0xff]
        %v2257 = vld [vmem:[%s374 + $0xb8] sm:$0xff]
        %v2258 = vld [vmem:[%s374 + $0xc0] sm:$0xff]
        %v2259 = vld [vmem:[%s374 + $0xc8] sm:$0xff]
        %v2260 = vld [vmem:[%s374 + $0xd0] sm:$0xff]
        %v2261 = vld [vmem:[%s374 + $0xd8] sm:$0xff]
        %v2262 = vld [vmem:[%s374 + $0xe0] sm:$0xff]
        %v2263 = vld [vmem:[%s374 + $0xe8] sm:$0xff]
        %v2264 = vld [vmem:[%s374 + $0xf0] sm:$0xff]
        %v2265 = vld [vmem:[%s374 + $0xf8] sm:$0xff]
        %v2266 = vld [vmem:[%s374 + $0x100] sm:$0xff]
        %v2267 = vld [vmem:[%s374 + $0x108] sm:$0xff]
        %v2268 = vld [vmem:[%s374 + $0x110] sm:$0xff]
        %v2269 = vld [vmem:[%s374 + $0x118] sm:$0xff]
        %v2270 = vld [vmem:[%s374 + $0x120] sm:$0xff]
        %v2271 = vld [vmem:[%s374 + $0x128] sm:$0xff]
        %v2272 = vld [vmem:[%s374 + $0x130] sm:$0xff]
        %v2273 = vld [vmem:[%s374 + $0x138] sm:$0xff]
        %v2274 = vld [vmem:[%s374 + $0x140] sm:$0xff]
        %v2275 = vld [vmem:[%s374 + $0x148] sm:$0xff]
        %v2276 = vld [vmem:[%s374 + $0x150] sm:$0xff]
        %v2277 = vld [vmem:[%s374 + $0x158] sm:$0xff]
        %v2278 = vld [vmem:[%s374 + $0x160] sm:$0xff]
        %v2279 = vld [vmem:[%s374 + $0x168] sm:$0xff]
        %v2280 = vld [vmem:[%s374 + $0x170] sm:$0xff]
        %v2281 = vld [vmem:[%s374 + $0x178] sm:$0xff]
        %v2282 = vld [vmem:[%s374 + $0x180] sm:$0xff]
        %v2283 = vld [vmem:[%s374 + $0x188] sm:$0xff]
        %v2284 = vld [vmem:[%s374 + $0x190] sm:$0xff]
        %v2285 = vld [vmem:[%s374 + $0x198] sm:$0xff]
        %v2286 = vld [vmem:[%s374 + $0x1a0] sm:$0xff]
        %v2287 = vld [vmem:[%s374 + $0x1a8] sm:$0xff]
        %v2288 = vld [vmem:[%s374 + $0x1b0] sm:$0xff]
        %v2289 = vld [vmem:[%s374 + $0x1b8] sm:$0xff]
        %v2290 = vld [vmem:[%s374 + $0x1c0] sm:$0xff]
        %v2291 = vld [vmem:[%s374 + $0x1c8] sm:$0xff]
        %v2292 = vld [vmem:[%s374 + $0x1d0] sm:$0xff]
        %v2293 = vld [vmem:[%s374 + $0x1d8] sm:$0xff]
        %v2294 = vld [vmem:[%s374 + $0x1e0] sm:$0xff]
        %v2295 = vld [vmem:[%s374 + $0x1e8] sm:$0xff]
        %v2296 = vld [vmem:[%s374 + $0x1f0] sm:$0xff]
        %v2297 = vld [vmem:[%s374 + $0x1f8] sm:$0xff]
        %v2298 = vld [vmem:[%s374 + $0x200] sm:$0xff]
        %v2299 = vld [vmem:[%s374 + $0x208] sm:$0xff]
        %v2300 = vld [vmem:[%s374 + $0x210] sm:$0xff]
        %v2301 = vld [vmem:[%s374 + $0x218] sm:$0xff]
        %v2302 = vld [vmem:[%s374 + $0x220] sm:$0xff]
        %v2303 = vld [vmem:[%s374 + $0x228] sm:$0xff]
        %v2304 = vld [vmem:[%s374 + $0x230] sm:$0xff]
        %v2305 = vld [vmem:[%s374 + $0x238] sm:$0xff]
        %v2306 = vld [vmem:[%s374 + $0x240] sm:$0xff]
        %v2307 = vld [vmem:[%s374 + $0x248] sm:$0xff]
        %v2308 = vld [vmem:[%s374 + $0x250] sm:$0xff]
        %v2309 = vld [vmem:[%s374 + $0x258] sm:$0xff]
        %v2310 = vld [vmem:[%s374 + $0x260] sm:$0xff]
        %v2311 = vld [vmem:[%s374 + $0x268] sm:$0xff]
        %v2312 = vld [vmem:[%s374 + $0x270] sm:$0xff]
        %v2313 = vld [vmem:[%s374 + $0x278] sm:$0xff]
        %v2314 = vld [vmem:[%s374 + $0x280] sm:$0xff]
        %v2315 = vld [vmem:[%s374 + $0x288] sm:$0xff]
        %v2316 = vld [vmem:[%s374 + $0x290] sm:$0xff]
        %v2317 = vld [vmem:[%s374 + $0x298] sm:$0xff]
        %v2318 = vld [vmem:[%s374 + $0x2a0] sm:$0xff]
        %v2319 = vld [vmem:[%s374 + $0x2a8] sm:$0xff]
        %v2320 = vld [vmem:[%s374 + $0x2b0] sm:$0xff]
        %v2321 = vld [vmem:[%s374 + $0x2b8] sm:$0xff]
        %v2322 = vld [vmem:[%s374 + $0x2c0] sm:$0xff]
        %v2323 = vld [vmem:[%s374 + $0x2c8] sm:$0xff]
        %v2324 = vld [vmem:[%s374 + $0x2d0] sm:$0xff]
        %v2325 = vld [vmem:[%s374 + $0x2d8] sm:$0xff]
        %v2326 = vld [vmem:[%s374 + $0x2e0] sm:$0xff]
        %v2327 = vld [vmem:[%s374 + $0x2e8] sm:$0xff]
        %v2328 = vld [vmem:[%s374 + $0x2f0] sm:$0xff]
        %v2329 = vld [vmem:[%s374 + $0x2f8] sm:$0xff]
        %v2330 = vld [vmem:[%s374 + $0x300] sm:$0xff]
        %v2331 = vld [vmem:[%s374 + $0x308] sm:$0xff]
        %v2332 = vld [vmem:[%s374 + $0x310] sm:$0xff]
        %v2333 = vld [vmem:[%s374 + $0x318] sm:$0xff]
        %v2334 = vld [vmem:[%s374 + $0x320] sm:$0xff]
        %v2335 = vld [vmem:[%s374 + $0x328] sm:$0xff]
        %v2336 = vld [vmem:[%s374 + $0x330] sm:$0xff]
        %v2337 = vld [vmem:[%s374 + $0x338] sm:$0xff]
        %v2338 = vld [vmem:[%s374 + $0x340] sm:$0xff]
        %v2339 = vld [vmem:[%s374 + $0x348] sm:$0xff]
        %v2340 = vld [vmem:[%s374 + $0x350] sm:$0xff]
        %v2341 = vld [vmem:[%s374 + $0x358] sm:$0xff]
        %v2342 = vld [vmem:[%s374 + $0x360] sm:$0xff]
        %v2343 = vld [vmem:[%s374 + $0x368] sm:$0xff]
        %v2344 = vld [vmem:[%s374 + $0x370] sm:$0xff]
        %v2345 = vld [vmem:[%s374 + $0x378] sm:$0xff]
        %v2346 = vld [vmem:[%s374 + $0x380] sm:$0xff]
        %v2347 = vld [vmem:[%s374 + $0x388] sm:$0xff]
        %v2348 = vld [vmem:[%s374 + $0x390] sm:$0xff]
        %v2349 = vld [vmem:[%s374 + $0x398] sm:$0xff]
        %v2350 = vld [vmem:[%s374 + $0x3a0] sm:$0xff]
        %v2351 = vld [vmem:[%s374 + $0x3a8] sm:$0xff]
        %v2352 = vld [vmem:[%s374 + $0x3b0] sm:$0xff]
        %v2353 = vld [vmem:[%s374 + $0x3b8] sm:$0xff]
        %v2354 = vld [vmem:[%s374 + $0x3c0] sm:$0xff]
        %v2355 = vld [vmem:[%s374 + $0x3c8] sm:$0xff]
        %v2356 = vld [vmem:[%s374 + $0x3d0] sm:$0xff]
        %v2357 = vld [vmem:[%s374 + $0x3d8] sm:$0xff]
        %v2358 = vld [vmem:[%s374 + $0x3e0] sm:$0xff]
        %v2359 = vld [vmem:[%s374 + $0x3e8] sm:$0xff]
        %v2360 = vld [vmem:[%s374 + $0x3f0] sm:$0xff]
        %v2361 = vld [vmem:[%s374 + $0x3f8] sm:$0xff]
        %v2363 = vsel %vm531, %v2234, 0
        %v2366 = vsel %vm531, %v2235, 0
        %v2369 = vsel %vm531, %v2236, 0
        %v2372 = vsel %vm531, %v2237, 0
        %v2375 = vsel %vm531, %v2238, 0
        %v2378 = vsel %vm531, %v2239, 0
        %v2381 = vsel %vm531, %v2240, 0
        %v2384 = vsel %vm531, %v2241, 0
        %v2387 = vsel %vm531, %v2242, 0
        %v2390 = vsel %vm531, %v2243, 0
        %v2393 = vsel %vm531, %v2244, 0
        %v2396 = vsel %vm531, %v2245, 0
        %v2399 = vsel %vm531, %v2246, 0
        %v2402 = vsel %vm531, %v2247, 0
        %v2405 = vsel %vm531, %v2248, 0
        %v2408 = vsel %vm531, %v2249, 0
        %v2411 = vsel %vm531, %v2250, 0
        %v2414 = vsel %vm531, %v2251, 0
        %v2417 = vsel %vm531, %v2252, 0
        %v2420 = vsel %vm531, %v2253, 0
        %v2423 = vsel %vm531, %v2254, 0
        %v2426 = vsel %vm531, %v2255, 0
        %v2429 = vsel %vm531, %v2256, 0
        %v2432 = vsel %vm531, %v2257, 0
        %v2435 = vsel %vm531, %v2258, 0
        %v2438 = vsel %vm531, %v2259, 0
        %v2441 = vsel %vm531, %v2260, 0
        %v2444 = vsel %vm531, %v2261, 0
        %v2447 = vsel %vm531, %v2262, 0
        %v2450 = vsel %vm531, %v2263, 0
        %v2453 = vsel %vm531, %v2264, 0
        %v2456 = vsel %vm531, %v2265, 0
        %v2459 = vsel %vm531, %v2266, 0
        %v2462 = vsel %vm531, %v2267, 0
        %v2465 = vsel %vm531, %v2268, 0
        %v2468 = vsel %vm531, %v2269, 0
        %v2471 = vsel %vm531, %v2270, 0
        %v2474 = vsel %vm531, %v2271, 0
        %v2477 = vsel %vm531, %v2272, 0
        %v2480 = vsel %vm531, %v2273, 0
        %v2483 = vsel %vm531, %v2274, 0
        %v2486 = vsel %vm531, %v2275, 0
        %v2489 = vsel %vm531, %v2276, 0
        %v2492 = vsel %vm531, %v2277, 0
        %v2495 = vsel %vm531, %v2278, 0
        %v2498 = vsel %vm531, %v2279, 0
        %v2501 = vsel %vm531, %v2280, 0
        %v2504 = vsel %vm531, %v2281, 0
        %v2507 = vsel %vm531, %v2282, 0
        %v2510 = vsel %vm531, %v2283, 0
        %v2513 = vsel %vm531, %v2284, 0
        %v2516 = vsel %vm531, %v2285, 0
        %v2519 = vsel %vm531, %v2286, 0
        %v2522 = vsel %vm531, %v2287, 0
        %v2525 = vsel %vm531, %v2288, 0
        %v2528 = vsel %vm531, %v2289, 0
        %v2531 = vsel %vm531, %v2290, 0
        %v2534 = vsel %vm531, %v2291, 0
        %v2537 = vsel %vm531, %v2292, 0
        %v2540 = vsel %vm531, %v2293, 0
        %v2543 = vsel %vm531, %v2294, 0
        %v2546 = vsel %vm531, %v2295, 0
        %v2549 = vsel %vm531, %v2296, 0
        %v2552 = vsel %vm531, %v2297, 0
        %v2555 = vsel %vm531, %v2298, 0
        %v2558 = vsel %vm531, %v2299, 0
        %v2561 = vsel %vm531, %v2300, 0
        %v2564 = vsel %vm531, %v2301, 0
        %v2567 = vsel %vm531, %v2302, 0
        %v2570 = vsel %vm531, %v2303, 0
        %v2573 = vsel %vm531, %v2304, 0
        %v2576 = vsel %vm531, %v2305, 0
        %v2579 = vsel %vm531, %v2306, 0
        %v2582 = vsel %vm531, %v2307, 0
        %v2585 = vsel %vm531, %v2308, 0
        %v2588 = vsel %vm531, %v2309, 0
        %v2591 = vsel %vm531, %v2310, 0
        %v2594 = vsel %vm531, %v2311, 0
        %v2597 = vsel %vm531, %v2312, 0
        %v2600 = vsel %vm531, %v2313, 0
        %v2603 = vsel %vm531, %v2314, 0
        %v2606 = vsel %vm531, %v2315, 0
        %v2609 = vsel %vm531, %v2316, 0
        %v2612 = vsel %vm531, %v2317, 0
        %v2615 = vsel %vm531, %v2318, 0
        %v2618 = vsel %vm531, %v2319, 0
        %v2621 = vsel %vm531, %v2320, 0
        %v2624 = vsel %vm531, %v2321, 0
        %v2627 = vsel %vm531, %v2322, 0
        %v2630 = vsel %vm531, %v2323, 0
        %v2633 = vsel %vm531, %v2324, 0
        %v2636 = vsel %vm531, %v2325, 0
        %v2639 = vsel %vm531, %v2326, 0
        %v2642 = vsel %vm531, %v2327, 0
        %v2645 = vsel %vm531, %v2328, 0
        %v2648 = vsel %vm531, %v2329, 0
        %v2651 = vsel %vm531, %v2330, 0
        %v2654 = vsel %vm531, %v2331, 0
        %v2657 = vsel %vm531, %v2332, 0
        %v2660 = vsel %vm531, %v2333, 0
        %v2663 = vsel %vm531, %v2334, 0
        %v2666 = vsel %vm531, %v2335, 0
        %v2669 = vsel %vm531, %v2336, 0
        %v2672 = vsel %vm531, %v2337, 0
        %v2675 = vsel %vm531, %v2338, 0
        %v2678 = vsel %vm531, %v2339, 0
        %v2681 = vsel %vm531, %v2340, 0
        %v2684 = vsel %vm531, %v2341, 0
        %v2687 = vsel %vm531, %v2342, 0
        %v2690 = vsel %vm531, %v2343, 0
        %v2693 = vsel %vm531, %v2344, 0
        %v2696 = vsel %vm531, %v2345, 0
        %v2699 = vsel %vm531, %v2346, 0
        %v2702 = vsel %vm531, %v2347, 0
        %v2705 = vsel %vm531, %v2348, 0
        %v2708 = vsel %vm531, %v2349, 0
        %v2711 = vsel %vm531, %v2350, 0
        %v2714 = vsel %vm531, %v2351, 0
        %v2717 = vsel %vm531, %v2352, 0
        %v2720 = vsel %vm531, %v2353, 0
        %v2723 = vsel %vm531, %v2354, 0
        %v2726 = vsel %vm531, %v2355, 0
        %v2729 = vsel %vm531, %v2356, 0
        %v2732 = vsel %vm531, %v2357, 0
        %v2735 = vsel %vm531, %v2358, 0
        %v2738 = vsel %vm531, %v2359, 0
        %v2741 = vsel %vm531, %v2360, 0
        %v2744 = vsel %vm531, %v2361, 0
        %2746 = vmatpush.msra.mxu0 0.0
        %2747 = vmatpush.msra.mxu0 0.0
        %2748 = vmatpush.msra.mxu0 0.0
        %2749 = vmatpush.msra.mxu0 0.0
        %2750 = vmatpush.msra.mxu0 0.0
        %2751 = vmatpush.msra.mxu0 0.0
        %2752 = vmatpush.msra.mxu0 0.0
        %2753 = vmatpush.msra.mxu0 0.0
        %2754 = vmatpush.msra.mxu0 0.0
        %2755 = vmatpush.msra.mxu0 0.0
        %2756 = vmatpush.msra.mxu0 0.0
        %2757 = vmatpush.msra.mxu0 0.0
        %2758 = vmatpush.msra.mxu0 %v918
        %2759 = vmatpush.msra.mxu0 %v401
        %2760 = vmatpush.msra.mxu0 %v400
        %2761 = vmatpush.msra.mxu0 %v399
        %2762 = vmatmul.f32.gmra.mxu0 %v2363
        %v2763 = vpop.f32.mrf.mxu0
        %v2764 = vadd.f32 0.0, %v2763
        %2765 = vmatmul.f32.gmra.mxu0 %v2366
        %v2766 = vpop.f32.mrf.mxu0
        %v2767 = vadd.f32 0.0, %v2766
        %2768 = vmatmul.f32.gmra.mxu0 %v2369
        %v2769 = vpop.f32.mrf.mxu0
        %v2770 = vadd.f32 0.0, %v2769
        %2771 = vmatmul.f32.gmra.mxu0 %v2372
        %v2772 = vpop.f32.mrf.mxu0
        %v2773 = vadd.f32 0.0, %v2772
        %2774 = vmatmul.f32.gmra.mxu0 %v2375
        %v2775 = vpop.f32.mrf.mxu0
        %v2776 = vadd.f32 0.0, %v2775
        %2777 = vmatmul.f32.gmra.mxu0 %v2378
        %v2778 = vpop.f32.mrf.mxu0
        %v2779 = vadd.f32 0.0, %v2778
        %2780 = vmatmul.f32.gmra.mxu0 %v2381
        %v2781 = vpop.f32.mrf.mxu0
        %v2782 = vadd.f32 0.0, %v2781
        %2783 = vmatmul.f32.gmra.mxu0 %v2384
        %v2784 = vpop.f32.mrf.mxu0
        %v2785 = vadd.f32 0.0, %v2784
        %2786 = vmatmul.f32.gmra.mxu0 %v2387
        %v2787 = vpop.f32.mrf.mxu0
        %v2788 = vadd.f32 0.0, %v2787
        %2789 = vmatmul.f32.gmra.mxu0 %v2390
        %v2790 = vpop.f32.mrf.mxu0
        %v2791 = vadd.f32 0.0, %v2790
        %2792 = vmatmul.f32.gmra.mxu0 %v2393
        %v2793 = vpop.f32.mrf.mxu0
        %v2794 = vadd.f32 0.0, %v2793
        %2795 = vmatmul.f32.gmra.mxu0 %v2396
        %v2796 = vpop.f32.mrf.mxu0
        %v2797 = vadd.f32 0.0, %v2796
        %2798 = vmatmul.f32.gmra.mxu0 %v2399
        %v2799 = vpop.f32.mrf.mxu0
        %v2800 = vadd.f32 0.0, %v2799
        %2801 = vmatmul.f32.gmra.mxu0 %v2402
        %v2802 = vpop.f32.mrf.mxu0
        %v2803 = vadd.f32 0.0, %v2802
        %2804 = vmatmul.f32.gmra.mxu0 %v2405
        %v2805 = vpop.f32.mrf.mxu0
        %v2806 = vadd.f32 0.0, %v2805
        %2807 = vmatmul.f32.gmra.mxu0 %v2408
        %v2808 = vpop.f32.mrf.mxu0
        %v2809 = vadd.f32 0.0, %v2808
        %2810 = vmatmul.f32.gmra.mxu0 %v2411
        %v2811 = vpop.f32.mrf.mxu0
        %v2812 = vadd.f32 0.0, %v2811
        %2813 = vmatmul.f32.gmra.mxu0 %v2414
        %v2814 = vpop.f32.mrf.mxu0
        %v2815 = vadd.f32 0.0, %v2814
        %2816 = vmatmul.f32.gmra.mxu0 %v2417
        %v2817 = vpop.f32.mrf.mxu0
        %v2818 = vadd.f32 0.0, %v2817
        %2819 = vmatmul.f32.gmra.mxu0 %v2420
        %v2820 = vpop.f32.mrf.mxu0
        %v2821 = vadd.f32 0.0, %v2820
        %2822 = vmatmul.f32.gmra.mxu0 %v2423
        %v2823 = vpop.f32.mrf.mxu0
        %v2824 = vadd.f32 0.0, %v2823
        %2825 = vmatmul.f32.gmra.mxu0 %v2426
        %v2826 = vpop.f32.mrf.mxu0
        %v2827 = vadd.f32 0.0, %v2826
        %2828 = vmatmul.f32.gmra.mxu0 %v2429
        %v2829 = vpop.f32.mrf.mxu0
        %v2830 = vadd.f32 0.0, %v2829
        %2831 = vmatmul.f32.gmra.mxu0 %v2432
        %v2832 = vpop.f32.mrf.mxu0
        %v2833 = vadd.f32 0.0, %v2832
        %2834 = vmatmul.f32.gmra.mxu0 %v2435
        %v2835 = vpop.f32.mrf.mxu0
        %v2836 = vadd.f32 0.0, %v2835
        %2837 = vmatmul.f32.gmra.mxu0 %v2438
        %v2838 = vpop.f32.mrf.mxu0
        %v2839 = vadd.f32 0.0, %v2838
        %2840 = vmatmul.f32.gmra.mxu0 %v2441
        %v2841 = vpop.f32.mrf.mxu0
        %v2842 = vadd.f32 0.0, %v2841
        %2843 = vmatmul.f32.gmra.mxu0 %v2444
        %v2844 = vpop.f32.mrf.mxu0
        %v2845 = vadd.f32 0.0, %v2844
        %2846 = vmatmul.f32.gmra.mxu0 %v2447
        %v2847 = vpop.f32.mrf.mxu0
        %v2848 = vadd.f32 0.0, %v2847
        %2849 = vmatmul.f32.gmra.mxu0 %v2450
        %v2850 = vpop.f32.mrf.mxu0
        %v2851 = vadd.f32 0.0, %v2850
        %2852 = vmatmul.f32.gmra.mxu0 %v2453
        %v2853 = vpop.f32.mrf.mxu0
        %v2854 = vadd.f32 0.0, %v2853
        %2855 = vmatmul.f32.gmra.mxu0 %v2456
        %v2856 = vpop.f32.mrf.mxu0
        %v2857 = vadd.f32 0.0, %v2856
        %2858 = vmatmul.f32.gmra.mxu0 %v2459
        %v2859 = vpop.f32.mrf.mxu0
        %v2860 = vadd.f32 0.0, %v2859
        %2861 = vmatmul.f32.gmra.mxu0 %v2462
        %v2862 = vpop.f32.mrf.mxu0
        %v2863 = vadd.f32 0.0, %v2862
        %2864 = vmatmul.f32.gmra.mxu0 %v2465
        %v2865 = vpop.f32.mrf.mxu0
        %v2866 = vadd.f32 0.0, %v2865
        %2867 = vmatmul.f32.gmra.mxu0 %v2468
        %v2868 = vpop.f32.mrf.mxu0
        %v2869 = vadd.f32 0.0, %v2868
        %2870 = vmatmul.f32.gmra.mxu0 %v2471
        %v2871 = vpop.f32.mrf.mxu0
        %v2872 = vadd.f32 0.0, %v2871
        %2873 = vmatmul.f32.gmra.mxu0 %v2474
        %v2874 = vpop.f32.mrf.mxu0
        %v2875 = vadd.f32 0.0, %v2874
        %2876 = vmatmul.f32.gmra.mxu0 %v2477
        %v2877 = vpop.f32.mrf.mxu0
        %v2878 = vadd.f32 0.0, %v2877
        %2879 = vmatmul.f32.gmra.mxu0 %v2480
        %v2880 = vpop.f32.mrf.mxu0
        %v2881 = vadd.f32 0.0, %v2880
        %2882 = vmatmul.f32.gmra.mxu0 %v2483
        %v2883 = vpop.f32.mrf.mxu0
        %v2884 = vadd.f32 0.0, %v2883
        %2885 = vmatmul.f32.gmra.mxu0 %v2486
        %v2886 = vpop.f32.mrf.mxu0
        %v2887 = vadd.f32 0.0, %v2886
        %2888 = vmatmul.f32.gmra.mxu0 %v2489
        %v2889 = vpop.f32.mrf.mxu0
        %v2890 = vadd.f32 0.0, %v2889
        %2891 = vmatmul.f32.gmra.mxu0 %v2492
        %v2892 = vpop.f32.mrf.mxu0
        %v2893 = vadd.f32 0.0, %v2892
        %2894 = vmatmul.f32.gmra.mxu0 %v2495
        %v2895 = vpop.f32.mrf.mxu0
        %v2896 = vadd.f32 0.0, %v2895
        %2897 = vmatmul.f32.gmra.mxu0 %v2498
        %v2898 = vpop.f32.mrf.mxu0
        %v2899 = vadd.f32 0.0, %v2898
        %2900 = vmatmul.f32.gmra.mxu0 %v2501
        %v2901 = vpop.f32.mrf.mxu0
        %v2902 = vadd.f32 0.0, %v2901
        %2903 = vmatmul.f32.gmra.mxu0 %v2504
        %v2904 = vpop.f32.mrf.mxu0
        %v2905 = vadd.f32 0.0, %v2904
        %2906 = vmatmul.f32.gmra.mxu0 %v2507
        %v2907 = vpop.f32.mrf.mxu0
        %v2908 = vadd.f32 0.0, %v2907
        %2909 = vmatmul.f32.gmra.mxu0 %v2510
        %v2910 = vpop.f32.mrf.mxu0
        %v2911 = vadd.f32 0.0, %v2910
        %2912 = vmatmul.f32.gmra.mxu0 %v2513
        %v2913 = vpop.f32.mrf.mxu0
        %v2914 = vadd.f32 0.0, %v2913
        %2915 = vmatmul.f32.gmra.mxu0 %v2516
        %v2916 = vpop.f32.mrf.mxu0
        %v2917 = vadd.f32 0.0, %v2916
        %2918 = vmatmul.f32.gmra.mxu0 %v2519
        %v2919 = vpop.f32.mrf.mxu0
        %v2920 = vadd.f32 0.0, %v2919
        %2921 = vmatmul.f32.gmra.mxu0 %v2522
        %v2922 = vpop.f32.mrf.mxu0
        %v2923 = vadd.f32 0.0, %v2922
        %2924 = vmatmul.f32.gmra.mxu0 %v2525
        %v2925 = vpop.f32.mrf.mxu0
        %v2926 = vadd.f32 0.0, %v2925
        %2927 = vmatmul.f32.gmra.mxu0 %v2528
        %v2928 = vpop.f32.mrf.mxu0
        %v2929 = vadd.f32 0.0, %v2928
        %2930 = vmatmul.f32.gmra.mxu0 %v2531
        %v2931 = vpop.f32.mrf.mxu0
        %v2932 = vadd.f32 0.0, %v2931
        %2933 = vmatmul.f32.gmra.mxu0 %v2534
        %v2934 = vpop.f32.mrf.mxu0
        %v2935 = vadd.f32 0.0, %v2934
        %2936 = vmatmul.f32.gmra.mxu0 %v2537
        %v2937 = vpop.f32.mrf.mxu0
        %v2938 = vadd.f32 0.0, %v2937
        %2939 = vmatmul.f32.gmra.mxu0 %v2540
        %v2940 = vpop.f32.mrf.mxu0
        %v2941 = vadd.f32 0.0, %v2940
        %2942 = vmatmul.f32.gmra.mxu0 %v2543
        %v2943 = vpop.f32.mrf.mxu0
        %v2944 = vadd.f32 0.0, %v2943
        %2945 = vmatmul.f32.gmra.mxu0 %v2546
        %v2946 = vpop.f32.mrf.mxu0
        %v2947 = vadd.f32 0.0, %v2946
        %2948 = vmatmul.f32.gmra.mxu0 %v2549
        %v2949 = vpop.f32.mrf.mxu0
        %v2950 = vadd.f32 0.0, %v2949
        %2951 = vmatmul.f32.gmra.mxu0 %v2552
        %v2952 = vpop.f32.mrf.mxu0
        %v2953 = vadd.f32 0.0, %v2952
        %2954 = vmatmul.f32.gmra.mxu0 %v2555
        %v2955 = vpop.f32.mrf.mxu0
        %v2956 = vadd.f32 0.0, %v2955
        %2957 = vmatmul.f32.gmra.mxu0 %v2558
        %v2958 = vpop.f32.mrf.mxu0
        %v2959 = vadd.f32 0.0, %v2958
        %2960 = vmatmul.f32.gmra.mxu0 %v2561
        %v2961 = vpop.f32.mrf.mxu0
        %v2962 = vadd.f32 0.0, %v2961
        %2963 = vmatmul.f32.gmra.mxu0 %v2564
        %v2964 = vpop.f32.mrf.mxu0
        %v2965 = vadd.f32 0.0, %v2964
        %2966 = vmatmul.f32.gmra.mxu0 %v2567
        %v2967 = vpop.f32.mrf.mxu0
        %v2968 = vadd.f32 0.0, %v2967
        %2969 = vmatmul.f32.gmra.mxu0 %v2570
        %v2970 = vpop.f32.mrf.mxu0
        %v2971 = vadd.f32 0.0, %v2970
        %2972 = vmatmul.f32.gmra.mxu0 %v2573
        %v2973 = vpop.f32.mrf.mxu0
        %v2974 = vadd.f32 0.0, %v2973
        %2975 = vmatmul.f32.gmra.mxu0 %v2576
        %v2976 = vpop.f32.mrf.mxu0
        %v2977 = vadd.f32 0.0, %v2976
        %2978 = vmatmul.f32.gmra.mxu0 %v2579
        %v2979 = vpop.f32.mrf.mxu0
        %v2980 = vadd.f32 0.0, %v2979
        %2981 = vmatmul.f32.gmra.mxu0 %v2582
        %v2982 = vpop.f32.mrf.mxu0
        %v2983 = vadd.f32 0.0, %v2982
        %2984 = vmatmul.f32.gmra.mxu0 %v2585
        %v2985 = vpop.f32.mrf.mxu0
        %v2986 = vadd.f32 0.0, %v2985
        %2987 = vmatmul.f32.gmra.mxu0 %v2588
        %v2988 = vpop.f32.mrf.mxu0
        %v2989 = vadd.f32 0.0, %v2988
        %2990 = vmatmul.f32.gmra.mxu0 %v2591
        %v2991 = vpop.f32.mrf.mxu0
        %v2992 = vadd.f32 0.0, %v2991
        %2993 = vmatmul.f32.gmra.mxu0 %v2594
        %v2994 = vpop.f32.mrf.mxu0
        %v2995 = vadd.f32 0.0, %v2994
        %2996 = vmatmul.f32.gmra.mxu0 %v2597
        %v2997 = vpop.f32.mrf.mxu0
        %v2998 = vadd.f32 0.0, %v2997
        %2999 = vmatmul.f32.gmra.mxu0 %v2600
        %v3000 = vpop.f32.mrf.mxu0
        %v3001 = vadd.f32 0.0, %v3000
        %3002 = vmatmul.f32.gmra.mxu0 %v2603
        %v3003 = vpop.f32.mrf.mxu0
        %v3004 = vadd.f32 0.0, %v3003
        %3005 = vmatmul.f32.gmra.mxu0 %v2606
        %v3006 = vpop.f32.mrf.mxu0
        %v3007 = vadd.f32 0.0, %v3006
        %3008 = vmatmul.f32.gmra.mxu0 %v2609
        %v3009 = vpop.f32.mrf.mxu0
        %v3010 = vadd.f32 0.0, %v3009
        %3011 = vmatmul.f32.gmra.mxu0 %v2612
        %v3012 = vpop.f32.mrf.mxu0
        %v3013 = vadd.f32 0.0, %v3012
        %3014 = vmatmul.f32.gmra.mxu0 %v2615
        %v3015 = vpop.f32.mrf.mxu0
        %v3016 = vadd.f32 0.0, %v3015
        %3017 = vmatmul.f32.gmra.mxu0 %v2618
        %v3018 = vpop.f32.mrf.mxu0
        %v3019 = vadd.f32 0.0, %v3018
        %3020 = vmatmul.f32.gmra.mxu0 %v2621
        %v3021 = vpop.f32.mrf.mxu0
        %v3022 = vadd.f32 0.0, %v3021
        %3023 = vmatmul.f32.gmra.mxu0 %v2624
        %v3024 = vpop.f32.mrf.mxu0
        %v3025 = vadd.f32 0.0, %v3024
        %3026 = vmatmul.f32.gmra.mxu0 %v2627
        %v3027 = vpop.f32.mrf.mxu0
        %v3028 = vadd.f32 0.0, %v3027
        %3029 = vmatmul.f32.gmra.mxu0 %v2630
        %v3030 = vpop.f32.mrf.mxu0
        %v3031 = vadd.f32 0.0, %v3030
        %3032 = vmatmul.f32.gmra.mxu0 %v2633
        %v3033 = vpop.f32.mrf.mxu0
        %v3034 = vadd.f32 0.0, %v3033
        %3035 = vmatmul.f32.gmra.mxu0 %v2636
        %v3036 = vpop.f32.mrf.mxu0
        %v3037 = vadd.f32 0.0, %v3036
        %3038 = vmatmul.f32.gmra.mxu0 %v2639
        %v3039 = vpop.f32.mrf.mxu0
        %v3040 = vadd.f32 0.0, %v3039
        %3041 = vmatmul.f32.gmra.mxu0 %v2642
        %v3042 = vpop.f32.mrf.mxu0
        %v3043 = vadd.f32 0.0, %v3042
        %3044 = vmatmul.f32.gmra.mxu0 %v2645
        %v3045 = vpop.f32.mrf.mxu0
        %v3046 = vadd.f32 0.0, %v3045
        %3047 = vmatmul.f32.gmra.mxu0 %v2648
        %v3048 = vpop.f32.mrf.mxu0
        %v3049 = vadd.f32 0.0, %v3048
        %3050 = vmatmul.f32.gmra.mxu0 %v2651
        %v3051 = vpop.f32.mrf.mxu0
        %v3052 = vadd.f32 0.0, %v3051
        %3053 = vmatmul.f32.gmra.mxu0 %v2654
        %v3054 = vpop.f32.mrf.mxu0
        %v3055 = vadd.f32 0.0, %v3054
        %3056 = vmatmul.f32.gmra.mxu0 %v2657
        %v3057 = vpop.f32.mrf.mxu0
        %v3058 = vadd.f32 0.0, %v3057
        %3059 = vmatmul.f32.gmra.mxu0 %v2660
        %v3060 = vpop.f32.mrf.mxu0
        %v3061 = vadd.f32 0.0, %v3060
        %3062 = vmatmul.f32.gmra.mxu0 %v2663
        %v3063 = vpop.f32.mrf.mxu0
        %v3064 = vadd.f32 0.0, %v3063
        %3065 = vmatmul.f32.gmra.mxu0 %v2666
        %v3066 = vpop.f32.mrf.mxu0
        %v3067 = vadd.f32 0.0, %v3066
        %3068 = vmatmul.f32.gmra.mxu0 %v2669
        %v3069 = vpop.f32.mrf.mxu0
        %v3070 = vadd.f32 0.0, %v3069
        %3071 = vmatmul.f32.gmra.mxu0 %v2672
        %v3072 = vpop.f32.mrf.mxu0
        %v3073 = vadd.f32 0.0, %v3072
        %3074 = vmatmul.f32.gmra.mxu0 %v2675
        %v3075 = vpop.f32.mrf.mxu0
        %v3076 = vadd.f32 0.0, %v3075
        %3077 = vmatmul.f32.gmra.mxu0 %v2678
        %v3078 = vpop.f32.mrf.mxu0
        %v3079 = vadd.f32 0.0, %v3078
        %3080 = vmatmul.f32.gmra.mxu0 %v2681
        %v3081 = vpop.f32.mrf.mxu0
        %v3082 = vadd.f32 0.0, %v3081
        %3083 = vmatmul.f32.gmra.mxu0 %v2684
        %v3084 = vpop.f32.mrf.mxu0
        %v3085 = vadd.f32 0.0, %v3084
        %3086 = vmatmul.f32.gmra.mxu0 %v2687
        %v3087 = vpop.f32.mrf.mxu0
        %v3088 = vadd.f32 0.0, %v3087
        %3089 = vmatmul.f32.gmra.mxu0 %v2690
        %v3090 = vpop.f32.mrf.mxu0
        %v3091 = vadd.f32 0.0, %v3090
        %3092 = vmatmul.f32.gmra.mxu0 %v2693
        %v3093 = vpop.f32.mrf.mxu0
        %v3094 = vadd.f32 0.0, %v3093
        %3095 = vmatmul.f32.gmra.mxu0 %v2696
        %v3096 = vpop.f32.mrf.mxu0
        %v3097 = vadd.f32 0.0, %v3096
        %3098 = vmatmul.f32.gmra.mxu0 %v2699
        %v3099 = vpop.f32.mrf.mxu0
        %v3100 = vadd.f32 0.0, %v3099
        %3101 = vmatmul.f32.gmra.mxu0 %v2702
        %v3102 = vpop.f32.mrf.mxu0
        %v3103 = vadd.f32 0.0, %v3102
        %3104 = vmatmul.f32.gmra.mxu0 %v2705
        %v3105 = vpop.f32.mrf.mxu0
        %v3106 = vadd.f32 0.0, %v3105
        %3107 = vmatmul.f32.gmra.mxu0 %v2708
        %v3108 = vpop.f32.mrf.mxu0
        %v3109 = vadd.f32 0.0, %v3108
        %3110 = vmatmul.f32.gmra.mxu0 %v2711
        %v3111 = vpop.f32.mrf.mxu0
        %v3112 = vadd.f32 0.0, %v3111
        %3113 = vmatmul.f32.gmra.mxu0 %v2714
        %v3114 = vpop.f32.mrf.mxu0
        %v3115 = vadd.f32 0.0, %v3114
        %3116 = vmatmul.f32.gmra.mxu0 %v2717
        %v3117 = vpop.f32.mrf.mxu0
        %v3118 = vadd.f32 0.0, %v3117
        %3119 = vmatmul.f32.gmra.mxu0 %v2720
        %v3120 = vpop.f32.mrf.mxu0
        %v3121 = vadd.f32 0.0, %v3120
        %3122 = vmatmul.f32.gmra.mxu0 %v2723
        %v3123 = vpop.f32.mrf.mxu0
        %v3124 = vadd.f32 0.0, %v3123
        %3125 = vmatmul.f32.gmra.mxu0 %v2726
        %v3126 = vpop.f32.mrf.mxu0
        %v3127 = vadd.f32 0.0, %v3126
        %3128 = vmatmul.f32.gmra.mxu0 %v2729
        %v3129 = vpop.f32.mrf.mxu0
        %v3130 = vadd.f32 0.0, %v3129
        %3131 = vmatmul.f32.gmra.mxu0 %v2732
        %v3132 = vpop.f32.mrf.mxu0
        %v3133 = vadd.f32 0.0, %v3132
        %3134 = vmatmul.f32.gmra.mxu0 %v2735
        %v3135 = vpop.f32.mrf.mxu0
        %v3136 = vadd.f32 0.0, %v3135
        %3137 = vmatmul.f32.gmra.mxu0 %v2738
        %v3138 = vpop.f32.mrf.mxu0
        %v3139 = vadd.f32 0.0, %v3138
        %3140 = vmatmul.f32.gmra.mxu0 %v2741
        %v3141 = vpop.f32.mrf.mxu0
        %v3142 = vadd.f32 0.0, %v3141
        %3143 = vmatmul.f32.gmra.mxu0 %v2744
        %v3144 = vpop.f32.mrf.mxu0
        %v3145 = vadd.f32 0.0, %v3144
        %3146 = vdwg.mxu0
        %v3147 = vld [vmem:[%s388] sm:$0xff]
        %v3148 = vld [vmem:[%s388 + $0x8] sm:$0xff]
        %v3149 = vld [vmem:[%s388 + $0x10] sm:$0xff]
        %v3150 = vld [vmem:[%s388 + $0x18] sm:$0xff]
        %v3151 = vld [vmem:[%s388 + $0x20] sm:$0xff]
        %v3152 = vld [vmem:[%s388 + $0x28] sm:$0xff]
        %v3153 = vld [vmem:[%s388 + $0x30] sm:$0xff]
        %v3154 = vld [vmem:[%s388 + $0x38] sm:$0xff]
        %v3155 = vld [vmem:[%s388 + $0x40] sm:$0xff]
        %v3156 = vld [vmem:[%s388 + $0x48] sm:$0xff]
        %v3157 = vld [vmem:[%s388 + $0x50] sm:$0xff]
        %v3158 = vld [vmem:[%s388 + $0x58] sm:$0xff]
        %v3159 = vld [vmem:[%s388 + $0x60] sm:$0xff]
        %v3160 = vld [vmem:[%s388 + $0x68] sm:$0xff]
        %v3161 = vld [vmem:[%s388 + $0x70] sm:$0xff]
        %v3162 = vld [vmem:[%s388 + $0x78] sm:$0xff]
        %v3163 = vld [vmem:[%s388 + $0x80] sm:$0xff]
        %v3164 = vld [vmem:[%s388 + $0x88] sm:$0xff]
        %v3165 = vld [vmem:[%s388 + $0x90] sm:$0xff]
        %v3166 = vld [vmem:[%s388 + $0x98] sm:$0xff]
        %v3167 = vld [vmem:[%s388 + $0xa0] sm:$0xff]
        %v3168 = vld [vmem:[%s388 + $0xa8] sm:$0xff]
        %v3169 = vld [vmem:[%s388 + $0xb0] sm:$0xff]
        %v3170 = vld [vmem:[%s388 + $0xb8] sm:$0xff]
        %v3171 = vld [vmem:[%s388 + $0xc0] sm:$0xff]
        %v3172 = vld [vmem:[%s388 + $0xc8] sm:$0xff]
        %v3173 = vld [vmem:[%s388 + $0xd0] sm:$0xff]
        %v3174 = vld [vmem:[%s388 + $0xd8] sm:$0xff]
        %v3175 = vld [vmem:[%s388 + $0xe0] sm:$0xff]
        %v3176 = vld [vmem:[%s388 + $0xe8] sm:$0xff]
        %v3177 = vld [vmem:[%s388 + $0xf0] sm:$0xff]
        %v3178 = vld [vmem:[%s388 + $0xf8] sm:$0xff]
        %v3179 = vld [vmem:[%s388 + $0x100] sm:$0xff]
        %v3180 = vld [vmem:[%s388 + $0x108] sm:$0xff]
        %v3181 = vld [vmem:[%s388 + $0x110] sm:$0xff]
        %v3182 = vld [vmem:[%s388 + $0x118] sm:$0xff]
        %v3183 = vld [vmem:[%s388 + $0x120] sm:$0xff]
        %v3184 = vld [vmem:[%s388 + $0x128] sm:$0xff]
        %v3185 = vld [vmem:[%s388 + $0x130] sm:$0xff]
        %v3186 = vld [vmem:[%s388 + $0x138] sm:$0xff]
        %v3187 = vld [vmem:[%s388 + $0x140] sm:$0xff]
        %v3188 = vld [vmem:[%s388 + $0x148] sm:$0xff]
        %v3189 = vld [vmem:[%s388 + $0x150] sm:$0xff]
        %v3190 = vld [vmem:[%s388 + $0x158] sm:$0xff]
        %v3191 = vld [vmem:[%s388 + $0x160] sm:$0xff]
        %v3192 = vld [vmem:[%s388 + $0x168] sm:$0xff]
        %v3193 = vld [vmem:[%s388 + $0x170] sm:$0xff]
        %v3194 = vld [vmem:[%s388 + $0x178] sm:$0xff]
        %v3195 = vld [vmem:[%s388 + $0x180] sm:$0xff]
        %v3196 = vld [vmem:[%s388 + $0x188] sm:$0xff]
        %v3197 = vld [vmem:[%s388 + $0x190] sm:$0xff]
        %v3198 = vld [vmem:[%s388 + $0x198] sm:$0xff]
        %v3199 = vld [vmem:[%s388 + $0x1a0] sm:$0xff]
        %v3200 = vld [vmem:[%s388 + $0x1a8] sm:$0xff]
        %v3201 = vld [vmem:[%s388 + $0x1b0] sm:$0xff]
        %v3202 = vld [vmem:[%s388 + $0x1b8] sm:$0xff]
        %v3203 = vld [vmem:[%s388 + $0x1c0] sm:$0xff]
        %v3204 = vld [vmem:[%s388 + $0x1c8] sm:$0xff]
        %v3205 = vld [vmem:[%s388 + $0x1d0] sm:$0xff]
        %v3206 = vld [vmem:[%s388 + $0x1d8] sm:$0xff]
        %v3207 = vld [vmem:[%s388 + $0x1e0] sm:$0xff]
        %v3208 = vld [vmem:[%s388 + $0x1e8] sm:$0xff]
        %v3209 = vld [vmem:[%s388 + $0x1f0] sm:$0xff]
        %v3210 = vld [vmem:[%s388 + $0x1f8] sm:$0xff]
        %v3211 = vld [vmem:[%s388 + $0x200] sm:$0xff]
        %v3212 = vld [vmem:[%s388 + $0x208] sm:$0xff]
        %v3213 = vld [vmem:[%s388 + $0x210] sm:$0xff]
        %v3214 = vld [vmem:[%s388 + $0x218] sm:$0xff]
        %v3215 = vld [vmem:[%s388 + $0x220] sm:$0xff]
        %v3216 = vld [vmem:[%s388 + $0x228] sm:$0xff]
        %v3217 = vld [vmem:[%s388 + $0x230] sm:$0xff]
        %v3218 = vld [vmem:[%s388 + $0x238] sm:$0xff]
        %v3219 = vld [vmem:[%s388 + $0x240] sm:$0xff]
        %v3220 = vld [vmem:[%s388 + $0x248] sm:$0xff]
        %v3221 = vld [vmem:[%s388 + $0x250] sm:$0xff]
        %v3222 = vld [vmem:[%s388 + $0x258] sm:$0xff]
        %v3223 = vld [vmem:[%s388 + $0x260] sm:$0xff]
        %v3224 = vld [vmem:[%s388 + $0x268] sm:$0xff]
        %v3225 = vld [vmem:[%s388 + $0x270] sm:$0xff]
        %v3226 = vld [vmem:[%s388 + $0x278] sm:$0xff]
        %v3227 = vld [vmem:[%s388 + $0x280] sm:$0xff]
        %v3228 = vld [vmem:[%s388 + $0x288] sm:$0xff]
        %v3229 = vld [vmem:[%s388 + $0x290] sm:$0xff]
        %v3230 = vld [vmem:[%s388 + $0x298] sm:$0xff]
        %v3231 = vld [vmem:[%s388 + $0x2a0] sm:$0xff]
        %v3232 = vld [vmem:[%s388 + $0x2a8] sm:$0xff]
        %v3233 = vld [vmem:[%s388 + $0x2b0] sm:$0xff]
        %v3234 = vld [vmem:[%s388 + $0x2b8] sm:$0xff]
        %v3235 = vld [vmem:[%s388 + $0x2c0] sm:$0xff]
        %v3236 = vld [vmem:[%s388 + $0x2c8] sm:$0xff]
        %v3237 = vld [vmem:[%s388 + $0x2d0] sm:$0xff]
        %v3238 = vld [vmem:[%s388 + $0x2d8] sm:$0xff]
        %v3239 = vld [vmem:[%s388 + $0x2e0] sm:$0xff]
        %v3240 = vld [vmem:[%s388 + $0x2e8] sm:$0xff]
        %v3241 = vld [vmem:[%s388 + $0x2f0] sm:$0xff]
        %v3242 = vld [vmem:[%s388 + $0x2f8] sm:$0xff]
        %v3243 = vld [vmem:[%s388 + $0x300] sm:$0xff]
        %v3244 = vld [vmem:[%s388 + $0x308] sm:$0xff]
        %v3245 = vld [vmem:[%s388 + $0x310] sm:$0xff]
        %v3246 = vld [vmem:[%s388 + $0x318] sm:$0xff]
        %v3247 = vld [vmem:[%s388 + $0x320] sm:$0xff]
        %v3248 = vld [vmem:[%s388 + $0x328] sm:$0xff]
        %v3249 = vld [vmem:[%s388 + $0x330] sm:$0xff]
        %v3250 = vld [vmem:[%s388 + $0x338] sm:$0xff]
        %v3251 = vld [vmem:[%s388 + $0x340] sm:$0xff]
        %v3252 = vld [vmem:[%s388 + $0x348] sm:$0xff]
        %v3253 = vld [vmem:[%s388 + $0x350] sm:$0xff]
        %v3254 = vld [vmem:[%s388 + $0x358] sm:$0xff]
        %v3255 = vld [vmem:[%s388 + $0x360] sm:$0xff]
        %v3256 = vld [vmem:[%s388 + $0x368] sm:$0xff]
        %v3257 = vld [vmem:[%s388 + $0x370] sm:$0xff]
        %v3258 = vld [vmem:[%s388 + $0x378] sm:$0xff]
        %v3259 = vld [vmem:[%s388 + $0x380] sm:$0xff]
        %v3260 = vld [vmem:[%s388 + $0x388] sm:$0xff]
        %v3261 = vld [vmem:[%s388 + $0x390] sm:$0xff]
        %v3262 = vld [vmem:[%s388 + $0x398] sm:$0xff]
        %v3263 = vld [vmem:[%s388 + $0x3a0] sm:$0xff]
        %v3264 = vld [vmem:[%s388 + $0x3a8] sm:$0xff]
        %v3265 = vld [vmem:[%s388 + $0x3b0] sm:$0xff]
        %v3266 = vld [vmem:[%s388 + $0x3b8] sm:$0xff]
        %v3267 = vld [vmem:[%s388 + $0x3c0] sm:$0xff]
        %v3268 = vld [vmem:[%s388 + $0x3c8] sm:$0xff]
        %v3269 = vld [vmem:[%s388 + $0x3d0] sm:$0xff]
        %v3270 = vld [vmem:[%s388 + $0x3d8] sm:$0xff]
        %v3271 = vld [vmem:[%s388 + $0x3e0] sm:$0xff]
        %v3272 = vld [vmem:[%s388 + $0x3e8] sm:$0xff]
        %v3273 = vld [vmem:[%s388 + $0x3f0] sm:$0xff]
        %v3274 = vld [vmem:[%s388 + $0x3f8] sm:$0xff]
        %v3276 = vsel %vm531, %v3147, 0
        %v3279 = vsel %vm531, %v3148, 0
        %v3282 = vsel %vm531, %v3149, 0
        %v3285 = vsel %vm531, %v3150, 0
        %v3288 = vsel %vm531, %v3151, 0
        %v3291 = vsel %vm531, %v3152, 0
        %v3294 = vsel %vm531, %v3153, 0
        %v3297 = vsel %vm531, %v3154, 0
        %v3300 = vsel %vm531, %v3155, 0
        %v3303 = vsel %vm531, %v3156, 0
        %v3306 = vsel %vm531, %v3157, 0
        %v3309 = vsel %vm531, %v3158, 0
        %v3312 = vsel %vm531, %v3159, 0
        %v3315 = vsel %vm531, %v3160, 0
        %v3318 = vsel %vm531, %v3161, 0
        %v3321 = vsel %vm531, %v3162, 0
        %v3324 = vsel %vm531, %v3163, 0
        %v3327 = vsel %vm531, %v3164, 0
        %v3330 = vsel %vm531, %v3165, 0
        %v3333 = vsel %vm531, %v3166, 0
        %v3336 = vsel %vm531, %v3167, 0
        %v3339 = vsel %vm531, %v3168, 0
        %v3342 = vsel %vm531, %v3169, 0
        %v3345 = vsel %vm531, %v3170, 0
        %v3348 = vsel %vm531, %v3171, 0
        %v3351 = vsel %vm531, %v3172, 0
        %v3354 = vsel %vm531, %v3173, 0
        %v3357 = vsel %vm531, %v3174, 0
        %v3360 = vsel %vm531, %v3175, 0
        %v3363 = vsel %vm531, %v3176, 0
        %v3366 = vsel %vm531, %v3177, 0
        %v3369 = vsel %vm531, %v3178, 0
        %v3372 = vsel %vm531, %v3179, 0
        %v3375 = vsel %vm531, %v3180, 0
        %v3378 = vsel %vm531, %v3181, 0
        %v3381 = vsel %vm531, %v3182, 0
        %v3384 = vsel %vm531, %v3183, 0
        %v3387 = vsel %vm531, %v3184, 0
        %v3390 = vsel %vm531, %v3185, 0
        %v3393 = vsel %vm531, %v3186, 0
        %v3396 = vsel %vm531, %v3187, 0
        %v3399 = vsel %vm531, %v3188, 0
        %v3402 = vsel %vm531, %v3189, 0
        %v3405 = vsel %vm531, %v3190, 0
        %v3408 = vsel %vm531, %v3191, 0
        %v3411 = vsel %vm531, %v3192, 0
        %v3414 = vsel %vm531, %v3193, 0
        %v3417 = vsel %vm531, %v3194, 0
        %v3420 = vsel %vm531, %v3195, 0
        %v3423 = vsel %vm531, %v3196, 0
        %v3426 = vsel %vm531, %v3197, 0
        %v3429 = vsel %vm531, %v3198, 0
        %v3432 = vsel %vm531, %v3199, 0
        %v3435 = vsel %vm531, %v3200, 0
        %v3438 = vsel %vm531, %v3201, 0
        %v3441 = vsel %vm531, %v3202, 0
        %v3444 = vsel %vm531, %v3203, 0
        %v3447 = vsel %vm531, %v3204, 0
        %v3450 = vsel %vm531, %v3205, 0
        %v3453 = vsel %vm531, %v3206, 0
        %v3456 = vsel %vm531, %v3207, 0
        %v3459 = vsel %vm531, %v3208, 0
        %v3462 = vsel %vm531, %v3209, 0
        %v3465 = vsel %vm531, %v3210, 0
        %v3468 = vsel %vm531, %v3211, 0
        %v3471 = vsel %vm531, %v3212, 0
        %v3474 = vsel %vm531, %v3213, 0
        %v3477 = vsel %vm531, %v3214, 0
        %v3480 = vsel %vm531, %v3215, 0
        %v3483 = vsel %vm531, %v3216, 0
        %v3486 = vsel %vm531, %v3217, 0
        %v3489 = vsel %vm531, %v3218, 0
        %v3492 = vsel %vm531, %v3219, 0
        %v3495 = vsel %vm531, %v3220, 0
        %v3498 = vsel %vm531, %v3221, 0
        %v3501 = vsel %vm531, %v3222, 0
        %v3504 = vsel %vm531, %v3223, 0
        %v3507 = vsel %vm531, %v3224, 0
        %v3510 = vsel %vm531, %v3225, 0
        %v3513 = vsel %vm531, %v3226, 0
        %v3516 = vsel %vm531, %v3227, 0
        %v3519 = vsel %vm531, %v3228, 0
        %v3522 = vsel %vm531, %v3229, 0
        %v3525 = vsel %vm531, %v3230, 0
        %v3528 = vsel %vm531, %v3231, 0
        %v3531 = vsel %vm531, %v3232, 0
        %v3534 = vsel %vm531, %v3233, 0
        %v3537 = vsel %vm531, %v3234, 0
        %v3540 = vsel %vm531, %v3235, 0
        %v3543 = vsel %vm531, %v3236, 0
        %v3546 = vsel %vm531, %v3237, 0
        %v3549 = vsel %vm531, %v3238, 0
        %v3552 = vsel %vm531, %v3239, 0
        %v3555 = vsel %vm531, %v3240, 0
        %v3558 = vsel %vm531, %v3241, 0
        %v3561 = vsel %vm531, %v3242, 0
        %v3564 = vsel %vm531, %v3243, 0
        %v3567 = vsel %vm531, %v3244, 0
        %v3570 = vsel %vm531, %v3245, 0
        %v3573 = vsel %vm531, %v3246, 0
        %v3576 = vsel %vm531, %v3247, 0
        %v3579 = vsel %vm531, %v3248, 0
        %v3582 = vsel %vm531, %v3249, 0
        %v3585 = vsel %vm531, %v3250, 0
        %v3588 = vsel %vm531, %v3251, 0
        %v3591 = vsel %vm531, %v3252, 0
        %v3594 = vsel %vm531, %v3253, 0
        %v3597 = vsel %vm531, %v3254, 0
        %v3600 = vsel %vm531, %v3255, 0
        %v3603 = vsel %vm531, %v3256, 0
        %v3606 = vsel %vm531, %v3257, 0
        %v3609 = vsel %vm531, %v3258, 0
        %v3612 = vsel %vm531, %v3259, 0
        %v3615 = vsel %vm531, %v3260, 0
        %v3618 = vsel %vm531, %v3261, 0
        %v3621 = vsel %vm531, %v3262, 0
        %v3624 = vsel %vm531, %v3263, 0
        %v3627 = vsel %vm531, %v3264, 0
        %v3630 = vsel %vm531, %v3265, 0
        %v3633 = vsel %vm531, %v3266, 0
        %v3636 = vsel %vm531, %v3267, 0
        %v3639 = vsel %vm531, %v3268, 0
        %v3642 = vsel %vm531, %v3269, 0
        %v3645 = vsel %vm531, %v3270, 0
        %v3648 = vsel %vm531, %v3271, 0
        %v3651 = vsel %vm531, %v3272, 0
        %v3654 = vsel %vm531, %v3273, 0
        %v3657 = vsel %vm531, %v3274, 0
        %3659 = vmatpush.msra.mxu0 0.0
        %3660 = vmatpush.msra.mxu0 0.0
        %3661 = vmatpush.msra.mxu0 0.0
        %3662 = vmatpush.msra.mxu0 0.0
        %3663 = vmatpush.msra.mxu0 0.0
        %3664 = vmatpush.msra.mxu0 0.0
        %3665 = vmatpush.msra.mxu0 0.0
        %3666 = vmatpush.msra.mxu0 0.0
        %3667 = vmatpush.msra.mxu0 0.0
        %3668 = vmatpush.msra.mxu0 0.0
        %3669 = vmatpush.msra.mxu0 0.0
        %3670 = vmatpush.msra.mxu0 0.0
        %3671 = vmatpush.msra.mxu0 %v918
        %3672 = vmatpush.msra.mxu0 %v401
        %3673 = vmatpush.msra.mxu0 %v400
        %3674 = vmatpush.msra.mxu0 %v399
        %3675 = vmatmul.f32.gmra.mxu0 %v3276
        %v3676 = vpop.f32.mrf.mxu0
        %v3677 = vadd.f32 0.0, %v3676
        %3678 = vmatmul.f32.gmra.mxu0 %v3279
        %v3679 = vpop.f32.mrf.mxu0
        %v3680 = vadd.f32 0.0, %v3679
        %3681 = vmatmul.f32.gmra.mxu0 %v3282
        %v3682 = vpop.f32.mrf.mxu0
        %v3683 = vadd.f32 0.0, %v3682
        %3684 = vmatmul.f32.gmra.mxu0 %v3285
        %v3685 = vpop.f32.mrf.mxu0
        %v3686 = vadd.f32 0.0, %v3685
        %3687 = vmatmul.f32.gmra.mxu0 %v3288
        %v3688 = vpop.f32.mrf.mxu0
        %v3689 = vadd.f32 0.0, %v3688
        %3690 = vmatmul.f32.gmra.mxu0 %v3291
        %v3691 = vpop.f32.mrf.mxu0
        %v3692 = vadd.f32 0.0, %v3691
        %3693 = vmatmul.f32.gmra.mxu0 %v3294
        %v3694 = vpop.f32.mrf.mxu0
        %v3695 = vadd.f32 0.0, %v3694
        %3696 = vmatmul.f32.gmra.mxu0 %v3297
        %v3697 = vpop.f32.mrf.mxu0
        %v3698 = vadd.f32 0.0, %v3697
        %3699 = vmatmul.f32.gmra.mxu0 %v3300
        %v3700 = vpop.f32.mrf.mxu0
        %v3701 = vadd.f32 0.0, %v3700
        %3702 = vmatmul.f32.gmra.mxu0 %v3303
        %v3703 = vpop.f32.mrf.mxu0
        %v3704 = vadd.f32 0.0, %v3703
        %3705 = vmatmul.f32.gmra.mxu0 %v3306
        %v3706 = vpop.f32.mrf.mxu0
        %v3707 = vadd.f32 0.0, %v3706
        %3708 = vmatmul.f32.gmra.mxu0 %v3309
        %v3709 = vpop.f32.mrf.mxu0
        %v3710 = vadd.f32 0.0, %v3709
        %3711 = vmatmul.f32.gmra.mxu0 %v3312
        %v3712 = vpop.f32.mrf.mxu0
        %v3713 = vadd.f32 0.0, %v3712
        %3714 = vmatmul.f32.gmra.mxu0 %v3315
        %v3715 = vpop.f32.mrf.mxu0
        %v3716 = vadd.f32 0.0, %v3715
        %3717 = vmatmul.f32.gmra.mxu0 %v3318
        %v3718 = vpop.f32.mrf.mxu0
        %v3719 = vadd.f32 0.0, %v3718
        %3720 = vmatmul.f32.gmra.mxu0 %v3321
        %v3721 = vpop.f32.mrf.mxu0
        %v3722 = vadd.f32 0.0, %v3721
        %3723 = vmatmul.f32.gmra.mxu0 %v3324
        %v3724 = vpop.f32.mrf.mxu0
        %v3725 = vadd.f32 0.0, %v3724
        %3726 = vmatmul.f32.gmra.mxu0 %v3327
        %v3727 = vpop.f32.mrf.mxu0
        %v3728 = vadd.f32 0.0, %v3727
        %3729 = vmatmul.f32.gmra.mxu0 %v3330
        %v3730 = vpop.f32.mrf.mxu0
        %v3731 = vadd.f32 0.0, %v3730
        %3732 = vmatmul.f32.gmra.mxu0 %v3333
        %v3733 = vpop.f32.mrf.mxu0
        %v3734 = vadd.f32 0.0, %v3733
        %3735 = vmatmul.f32.gmra.mxu0 %v3336
        %v3736 = vpop.f32.mrf.mxu0
        %v3737 = vadd.f32 0.0, %v3736
        %3738 = vmatmul.f32.gmra.mxu0 %v3339
        %v3739 = vpop.f32.mrf.mxu0
        %v3740 = vadd.f32 0.0, %v3739
        %3741 = vmatmul.f32.gmra.mxu0 %v3342
        %v3742 = vpop.f32.mrf.mxu0
        %v3743 = vadd.f32 0.0, %v3742
        %3744 = vmatmul.f32.gmra.mxu0 %v3345
        %v3745 = vpop.f32.mrf.mxu0
        %v3746 = vadd.f32 0.0, %v3745
        %3747 = vmatmul.f32.gmra.mxu0 %v3348
        %v3748 = vpop.f32.mrf.mxu0
        %v3749 = vadd.f32 0.0, %v3748
        %3750 = vmatmul.f32.gmra.mxu0 %v3351
        %v3751 = vpop.f32.mrf.mxu0
        %v3752 = vadd.f32 0.0, %v3751
        %3753 = vmatmul.f32.gmra.mxu0 %v3354
        %v3754 = vpop.f32.mrf.mxu0
        %v3755 = vadd.f32 0.0, %v3754
        %3756 = vmatmul.f32.gmra.mxu0 %v3357
        %v3757 = vpop.f32.mrf.mxu0
        %v3758 = vadd.f32 0.0, %v3757
        %3759 = vmatmul.f32.gmra.mxu0 %v3360
        %v3760 = vpop.f32.mrf.mxu0
        %v3761 = vadd.f32 0.0, %v3760
        %3762 = vmatmul.f32.gmra.mxu0 %v3363
        %v3763 = vpop.f32.mrf.mxu0
        %v3764 = vadd.f32 0.0, %v3763
        %3765 = vmatmul.f32.gmra.mxu0 %v3366
        %v3766 = vpop.f32.mrf.mxu0
        %v3767 = vadd.f32 0.0, %v3766
        %3768 = vmatmul.f32.gmra.mxu0 %v3369
        %v3769 = vpop.f32.mrf.mxu0
        %v3770 = vadd.f32 0.0, %v3769
        %3771 = vmatmul.f32.gmra.mxu0 %v3372
        %v3772 = vpop.f32.mrf.mxu0
        %v3773 = vadd.f32 0.0, %v3772
        %3774 = vmatmul.f32.gmra.mxu0 %v3375
        %v3775 = vpop.f32.mrf.mxu0
        %v3776 = vadd.f32 0.0, %v3775
        %3777 = vmatmul.f32.gmra.mxu0 %v3378
        %v3778 = vpop.f32.mrf.mxu0
        %v3779 = vadd.f32 0.0, %v3778
        %3780 = vmatmul.f32.gmra.mxu0 %v3381
        %v3781 = vpop.f32.mrf.mxu0
        %v3782 = vadd.f32 0.0, %v3781
        %3783 = vmatmul.f32.gmra.mxu0 %v3384
        %v3784 = vpop.f32.mrf.mxu0
        %v3785 = vadd.f32 0.0, %v3784
        %3786 = vmatmul.f32.gmra.mxu0 %v3387
        %v3787 = vpop.f32.mrf.mxu0
        %v3788 = vadd.f32 0.0, %v3787
        %3789 = vmatmul.f32.gmra.mxu0 %v3390
        %v3790 = vpop.f32.mrf.mxu0
        %v3791 = vadd.f32 0.0, %v3790
        %3792 = vmatmul.f32.gmra.mxu0 %v3393
        %v3793 = vpop.f32.mrf.mxu0
        %v3794 = vadd.f32 0.0, %v3793
        %3795 = vmatmul.f32.gmra.mxu0 %v3396
        %v3796 = vpop.f32.mrf.mxu0
        %v3797 = vadd.f32 0.0, %v3796
        %3798 = vmatmul.f32.gmra.mxu0 %v3399
        %v3799 = vpop.f32.mrf.mxu0
        %v3800 = vadd.f32 0.0, %v3799
        %3801 = vmatmul.f32.gmra.mxu0 %v3402
        %v3802 = vpop.f32.mrf.mxu0
        %v3803 = vadd.f32 0.0, %v3802
        %3804 = vmatmul.f32.gmra.mxu0 %v3405
        %v3805 = vpop.f32.mrf.mxu0
        %v3806 = vadd.f32 0.0, %v3805
        %3807 = vmatmul.f32.gmra.mxu0 %v3408
        %v3808 = vpop.f32.mrf.mxu0
        %v3809 = vadd.f32 0.0, %v3808
        %3810 = vmatmul.f32.gmra.mxu0 %v3411
        %v3811 = vpop.f32.mrf.mxu0
        %v3812 = vadd.f32 0.0, %v3811
        %3813 = vmatmul.f32.gmra.mxu0 %v3414
        %v3814 = vpop.f32.mrf.mxu0
        %v3815 = vadd.f32 0.0, %v3814
        %3816 = vmatmul.f32.gmra.mxu0 %v3417
        %v3817 = vpop.f32.mrf.mxu0
        %v3818 = vadd.f32 0.0, %v3817
        %3819 = vmatmul.f32.gmra.mxu0 %v3420
        %v3820 = vpop.f32.mrf.mxu0
        %v3821 = vadd.f32 0.0, %v3820
        %3822 = vmatmul.f32.gmra.mxu0 %v3423
        %v3823 = vpop.f32.mrf.mxu0
        %v3824 = vadd.f32 0.0, %v3823
        %3825 = vmatmul.f32.gmra.mxu0 %v3426
        %v3826 = vpop.f32.mrf.mxu0
        %v3827 = vadd.f32 0.0, %v3826
        %3828 = vmatmul.f32.gmra.mxu0 %v3429
        %v3829 = vpop.f32.mrf.mxu0
        %v3830 = vadd.f32 0.0, %v3829
        %3831 = vmatmul.f32.gmra.mxu0 %v3432
        %v3832 = vpop.f32.mrf.mxu0
        %v3833 = vadd.f32 0.0, %v3832
        %3834 = vmatmul.f32.gmra.mxu0 %v3435
        %v3835 = vpop.f32.mrf.mxu0
        %v3836 = vadd.f32 0.0, %v3835
        %3837 = vmatmul.f32.gmra.mxu0 %v3438
        %v3838 = vpop.f32.mrf.mxu0
        %v3839 = vadd.f32 0.0, %v3838
        %3840 = vmatmul.f32.gmra.mxu0 %v3441
        %v3841 = vpop.f32.mrf.mxu0
        %v3842 = vadd.f32 0.0, %v3841
        %3843 = vmatmul.f32.gmra.mxu0 %v3444
        %v3844 = vpop.f32.mrf.mxu0
        %v3845 = vadd.f32 0.0, %v3844
        %3846 = vmatmul.f32.gmra.mxu0 %v3447
        %v3847 = vpop.f32.mrf.mxu0
        %v3848 = vadd.f32 0.0, %v3847
        %3849 = vmatmul.f32.gmra.mxu0 %v3450
        %v3850 = vpop.f32.mrf.mxu0
        %v3851 = vadd.f32 0.0, %v3850
        %3852 = vmatmul.f32.gmra.mxu0 %v3453
        %v3853 = vpop.f32.mrf.mxu0
        %v3854 = vadd.f32 0.0, %v3853
        %3855 = vmatmul.f32.gmra.mxu0 %v3456
        %v3856 = vpop.f32.mrf.mxu0
        %v3857 = vadd.f32 0.0, %v3856
        %3858 = vmatmul.f32.gmra.mxu0 %v3459
        %v3859 = vpop.f32.mrf.mxu0
        %v3860 = vadd.f32 0.0, %v3859
        %3861 = vmatmul.f32.gmra.mxu0 %v3462
        %v3862 = vpop.f32.mrf.mxu0
        %v3863 = vadd.f32 0.0, %v3862
        %3864 = vmatmul.f32.gmra.mxu0 %v3465
        %v3865 = vpop.f32.mrf.mxu0
        %v3866 = vadd.f32 0.0, %v3865
        %3867 = vmatmul.f32.gmra.mxu0 %v3468
        %v3868 = vpop.f32.mrf.mxu0
        %v3869 = vadd.f32 0.0, %v3868
        %3870 = vmatmul.f32.gmra.mxu0 %v3471
        %v3871 = vpop.f32.mrf.mxu0
        %v3872 = vadd.f32 0.0, %v3871
        %3873 = vmatmul.f32.gmra.mxu0 %v3474
        %v3874 = vpop.f32.mrf.mxu0
        %v3875 = vadd.f32 0.0, %v3874
        %3876 = vmatmul.f32.gmra.mxu0 %v3477
        %v3877 = vpop.f32.mrf.mxu0
        %v3878 = vadd.f32 0.0, %v3877
        %3879 = vmatmul.f32.gmra.mxu0 %v3480
        %v3880 = vpop.f32.mrf.mxu0
        %v3881 = vadd.f32 0.0, %v3880
        %3882 = vmatmul.f32.gmra.mxu0 %v3483
        %v3883 = vpop.f32.mrf.mxu0
        %v3884 = vadd.f32 0.0, %v3883
        %3885 = vmatmul.f32.gmra.mxu0 %v3486
        %v3886 = vpop.f32.mrf.mxu0
        %v3887 = vadd.f32 0.0, %v3886
        %3888 = vmatmul.f32.gmra.mxu0 %v3489
        %v3889 = vpop.f32.mrf.mxu0
        %v3890 = vadd.f32 0.0, %v3889
        %3891 = vmatmul.f32.gmra.mxu0 %v3492
        %v3892 = vpop.f32.mrf.mxu0
        %v3893 = vadd.f32 0.0, %v3892
        %3894 = vmatmul.f32.gmra.mxu0 %v3495
        %v3895 = vpop.f32.mrf.mxu0
        %v3896 = vadd.f32 0.0, %v3895
        %3897 = vmatmul.f32.gmra.mxu0 %v3498
        %v3898 = vpop.f32.mrf.mxu0
        %v3899 = vadd.f32 0.0, %v3898
        %3900 = vmatmul.f32.gmra.mxu0 %v3501
        %v3901 = vpop.f32.mrf.mxu0
        %v3902 = vadd.f32 0.0, %v3901
        %3903 = vmatmul.f32.gmra.mxu0 %v3504
        %v3904 = vpop.f32.mrf.mxu0
        %v3905 = vadd.f32 0.0, %v3904
        %3906 = vmatmul.f32.gmra.mxu0 %v3507
        %v3907 = vpop.f32.mrf.mxu0
        %v3908 = vadd.f32 0.0, %v3907
        %3909 = vmatmul.f32.gmra.mxu0 %v3510
        %v3910 = vpop.f32.mrf.mxu0
        %v3911 = vadd.f32 0.0, %v3910
        %3912 = vmatmul.f32.gmra.mxu0 %v3513
        %v3913 = vpop.f32.mrf.mxu0
        %v3914 = vadd.f32 0.0, %v3913
        %3915 = vmatmul.f32.gmra.mxu0 %v3516
        %v3916 = vpop.f32.mrf.mxu0
        %v3917 = vadd.f32 0.0, %v3916
        %3918 = vmatmul.f32.gmra.mxu0 %v3519
        %v3919 = vpop.f32.mrf.mxu0
        %v3920 = vadd.f32 0.0, %v3919
        %3921 = vmatmul.f32.gmra.mxu0 %v3522
        %v3922 = vpop.f32.mrf.mxu0
        %v3923 = vadd.f32 0.0, %v3922
        %3924 = vmatmul.f32.gmra.mxu0 %v3525
        %v3925 = vpop.f32.mrf.mxu0
        %v3926 = vadd.f32 0.0, %v3925
        %3927 = vmatmul.f32.gmra.mxu0 %v3528
        %v3928 = vpop.f32.mrf.mxu0
        %v3929 = vadd.f32 0.0, %v3928
        %3930 = vmatmul.f32.gmra.mxu0 %v3531
        %v3931 = vpop.f32.mrf.mxu0
        %v3932 = vadd.f32 0.0, %v3931
        %3933 = vmatmul.f32.gmra.mxu0 %v3534
        %v3934 = vpop.f32.mrf.mxu0
        %v3935 = vadd.f32 0.0, %v3934
        %3936 = vmatmul.f32.gmra.mxu0 %v3537
        %v3937 = vpop.f32.mrf.mxu0
        %v3938 = vadd.f32 0.0, %v3937
        %3939 = vmatmul.f32.gmra.mxu0 %v3540
        %v3940 = vpop.f32.mrf.mxu0
        %v3941 = vadd.f32 0.0, %v3940
        %3942 = vmatmul.f32.gmra.mxu0 %v3543
        %v3943 = vpop.f32.mrf.mxu0
        %v3944 = vadd.f32 0.0, %v3943
        %3945 = vmatmul.f32.gmra.mxu0 %v3546
        %v3946 = vpop.f32.mrf.mxu0
        %v3947 = vadd.f32 0.0, %v3946
        %3948 = vmatmul.f32.gmra.mxu0 %v3549
        %v3949 = vpop.f32.mrf.mxu0
        %v3950 = vadd.f32 0.0, %v3949
        %3951 = vmatmul.f32.gmra.mxu0 %v3552
        %v3952 = vpop.f32.mrf.mxu0
        %v3953 = vadd.f32 0.0, %v3952
        %3954 = vmatmul.f32.gmra.mxu0 %v3555
        %v3955 = vpop.f32.mrf.mxu0
        %v3956 = vadd.f32 0.0, %v3955
        %3957 = vmatmul.f32.gmra.mxu0 %v3558
        %v3958 = vpop.f32.mrf.mxu0
        %v3959 = vadd.f32 0.0, %v3958
        %3960 = vmatmul.f32.gmra.mxu0 %v3561
        %v3961 = vpop.f32.mrf.mxu0
        %v3962 = vadd.f32 0.0, %v3961
        %3963 = vmatmul.f32.gmra.mxu0 %v3564
        %v3964 = vpop.f32.mrf.mxu0
        %v3965 = vadd.f32 0.0, %v3964
        %3966 = vmatmul.f32.gmra.mxu0 %v3567
        %v3967 = vpop.f32.mrf.mxu0
        %v3968 = vadd.f32 0.0, %v3967
        %3969 = vmatmul.f32.gmra.mxu0 %v3570
        %v3970 = vpop.f32.mrf.mxu0
        %v3971 = vadd.f32 0.0, %v3970
        %3972 = vmatmul.f32.gmra.mxu0 %v3573
        %v3973 = vpop.f32.mrf.mxu0
        %v3974 = vadd.f32 0.0, %v3973
        %3975 = vmatmul.f32.gmra.mxu0 %v3576
        %v3976 = vpop.f32.mrf.mxu0
        %v3977 = vadd.f32 0.0, %v3976
        %3978 = vmatmul.f32.gmra.mxu0 %v3579
        %v3979 = vpop.f32.mrf.mxu0
        %v3980 = vadd.f32 0.0, %v3979
        %3981 = vmatmul.f32.gmra.mxu0 %v3582
        %v3982 = vpop.f32.mrf.mxu0
        %v3983 = vadd.f32 0.0, %v3982
        %3984 = vmatmul.f32.gmra.mxu0 %v3585
        %v3985 = vpop.f32.mrf.mxu0
        %v3986 = vadd.f32 0.0, %v3985
        %3987 = vmatmul.f32.gmra.mxu0 %v3588
        %v3988 = vpop.f32.mrf.mxu0
        %v3989 = vadd.f32 0.0, %v3988
        %3990 = vmatmul.f32.gmra.mxu0 %v3591
        %v3991 = vpop.f32.mrf.mxu0
        %v3992 = vadd.f32 0.0, %v3991
        %3993 = vmatmul.f32.gmra.mxu0 %v3594
        %v3994 = vpop.f32.mrf.mxu0
        %v3995 = vadd.f32 0.0, %v3994
        %3996 = vmatmul.f32.gmra.mxu0 %v3597
        %v3997 = vpop.f32.mrf.mxu0
        %v3998 = vadd.f32 0.0, %v3997
        %3999 = vmatmul.f32.gmra.mxu0 %v3600
        %v4000 = vpop.f32.mrf.mxu0
        %v4001 = vadd.f32 0.0, %v4000
        %4002 = vmatmul.f32.gmra.mxu0 %v3603
        %v4003 = vpop.f32.mrf.mxu0
        %v4004 = vadd.f32 0.0, %v4003
        %4005 = vmatmul.f32.gmra.mxu0 %v3606
        %v4006 = vpop.f32.mrf.mxu0
        %v4007 = vadd.f32 0.0, %v4006
        %4008 = vmatmul.f32.gmra.mxu0 %v3609
        %v4009 = vpop.f32.mrf.mxu0
        %v4010 = vadd.f32 0.0, %v4009
        %4011 = vmatmul.f32.gmra.mxu0 %v3612
        %v4012 = vpop.f32.mrf.mxu0
        %v4013 = vadd.f32 0.0, %v4012
        %4014 = vmatmul.f32.gmra.mxu0 %v3615
        %v4015 = vpop.f32.mrf.mxu0
        %v4016 = vadd.f32 0.0, %v4015
        %4017 = vmatmul.f32.gmra.mxu0 %v3618
        %v4018 = vpop.f32.mrf.mxu0
        %v4019 = vadd.f32 0.0, %v4018
        %4020 = vmatmul.f32.gmra.mxu0 %v3621
        %v4021 = vpop.f32.mrf.mxu0
        %v4022 = vadd.f32 0.0, %v4021
        %4023 = vmatmul.f32.gmra.mxu0 %v3624
        %v4024 = vpop.f32.mrf.mxu0
        %v4025 = vadd.f32 0.0, %v4024
        %4026 = vmatmul.f32.gmra.mxu0 %v3627
        %v4027 = vpop.f32.mrf.mxu0
        %v4028 = vadd.f32 0.0, %v4027
        %4029 = vmatmul.f32.gmra.mxu0 %v3630
        %v4030 = vpop.f32.mrf.mxu0
        %v4031 = vadd.f32 0.0, %v4030
        %4032 = vmatmul.f32.gmra.mxu0 %v3633
        %v4033 = vpop.f32.mrf.mxu0
        %v4034 = vadd.f32 0.0, %v4033
        %4035 = vmatmul.f32.gmra.mxu0 %v3636
        %v4036 = vpop.f32.mrf.mxu0
        %v4037 = vadd.f32 0.0, %v4036
        %4038 = vmatmul.f32.gmra.mxu0 %v3639
        %v4039 = vpop.f32.mrf.mxu0
        %v4040 = vadd.f32 0.0, %v4039
        %4041 = vmatmul.f32.gmra.mxu0 %v3642
        %v4042 = vpop.f32.mrf.mxu0
        %v4043 = vadd.f32 0.0, %v4042
        %4044 = vmatmul.f32.gmra.mxu0 %v3645
        %v4045 = vpop.f32.mrf.mxu0
        %v4046 = vadd.f32 0.0, %v4045
        %4047 = vmatmul.f32.gmra.mxu0 %v3648
        %v4048 = vpop.f32.mrf.mxu0
        %v4049 = vadd.f32 0.0, %v4048
        %4050 = vmatmul.f32.gmra.mxu0 %v3651
        %v4051 = vpop.f32.mrf.mxu0
        %v4052 = vadd.f32 0.0, %v4051
        %4053 = vmatmul.f32.gmra.mxu0 %v3654
        %v4054 = vpop.f32.mrf.mxu0
        %v4055 = vadd.f32 0.0, %v4054
        %4056 = vmatmul.f32.gmra.mxu0 %v3657
        %v4057 = vpop.f32.mrf.mxu0
        %v4058 = vadd.f32 0.0, %v4057
        %4059 = vdwg.mxu0
        %v4060 = vmax.f32 %v938, %v1851
        %v4061 = vmax.f32 %v941, %v1854
        %v4062 = vmax.f32 %v944, %v1857
        %v4063 = vmax.f32 %v947, %v1860
        %v4064 = vmax.f32 %v950, %v1863
        %v4065 = vmax.f32 %v953, %v1866
        %v4066 = vmax.f32 %v956, %v1869
        %v4067 = vmax.f32 %v959, %v1872
        %v4068 = vmax.f32 %v962, %v1875
        %v4069 = vmax.f32 %v965, %v1878
        %v4070 = vmax.f32 %v968, %v1881
        %v4071 = vmax.f32 %v971, %v1884
        %v4072 = vmax.f32 %v974, %v1887
        %v4073 = vmax.f32 %v977, %v1890
        %v4074 = vmax.f32 %v980, %v1893
        %v4075 = vmax.f32 %v983, %v1896
        %v4076 = vmax.f32 %v986, %v1899
        %v4077 = vmax.f32 %v989, %v1902
        %v4078 = vmax.f32 %v992, %v1905
        %v4079 = vmax.f32 %v995, %v1908
        %v4080 = vmax.f32 %v998, %v1911
        %v4081 = vmax.f32 %v1001, %v1914
        %v4082 = vmax.f32 %v1004, %v1917
        %v4083 = vmax.f32 %v1007, %v1920
        %v4084 = vmax.f32 %v1010, %v1923
        %v4085 = vmax.f32 %v1013, %v1926
        %v4086 = vmax.f32 %v1016, %v1929
        %v4087 = vmax.f32 %v1019, %v1932
        %v4088 = vmax.f32 %v1022, %v1935
        %v4089 = vmax.f32 %v1025, %v1938
        %v4090 = vmax.f32 %v1028, %v1941
        %v4091 = vmax.f32 %v1031, %v1944
        %v4092 = vmax.f32 %v1034, %v1947
        %v4093 = vmax.f32 %v1037, %v1950
        %v4094 = vmax.f32 %v1040, %v1953
        %v4095 = vmax.f32 %v1043, %v1956
        %v4096 = vmax.f32 %v1046, %v1959
        %v4097 = vmax.f32 %v1049, %v1962
        %v4098 = vmax.f32 %v1052, %v1965
        %v4099 = vmax.f32 %v1055, %v1968
        %v4100 = vmax.f32 %v1058, %v1971
        %v4101 = vmax.f32 %v1061, %v1974
        %v4102 = vmax.f32 %v1064, %v1977
        %v4103 = vmax.f32 %v1067, %v1980
        %v4104 = vmax.f32 %v1070, %v1983
        %v4105 = vmax.f32 %v1073, %v1986
        %v4106 = vmax.f32 %v1076, %v1989
        %v4107 = vmax.f32 %v1079, %v1992
        %v4108 = vmax.f32 %v1082, %v1995
        %v4109 = vmax.f32 %v1085, %v1998
        %v4110 = vmax.f32 %v1088, %v2001
        %v4111 = vmax.f32 %v1091, %v2004
        %v4112 = vmax.f32 %v1094, %v2007
        %v4113 = vmax.f32 %v1097, %v2010
        %v4114 = vmax.f32 %v1100, %v2013
        %v4115 = vmax.f32 %v1103, %v2016
        %v4116 = vmax.f32 %v1106, %v2019
        %v4117 = vmax.f32 %v1109, %v2022
        %v4118 = vmax.f32 %v1112, %v2025
        %v4119 = vmax.f32 %v1115, %v2028
        %v4120 = vmax.f32 %v1118, %v2031
        %v4121 = vmax.f32 %v1121, %v2034
        %v4122 = vmax.f32 %v1124, %v2037
        %v4123 = vmax.f32 %v1127, %v2040
        %v4124 = vmax.f32 %v1130, %v2043
        %v4125 = vmax.f32 %v1133, %v2046
        %v4126 = vmax.f32 %v1136, %v2049
        %v4127 = vmax.f32 %v1139, %v2052
        %v4128 = vmax.f32 %v1142, %v2055
        %v4129 = vmax.f32 %v1145, %v2058
        %v4130 = vmax.f32 %v1148, %v2061
        %v4131 = vmax.f32 %v1151, %v2064
        %v4132 = vmax.f32 %v1154, %v2067
        %v4133 = vmax.f32 %v1157, %v2070
        %v4134 = vmax.f32 %v1160, %v2073
        %v4135 = vmax.f32 %v1163, %v2076
        %v4136 = vmax.f32 %v1166, %v2079
        %v4137 = vmax.f32 %v1169, %v2082
        %v4138 = vmax.f32 %v1172, %v2085
        %v4139 = vmax.f32 %v1175, %v2088
        %v4140 = vmax.f32 %v1178, %v2091
        %v4141 = vmax.f32 %v1181, %v2094
        %v4142 = vmax.f32 %v1184, %v2097
        %v4143 = vmax.f32 %v1187, %v2100
        %v4144 = vmax.f32 %v1190, %v2103
        %v4145 = vmax.f32 %v1193, %v2106
        %v4146 = vmax.f32 %v1196, %v2109
        %v4147 = vmax.f32 %v1199, %v2112
        %v4148 = vmax.f32 %v1202, %v2115
        %v4149 = vmax.f32 %v1205, %v2118
        %v4150 = vmax.f32 %v1208, %v2121
        %v4151 = vmax.f32 %v1211, %v2124
        %v4152 = vmax.f32 %v1214, %v2127
        %v4153 = vmax.f32 %v1217, %v2130
        %v4154 = vmax.f32 %v1220, %v2133
        %v4155 = vmax.f32 %v1223, %v2136
        %v4156 = vmax.f32 %v1226, %v2139
        %v4157 = vmax.f32 %v1229, %v2142
        %v4158 = vmax.f32 %v1232, %v2145
        %v4159 = vmax.f32 %v1235, %v2148
        %v4160 = vmax.f32 %v1238, %v2151
        %v4161 = vmax.f32 %v1241, %v2154
        %v4162 = vmax.f32 %v1244, %v2157
        %v4163 = vmax.f32 %v1247, %v2160
        %v4164 = vmax.f32 %v1250, %v2163
        %v4165 = vmax.f32 %v1253, %v2166
        %v4166 = vmax.f32 %v1256, %v2169
        %v4167 = vmax.f32 %v1259, %v2172
        %v4168 = vmax.f32 %v1262, %v2175
        %v4169 = vmax.f32 %v1265, %v2178
        %v4170 = vmax.f32 %v1268, %v2181
        %v4171 = vmax.f32 %v1271, %v2184
        %v4172 = vmax.f32 %v1274, %v2187
        %v4173 = vmax.f32 %v1277, %v2190
        %v4174 = vmax.f32 %v1280, %v2193
        %v4175 = vmax.f32 %v1283, %v2196
        %v4176 = vmax.f32 %v1286, %v2199
        %v4177 = vmax.f32 %v1289, %v2202
        %v4178 = vmax.f32 %v1292, %v2205
        %v4179 = vmax.f32 %v1295, %v2208
        %v4180 = vmax.f32 %v1298, %v2211
        %v4181 = vmax.f32 %v1301, %v2214
        %v4182 = vmax.f32 %v1304, %v2217
        %v4183 = vmax.f32 %v1307, %v2220
        %v4184 = vmax.f32 %v1310, %v2223
        %v4185 = vmax.f32 %v1313, %v2226
        %v4186 = vmax.f32 %v1316, %v2229
        %v4187 = vmax.f32 %v1319, %v2232
        %v4188 = vmax.f32 %v2764, %v3677
        %v4189 = vmax.f32 %v2767, %v3680
        %v4190 = vmax.f32 %v2770, %v3683
        %v4191 = vmax.f32 %v2773, %v3686
        %v4192 = vmax.f32 %v2776, %v3689
        %v4193 = vmax.f32 %v2779, %v3692
        %v4194 = vmax.f32 %v2782, %v3695
        %v4195 = vmax.f32 %v2785, %v3698
        %v4196 = vmax.f32 %v2788, %v3701
        %v4197 = vmax.f32 %v2791, %v3704
        %v4198 = vmax.f32 %v2794, %v3707
        %v4199 = vmax.f32 %v2797, %v3710
        %v4200 = vmax.f32 %v2800, %v3713
        %v4201 = vmax.f32 %v2803, %v3716
        %v4202 = vmax.f32 %v2806, %v3719
        %v4203 = vmax.f32 %v2809, %v3722
        %v4204 = vmax.f32 %v2812, %v3725
        %v4205 = vmax.f32 %v2815, %v3728
        %v4206 = vmax.f32 %v2818, %v3731
        %v4207 = vmax.f32 %v2821, %v3734
        %v4208 = vmax.f32 %v2824, %v3737
        %v4209 = vmax.f32 %v2827, %v3740
        %v4210 = vmax.f32 %v2830, %v3743
        %v4211 = vmax.f32 %v2833, %v3746
        %v4212 = vmax.f32 %v2836, %v3749
        %v4213 = vmax.f32 %v2839, %v3752
        %v4214 = vmax.f32 %v2842, %v3755
        %v4215 = vmax.f32 %v2845, %v3758
        %v4216 = vmax.f32 %v2848, %v3761
        %v4217 = vmax.f32 %v2851, %v3764
        %v4218 = vmax.f32 %v2854, %v3767
        %v4219 = vmax.f32 %v2857, %v3770
        %v4220 = vmax.f32 %v2860, %v3773
        %v4221 = vmax.f32 %v2863, %v3776
        %v4222 = vmax.f32 %v2866, %v3779
        %v4223 = vmax.f32 %v2869, %v3782
        %v4224 = vmax.f32 %v2872, %v3785
        %v4225 = vmax.f32 %v2875, %v3788
        %v4226 = vmax.f32 %v2878, %v3791
        %v4227 = vmax.f32 %v2881, %v3794
        %v4228 = vmax.f32 %v2884, %v3797
        %v4229 = vmax.f32 %v2887, %v3800
        %v4230 = vmax.f32 %v2890, %v3803
        %v4231 = vmax.f32 %v2893, %v3806
        %v4232 = vmax.f32 %v2896, %v3809
        %v4233 = vmax.f32 %v2899, %v3812
        %v4234 = vmax.f32 %v2902, %v3815
        %v4235 = vmax.f32 %v2905, %v3818
        %v4236 = vmax.f32 %v2908, %v3821
        %v4237 = vmax.f32 %v2911, %v3824
        %v4238 = vmax.f32 %v2914, %v3827
        %v4239 = vmax.f32 %v2917, %v3830
        %v4240 = vmax.f32 %v2920, %v3833
        %v4241 = vmax.f32 %v2923, %v3836
        %v4242 = vmax.f32 %v2926, %v3839
        %v4243 = vmax.f32 %v2929, %v3842
        %v4244 = vmax.f32 %v2932, %v3845
        %v4245 = vmax.f32 %v2935, %v3848
        %v4246 = vmax.f32 %v2938, %v3851
        %v4247 = vmax.f32 %v2941, %v3854
        %v4248 = vmax.f32 %v2944, %v3857
        %v4249 = vmax.f32 %v2947, %v3860
        %v4250 = vmax.f32 %v2950, %v3863
        %v4251 = vmax.f32 %v2953, %v3866
        %v4252 = vmax.f32 %v2956, %v3869
        %v4253 = vmax.f32 %v2959, %v3872
        %v4254 = vmax.f32 %v2962, %v3875
        %v4255 = vmax.f32 %v2965, %v3878
        %v4256 = vmax.f32 %v2968, %v3881
        %v4257 = vmax.f32 %v2971, %v3884
        %v4258 = vmax.f32 %v2974, %v3887
        %v4259 = vmax.f32 %v2977, %v3890
        %v4260 = vmax.f32 %v2980, %v3893
        %v4261 = vmax.f32 %v2983, %v3896
        %v4262 = vmax.f32 %v2986, %v3899
        %v4263 = vmax.f32 %v2989, %v3902
        %v4264 = vmax.f32 %v2992, %v3905
        %v4265 = vmax.f32 %v2995, %v3908
        %v4266 = vmax.f32 %v2998, %v3911
        %v4267 = vmax.f32 %v3001, %v3914
        %v4268 = vmax.f32 %v3004, %v3917
        %v4269 = vmax.f32 %v3007, %v3920
        %v4270 = vmax.f32 %v3010, %v3923
        %v4271 = vmax.f32 %v3013, %v3926
        %v4272 = vmax.f32 %v3016, %v3929
        %v4273 = vmax.f32 %v3019, %v3932
        %v4274 = vmax.f32 %v3022, %v3935
        %v4275 = vmax.f32 %v3025, %v3938
        %v4276 = vmax.f32 %v3028, %v3941
        %v4277 = vmax.f32 %v3031, %v3944
        %v4278 = vmax.f32 %v3034, %v3947
        %v4279 = vmax.f32 %v3037, %v3950
        %v4280 = vmax.f32 %v3040, %v3953
        %v4281 = vmax.f32 %v3043, %v3956
        %v4282 = vmax.f32 %v3046, %v3959
        %v4283 = vmax.f32 %v3049, %v3962
        %v4284 = vmax.f32 %v3052, %v3965
        %v4285 = vmax.f32 %v3055, %v3968
        %v4286 = vmax.f32 %v3058, %v3971
        %v4287 = vmax.f32 %v3061, %v3974
        %v4288 = vmax.f32 %v3064, %v3977
        %v4289 = vmax.f32 %v3067, %v3980
        %v4290 = vmax.f32 %v3070, %v3983
        %v4291 = vmax.f32 %v3073, %v3986
        %v4292 = vmax.f32 %v3076, %v3989
        %v4293 = vmax.f32 %v3079, %v3992
        %v4294 = vmax.f32 %v3082, %v3995
        %v4295 = vmax.f32 %v3085, %v3998
        %v4296 = vmax.f32 %v3088, %v4001
        %v4297 = vmax.f32 %v3091, %v4004
        %v4298 = vmax.f32 %v3094, %v4007
        %v4299 = vmax.f32 %v3097, %v4010
        %v4300 = vmax.f32 %v3100, %v4013
        %v4301 = vmax.f32 %v3103, %v4016
        %v4302 = vmax.f32 %v3106, %v4019
        %v4303 = vmax.f32 %v3109, %v4022
        %v4304 = vmax.f32 %v3112, %v4025
        %v4305 = vmax.f32 %v3115, %v4028
        %v4306 = vmax.f32 %v3118, %v4031
        %v4307 = vmax.f32 %v3121, %v4034
        %v4308 = vmax.f32 %v3124, %v4037
        %v4309 = vmax.f32 %v3127, %v4040
        %v4310 = vmax.f32 %v3130, %v4043
        %v4311 = vmax.f32 %v3133, %v4046
        %v4312 = vmax.f32 %v3136, %v4049
        %v4313 = vmax.f32 %v3139, %v4052
        %v4314 = vmax.f32 %v3142, %v4055
        %v4315 = vmax.f32 %v3145, %v4058
        %v4316 = vmax.f32 %v4060, %v4188
        %v4317 = vmax.f32 %v4061, %v4189
        %v4318 = vmax.f32 %v4062, %v4190
        %v4319 = vmax.f32 %v4063, %v4191
        %v4320 = vmax.f32 %v4064, %v4192
        %v4321 = vmax.f32 %v4065, %v4193
        %v4322 = vmax.f32 %v4066, %v4194
        %v4323 = vmax.f32 %v4067, %v4195
        %v4324 = vmax.f32 %v4068, %v4196
        %v4325 = vmax.f32 %v4069, %v4197
        %v4326 = vmax.f32 %v4070, %v4198
        %v4327 = vmax.f32 %v4071, %v4199
        %v4328 = vmax.f32 %v4072, %v4200
        %v4329 = vmax.f32 %v4073, %v4201
        %v4330 = vmax.f32 %v4074, %v4202
        %v4331 = vmax.f32 %v4075, %v4203
        %v4332 = vmax.f32 %v4076, %v4204
        %v4333 = vmax.f32 %v4077, %v4205
        %v4334 = vmax.f32 %v4078, %v4206
        %v4335 = vmax.f32 %v4079, %v4207
        %v4336 = vmax.f32 %v4080, %v4208
        %v4337 = vmax.f32 %v4081, %v4209
        %v4338 = vmax.f32 %v4082, %v4210
        %v4339 = vmax.f32 %v4083, %v4211
        %v4340 = vmax.f32 %v4084, %v4212
        %v4341 = vmax.f32 %v4085, %v4213
        %v4342 = vmax.f32 %v4086, %v4214
        %v4343 = vmax.f32 %v4087, %v4215
        %v4344 = vmax.f32 %v4088, %v4216
        %v4345 = vmax.f32 %v4089, %v4217
        %v4346 = vmax.f32 %v4090, %v4218
        %v4347 = vmax.f32 %v4091, %v4219
        %v4348 = vmax.f32 %v4092, %v4220
        %v4349 = vmax.f32 %v4093, %v4221
        %v4350 = vmax.f32 %v4094, %v4222
        %v4351 = vmax.f32 %v4095, %v4223
        %v4352 = vmax.f32 %v4096, %v4224
        %v4353 = vmax.f32 %v4097, %v4225
        %v4354 = vmax.f32 %v4098, %v4226
        %v4355 = vmax.f32 %v4099, %v4227
        %v4356 = vmax.f32 %v4100, %v4228
        %v4357 = vmax.f32 %v4101, %v4229
        %v4358 = vmax.f32 %v4102, %v4230
        %v4359 = vmax.f32 %v4103, %v4231
        %v4360 = vmax.f32 %v4104, %v4232
        %v4361 = vmax.f32 %v4105, %v4233
        %v4362 = vmax.f32 %v4106, %v4234
        %v4363 = vmax.f32 %v4107, %v4235
        %v4364 = vmax.f32 %v4108, %v4236
        %v4365 = vmax.f32 %v4109, %v4237
        %v4366 = vmax.f32 %v4110, %v4238
        %v4367 = vmax.f32 %v4111, %v4239
        %v4368 = vmax.f32 %v4112, %v4240
        %v4369 = vmax.f32 %v4113, %v4241
        %v4370 = vmax.f32 %v4114, %v4242
        %v4371 = vmax.f32 %v4115, %v4243
        %v4372 = vmax.f32 %v4116, %v4244
        %v4373 = vmax.f32 %v4117, %v4245
        %v4374 = vmax.f32 %v4118, %v4246
        %v4375 = vmax.f32 %v4119, %v4247
        %v4376 = vmax.f32 %v4120, %v4248
        %v4377 = vmax.f32 %v4121, %v4249
        %v4378 = vmax.f32 %v4122, %v4250
        %v4379 = vmax.f32 %v4123, %v4251
        %v4380 = vmax.f32 %v4124, %v4252
        %v4381 = vmax.f32 %v4125, %v4253
        %v4382 = vmax.f32 %v4126, %v4254
        %v4383 = vmax.f32 %v4127, %v4255
        %v4384 = vmax.f32 %v4128, %v4256
        %v4385 = vmax.f32 %v4129, %v4257
        %v4386 = vmax.f32 %v4130, %v4258
        %v4387 = vmax.f32 %v4131, %v4259
        %v4388 = vmax.f32 %v4132, %v4260
        %v4389 = vmax.f32 %v4133, %v4261
        %v4390 = vmax.f32 %v4134, %v4262
        %v4391 = vmax.f32 %v4135, %v4263
        %v4392 = vmax.f32 %v4136, %v4264
        %v4393 = vmax.f32 %v4137, %v4265
        %v4394 = vmax.f32 %v4138, %v4266
        %v4395 = vmax.f32 %v4139, %v4267
        %v4396 = vmax.f32 %v4140, %v4268
        %v4397 = vmax.f32 %v4141, %v4269
        %v4398 = vmax.f32 %v4142, %v4270
        %v4399 = vmax.f32 %v4143, %v4271
        %v4400 = vmax.f32 %v4144, %v4272
        %v4401 = vmax.f32 %v4145, %v4273
        %v4402 = vmax.f32 %v4146, %v4274
        %v4403 = vmax.f32 %v4147, %v4275
        %v4404 = vmax.f32 %v4148, %v4276
        %v4405 = vmax.f32 %v4149, %v4277
        %v4406 = vmax.f32 %v4150, %v4278
        %v4407 = vmax.f32 %v4151, %v4279
        %v4408 = vmax.f32 %v4152, %v4280
        %v4409 = vmax.f32 %v4153, %v4281
        %v4410 = vmax.f32 %v4154, %v4282
        %v4411 = vmax.f32 %v4155, %v4283
        %v4412 = vmax.f32 %v4156, %v4284
        %v4413 = vmax.f32 %v4157, %v4285
        %v4414 = vmax.f32 %v4158, %v4286
        %v4415 = vmax.f32 %v4159, %v4287
        %v4416 = vmax.f32 %v4160, %v4288
        %v4417 = vmax.f32 %v4161, %v4289
        %v4418 = vmax.f32 %v4162, %v4290
        %v4419 = vmax.f32 %v4163, %v4291
        %v4420 = vmax.f32 %v4164, %v4292
        %v4421 = vmax.f32 %v4165, %v4293
        %v4422 = vmax.f32 %v4166, %v4294
        %v4423 = vmax.f32 %v4167, %v4295
        %v4424 = vmax.f32 %v4168, %v4296
        %v4425 = vmax.f32 %v4169, %v4297
        %v4426 = vmax.f32 %v4170, %v4298
        %v4427 = vmax.f32 %v4171, %v4299
        %v4428 = vmax.f32 %v4172, %v4300
        %v4429 = vmax.f32 %v4173, %v4301
        %v4430 = vmax.f32 %v4174, %v4302
        %v4431 = vmax.f32 %v4175, %v4303
        %v4432 = vmax.f32 %v4176, %v4304
        %v4433 = vmax.f32 %v4177, %v4305
        %v4434 = vmax.f32 %v4178, %v4306
        %v4435 = vmax.f32 %v4179, %v4307
        %v4436 = vmax.f32 %v4180, %v4308
        %v4437 = vmax.f32 %v4181, %v4309
        %v4438 = vmax.f32 %v4182, %v4310
        %v4439 = vmax.f32 %v4183, %v4311
        %v4440 = vmax.f32 %v4184, %v4312
        %v4441 = vmax.f32 %v4185, %v4313
        %v4442 = vmax.f32 %v4186, %v4314
        %v4443 = vmax.f32 %v4187, %v4315
        %v4444 = vld [vmem:[%s5] sm:$0x1]
        %v4446 = vperm.slane %v4444, 0
        %v4448 = vadd.f32 %v4316, %v4446
        %v4449 = vadd.f32 %v4317, %v4446
        %v4450 = vadd.f32 %v4318, %v4446
        %v4451 = vadd.f32 %v4319, %v4446
        %v4452 = vadd.f32 %v4320, %v4446
        %v4453 = vadd.f32 %v4321, %v4446
        %v4454 = vadd.f32 %v4322, %v4446
        %v4455 = vadd.f32 %v4323, %v4446
        %v4456 = vadd.f32 %v4324, %v4446
        %v4457 = vadd.f32 %v4325, %v4446
        %v4458 = vadd.f32 %v4326, %v4446
        %v4459 = vadd.f32 %v4327, %v4446
        %v4460 = vadd.f32 %v4328, %v4446
        %v4461 = vadd.f32 %v4329, %v4446
        %v4462 = vadd.f32 %v4330, %v4446
        %v4463 = vadd.f32 %v4331, %v4446
        %v4464 = vadd.f32 %v4332, %v4446
        %v4465 = vadd.f32 %v4333, %v4446
        %v4466 = vadd.f32 %v4334, %v4446
        %v4467 = vadd.f32 %v4335, %v4446
        %v4468 = vadd.f32 %v4336, %v4446
        %v4469 = vadd.f32 %v4337, %v4446
        %v4470 = vadd.f32 %v4338, %v4446
        %v4471 = vadd.f32 %v4339, %v4446
        %v4472 = vadd.f32 %v4340, %v4446
        %v4473 = vadd.f32 %v4341, %v4446
        %v4474 = vadd.f32 %v4342, %v4446
        %v4475 = vadd.f32 %v4343, %v4446
        %v4476 = vadd.f32 %v4344, %v4446
        %v4477 = vadd.f32 %v4345, %v4446
        %v4478 = vadd.f32 %v4346, %v4446
        %v4479 = vadd.f32 %v4347, %v4446
        %v4480 = vadd.f32 %v4348, %v4446
        %v4481 = vadd.f32 %v4349, %v4446
        %v4482 = vadd.f32 %v4350, %v4446
        %v4483 = vadd.f32 %v4351, %v4446
        %v4484 = vadd.f32 %v4352, %v4446
        %v4485 = vadd.f32 %v4353, %v4446
        %v4486 = vadd.f32 %v4354, %v4446
        %v4487 = vadd.f32 %v4355, %v4446
        %v4488 = vadd.f32 %v4356, %v4446
        %v4489 = vadd.f32 %v4357, %v4446
        %v4490 = vadd.f32 %v4358, %v4446
        %v4491 = vadd.f32 %v4359, %v4446
        %v4492 = vadd.f32 %v4360, %v4446
        %v4493 = vadd.f32 %v4361, %v4446
        %v4494 = vadd.f32 %v4362, %v4446
        %v4495 = vadd.f32 %v4363, %v4446
        %v4496 = vadd.f32 %v4364, %v4446
        %v4497 = vadd.f32 %v4365, %v4446
        %v4498 = vadd.f32 %v4366, %v4446
        %v4499 = vadd.f32 %v4367, %v4446
        %v4500 = vadd.f32 %v4368, %v4446
        %v4501 = vadd.f32 %v4369, %v4446
        %v4502 = vadd.f32 %v4370, %v4446
        %v4503 = vadd.f32 %v4371, %v4446
        %v4504 = vadd.f32 %v4372, %v4446
        %v4505 = vadd.f32 %v4373, %v4446
        %v4506 = vadd.f32 %v4374, %v4446
        %v4507 = vadd.f32 %v4375, %v4446
        %v4508 = vadd.f32 %v4376, %v4446
        %v4509 = vadd.f32 %v4377, %v4446
        %v4510 = vadd.f32 %v4378, %v4446
        %v4511 = vadd.f32 %v4379, %v4446
        %v4512 = vadd.f32 %v4380, %v4446
        %v4513 = vadd.f32 %v4381, %v4446
        %v4514 = vadd.f32 %v4382, %v4446
        %v4515 = vadd.f32 %v4383, %v4446
        %v4516 = vadd.f32 %v4384, %v4446
        %v4517 = vadd.f32 %v4385, %v4446
        %v4518 = vadd.f32 %v4386, %v4446
        %v4519 = vadd.f32 %v4387, %v4446
        %v4520 = vadd.f32 %v4388, %v4446
        %v4521 = vadd.f32 %v4389, %v4446
        %v4522 = vadd.f32 %v4390, %v4446
        %v4523 = vadd.f32 %v4391, %v4446
        %v4524 = vadd.f32 %v4392, %v4446
        %v4525 = vadd.f32 %v4393, %v4446
        %v4526 = vadd.f32 %v4394, %v4446
        %v4527 = vadd.f32 %v4395, %v4446
        %v4528 = vadd.f32 %v4396, %v4446
        %v4529 = vadd.f32 %v4397, %v4446
        %v4530 = vadd.f32 %v4398, %v4446
        %v4531 = vadd.f32 %v4399, %v4446
        %v4532 = vadd.f32 %v4400, %v4446
        %v4533 = vadd.f32 %v4401, %v4446
        %v4534 = vadd.f32 %v4402, %v4446
        %v4535 = vadd.f32 %v4403, %v4446
        %v4536 = vadd.f32 %v4404, %v4446
        %v4537 = vadd.f32 %v4405, %v4446
        %v4538 = vadd.f32 %v4406, %v4446
        %v4539 = vadd.f32 %v4407, %v4446
        %v4540 = vadd.f32 %v4408, %v4446
        %v4541 = vadd.f32 %v4409, %v4446
        %v4542 = vadd.f32 %v4410, %v4446
        %v4543 = vadd.f32 %v4411, %v4446
        %v4544 = vadd.f32 %v4412, %v4446
        %v4545 = vadd.f32 %v4413, %v4446
        %v4546 = vadd.f32 %v4414, %v4446
        %v4547 = vadd.f32 %v4415, %v4446
        %v4548 = vadd.f32 %v4416, %v4446
        %v4549 = vadd.f32 %v4417, %v4446
        %v4550 = vadd.f32 %v4418, %v4446
        %v4551 = vadd.f32 %v4419, %v4446
        %v4552 = vadd.f32 %v4420, %v4446
        %v4553 = vadd.f32 %v4421, %v4446
        %v4554 = vadd.f32 %v4422, %v4446
        %v4555 = vadd.f32 %v4423, %v4446
        %v4556 = vadd.f32 %v4424, %v4446
        %v4557 = vadd.f32 %v4425, %v4446
        %v4558 = vadd.f32 %v4426, %v4446
        %v4559 = vadd.f32 %v4427, %v4446
        %v4560 = vadd.f32 %v4428, %v4446
        %v4561 = vadd.f32 %v4429, %v4446
        %v4562 = vadd.f32 %v4430, %v4446
        %v4563 = vadd.f32 %v4431, %v4446
        %v4564 = vadd.f32 %v4432, %v4446
        %v4565 = vadd.f32 %v4433, %v4446
        %v4566 = vadd.f32 %v4434, %v4446
        %v4567 = vadd.f32 %v4435, %v4446
        %v4568 = vadd.f32 %v4436, %v4446
        %v4569 = vadd.f32 %v4437, %v4446
        %v4570 = vadd.f32 %v4438, %v4446
        %v4571 = vadd.f32 %v4439, %v4446
        %v4572 = vadd.f32 %v4440, %v4446
        %v4573 = vadd.f32 %v4441, %v4446
        %v4574 = vadd.f32 %v4442, %v4446
        %v4575 = vadd.f32 %v4443, %v4446
        %v4576 = vmax.f32 %v4448, 0.0
        %v4577 = vmax.f32 %v4449, 0.0
        %v4578 = vmax.f32 %v4450, 0.0
        %v4579 = vmax.f32 %v4451, 0.0
        %v4580 = vmax.f32 %v4452, 0.0
        %v4581 = vmax.f32 %v4453, 0.0
        %v4582 = vmax.f32 %v4454, 0.0
        %v4583 = vmax.f32 %v4455, 0.0
        %v4584 = vmax.f32 %v4456, 0.0
        %v4585 = vmax.f32 %v4457, 0.0
        %v4586 = vmax.f32 %v4458, 0.0
        %v4587 = vmax.f32 %v4459, 0.0
        %v4588 = vmax.f32 %v4460, 0.0
        %v4589 = vmax.f32 %v4461, 0.0
        %v4590 = vmax.f32 %v4462, 0.0
        %v4591 = vmax.f32 %v4463, 0.0
        %v4592 = vmax.f32 %v4464, 0.0
        %v4593 = vmax.f32 %v4465, 0.0
        %v4594 = vmax.f32 %v4466, 0.0
        %v4595 = vmax.f32 %v4467, 0.0
        %v4596 = vmax.f32 %v4468, 0.0
        %v4597 = vmax.f32 %v4469, 0.0
        %v4598 = vmax.f32 %v4470, 0.0
        %v4599 = vmax.f32 %v4471, 0.0
        %v4600 = vmax.f32 %v4472, 0.0
        %v4601 = vmax.f32 %v4473, 0.0
        %v4602 = vmax.f32 %v4474, 0.0
        %v4603 = vmax.f32 %v4475, 0.0
        %v4604 = vmax.f32 %v4476, 0.0
        %v4605 = vmax.f32 %v4477, 0.0
        %v4606 = vmax.f32 %v4478, 0.0
        %v4607 = vmax.f32 %v4479, 0.0
        %v4608 = vmax.f32 %v4480, 0.0
        %v4609 = vmax.f32 %v4481, 0.0
        %v4610 = vmax.f32 %v4482, 0.0
        %v4611 = vmax.f32 %v4483, 0.0
        %v4612 = vmax.f32 %v4484, 0.0
        %v4613 = vmax.f32 %v4485, 0.0
        %v4614 = vmax.f32 %v4486, 0.0
        %v4615 = vmax.f32 %v4487, 0.0
        %v4616 = vmax.f32 %v4488, 0.0
        %v4617 = vmax.f32 %v4489, 0.0
        %v4618 = vmax.f32 %v4490, 0.0
        %v4619 = vmax.f32 %v4491, 0.0
        %v4620 = vmax.f32 %v4492, 0.0
        %v4621 = vmax.f32 %v4493, 0.0
        %v4622 = vmax.f32 %v4494, 0.0
        %v4623 = vmax.f32 %v4495, 0.0
        %v4624 = vmax.f32 %v4496, 0.0
        %v4625 = vmax.f32 %v4497, 0.0
        %v4626 = vmax.f32 %v4498, 0.0
        %v4627 = vmax.f32 %v4499, 0.0
        %v4628 = vmax.f32 %v4500, 0.0
        %v4629 = vmax.f32 %v4501, 0.0
        %v4630 = vmax.f32 %v4502, 0.0
        %v4631 = vmax.f32 %v4503, 0.0
        %v4632 = vmax.f32 %v4504, 0.0
        %v4633 = vmax.f32 %v4505, 0.0
        %v4634 = vmax.f32 %v4506, 0.0
        %v4635 = vmax.f32 %v4507, 0.0
        %v4636 = vmax.f32 %v4508, 0.0
        %v4637 = vmax.f32 %v4509, 0.0
        %v4638 = vmax.f32 %v4510, 0.0
        %v4639 = vmax.f32 %v4511, 0.0
        %v4640 = vmax.f32 %v4512, 0.0
        %v4641 = vmax.f32 %v4513, 0.0
        %v4642 = vmax.f32 %v4514, 0.0
        %v4643 = vmax.f32 %v4515, 0.0
        %v4644 = vmax.f32 %v4516, 0.0
        %v4645 = vmax.f32 %v4517, 0.0
        %v4646 = vmax.f32 %v4518, 0.0
        %v4647 = vmax.f32 %v4519, 0.0
        %v4648 = vmax.f32 %v4520, 0.0
        %v4649 = vmax.f32 %v4521, 0.0
        %v4650 = vmax.f32 %v4522, 0.0
        %v4651 = vmax.f32 %v4523, 0.0
        %v4652 = vmax.f32 %v4524, 0.0
        %v4653 = vmax.f32 %v4525, 0.0
        %v4654 = vmax.f32 %v4526, 0.0
        %v4655 = vmax.f32 %v4527, 0.0
        %v4656 = vmax.f32 %v4528, 0.0
        %v4657 = vmax.f32 %v4529, 0.0
        %v4658 = vmax.f32 %v4530, 0.0
        %v4659 = vmax.f32 %v4531, 0.0
        %v4660 = vmax.f32 %v4532, 0.0
        %v4661 = vmax.f32 %v4533, 0.0
        %v4662 = vmax.f32 %v4534, 0.0
        %v4663 = vmax.f32 %v4535, 0.0
        %v4664 = vmax.f32 %v4536, 0.0
        %v4665 = vmax.f32 %v4537, 0.0
        %v4666 = vmax.f32 %v4538, 0.0
        %v4667 = vmax.f32 %v4539, 0.0
        %v4668 = vmax.f32 %v4540, 0.0
        %v4669 = vmax.f32 %v4541, 0.0
        %v4670 = vmax.f32 %v4542, 0.0
        %v4671 = vmax.f32 %v4543, 0.0
        %v4672 = vmax.f32 %v4544, 0.0
        %v4673 = vmax.f32 %v4545, 0.0
        %v4674 = vmax.f32 %v4546, 0.0
        %v4675 = vmax.f32 %v4547, 0.0
        %v4676 = vmax.f32 %v4548, 0.0
        %v4677 = vmax.f32 %v4549, 0.0
        %v4678 = vmax.f32 %v4550, 0.0
        %v4679 = vmax.f32 %v4551, 0.0
        %v4680 = vmax.f32 %v4552, 0.0
        %v4681 = vmax.f32 %v4553, 0.0
        %v4682 = vmax.f32 %v4554, 0.0
        %v4683 = vmax.f32 %v4555, 0.0
        %v4684 = vmax.f32 %v4556, 0.0
        %v4685 = vmax.f32 %v4557, 0.0
        %v4686 = vmax.f32 %v4558, 0.0
        %v4687 = vmax.f32 %v4559, 0.0
        %v4688 = vmax.f32 %v4560, 0.0
        %v4689 = vmax.f32 %v4561, 0.0
        %v4690 = vmax.f32 %v4562, 0.0
        %v4691 = vmax.f32 %v4563, 0.0
        %v4692 = vmax.f32 %v4564, 0.0
        %v4693 = vmax.f32 %v4565, 0.0
        %v4694 = vmax.f32 %v4566, 0.0
        %v4695 = vmax.f32 %v4567, 0.0
        %v4696 = vmax.f32 %v4568, 0.0
        %v4697 = vmax.f32 %v4569, 0.0
        %v4698 = vmax.f32 %v4570, 0.0
        %v4699 = vmax.f32 %v4571, 0.0
        %v4700 = vmax.f32 %v4572, 0.0
        %v4701 = vmax.f32 %v4573, 0.0
        %v4702 = vmax.f32 %v4574, 0.0
        %v4703 = vmax.f32 %v4575, 0.0
        %vm4704 = vcmask 80896
        %4705 = vst.msk [vmem:[%s337] sm:$0xff] %vm4704, %v4576
        %4706 = vst.msk [vmem:[%s337 + $0x8] sm:$0xff] %vm4704, %v4577
        %4707 = vst.msk [vmem:[%s337 + $0x10] sm:$0xff] %vm4704, %v4578
        %4708 = vst.msk [vmem:[%s337 + $0x18] sm:$0xff] %vm4704, %v4579
        %4709 = vst.msk [vmem:[%s337 + $0x20] sm:$0xff] %vm4704, %v4580
        %4710 = vst.msk [vmem:[%s337 + $0x28] sm:$0xff] %vm4704, %v4581
        %4711 = vst.msk [vmem:[%s337 + $0x30] sm:$0xff] %vm4704, %v4582
        %4712 = vst.msk [vmem:[%s337 + $0x38] sm:$0xff] %vm4704, %v4583
        %4713 = vst.msk [vmem:[%s337 + $0x40] sm:$0xff] %vm4704, %v4584
        %4714 = vst.msk [vmem:[%s337 + $0x48] sm:$0xff] %vm4704, %v4585
        %4715 = vst.msk [vmem:[%s337 + $0x50] sm:$0xff] %vm4704, %v4586
        %4716 = vst.msk [vmem:[%s337 + $0x58] sm:$0xff] %vm4704, %v4587
        %4717 = vst.msk [vmem:[%s337 + $0x60] sm:$0xff] %vm4704, %v4588
        %4718 = vst.msk [vmem:[%s337 + $0x68] sm:$0xff] %vm4704, %v4589
        %4719 = vst.msk [vmem:[%s337 + $0x70] sm:$0xff] %vm4704, %v4590
        %4720 = vst.msk [vmem:[%s337 + $0x78] sm:$0xff] %vm4704, %v4591
        %4721 = vst.msk [vmem:[%s337 + $0x80] sm:$0xff] %vm4704, %v4592
        %4722 = vst.msk [vmem:[%s337 + $0x88] sm:$0xff] %vm4704, %v4593
        %4723 = vst.msk [vmem:[%s337 + $0x90] sm:$0xff] %vm4704, %v4594
        %4724 = vst.msk [vmem:[%s337 + $0x98] sm:$0xff] %vm4704, %v4595
        %4725 = vst.msk [vmem:[%s337 + $0xa0] sm:$0xff] %vm4704, %v4596
        %4726 = vst.msk [vmem:[%s337 + $0xa8] sm:$0xff] %vm4704, %v4597
        %4727 = vst.msk [vmem:[%s337 + $0xb0] sm:$0xff] %vm4704, %v4598
        %4728 = vst.msk [vmem:[%s337 + $0xb8] sm:$0xff] %vm4704, %v4599
        %4729 = vst.msk [vmem:[%s337 + $0xc0] sm:$0xff] %vm4704, %v4600
        %4730 = vst.msk [vmem:[%s337 + $0xc8] sm:$0xff] %vm4704, %v4601
        %4731 = vst.msk [vmem:[%s337 + $0xd0] sm:$0xff] %vm4704, %v4602
        %4732 = vst.msk [vmem:[%s337 + $0xd8] sm:$0xff] %vm4704, %v4603
        %4733 = vst.msk [vmem:[%s337 + $0xe0] sm:$0xff] %vm4704, %v4604
        %4734 = vst.msk [vmem:[%s337 + $0xe8] sm:$0xff] %vm4704, %v4605
        %4735 = vst.msk [vmem:[%s337 + $0xf0] sm:$0xff] %vm4704, %v4606
        %4736 = vst.msk [vmem:[%s337 + $0xf8] sm:$0xff] %vm4704, %v4607
        %4737 = vst.msk [vmem:[%s337 + $0x100] sm:$0xff] %vm4704, %v4608
        %4738 = vst.msk [vmem:[%s337 + $0x108] sm:$0xff] %vm4704, %v4609
        %4739 = vst.msk [vmem:[%s337 + $0x110] sm:$0xff] %vm4704, %v4610
        %4740 = vst.msk [vmem:[%s337 + $0x118] sm:$0xff] %vm4704, %v4611
        %4741 = vst.msk [vmem:[%s337 + $0x120] sm:$0xff] %vm4704, %v4612
        %4742 = vst.msk [vmem:[%s337 + $0x128] sm:$0xff] %vm4704, %v4613
        %4743 = vst.msk [vmem:[%s337 + $0x130] sm:$0xff] %vm4704, %v4614
        %4744 = vst.msk [vmem:[%s337 + $0x138] sm:$0xff] %vm4704, %v4615
        %4745 = vst.msk [vmem:[%s337 + $0x140] sm:$0xff] %vm4704, %v4616
        %4746 = vst.msk [vmem:[%s337 + $0x148] sm:$0xff] %vm4704, %v4617
        %4747 = vst.msk [vmem:[%s337 + $0x150] sm:$0xff] %vm4704, %v4618
        %4748 = vst.msk [vmem:[%s337 + $0x158] sm:$0xff] %vm4704, %v4619
        %4749 = vst.msk [vmem:[%s337 + $0x160] sm:$0xff] %vm4704, %v4620
        %4750 = vst.msk [vmem:[%s337 + $0x168] sm:$0xff] %vm4704, %v4621
        %4751 = vst.msk [vmem:[%s337 + $0x170] sm:$0xff] %vm4704, %v4622
        %4752 = vst.msk [vmem:[%s337 + $0x178] sm:$0xff] %vm4704, %v4623
        %4753 = vst.msk [vmem:[%s337 + $0x180] sm:$0xff] %vm4704, %v4624
        %4754 = vst.msk [vmem:[%s337 + $0x188] sm:$0xff] %vm4704, %v4625
        %4755 = vst.msk [vmem:[%s337 + $0x190] sm:$0xff] %vm4704, %v4626
        %4756 = vst.msk [vmem:[%s337 + $0x198] sm:$0xff] %vm4704, %v4627
        %4757 = vst.msk [vmem:[%s337 + $0x1a0] sm:$0xff] %vm4704, %v4628
        %4758 = vst.msk [vmem:[%s337 + $0x1a8] sm:$0xff] %vm4704, %v4629
        %4759 = vst.msk [vmem:[%s337 + $0x1b0] sm:$0xff] %vm4704, %v4630
        %4760 = vst.msk [vmem:[%s337 + $0x1b8] sm:$0xff] %vm4704, %v4631
        %4761 = vst.msk [vmem:[%s337 + $0x1c0] sm:$0xff] %vm4704, %v4632
        %4762 = vst.msk [vmem:[%s337 + $0x1c8] sm:$0xff] %vm4704, %v4633
        %4763 = vst.msk [vmem:[%s337 + $0x1d0] sm:$0xff] %vm4704, %v4634
        %4764 = vst.msk [vmem:[%s337 + $0x1d8] sm:$0xff] %vm4704, %v4635
        %4765 = vst.msk [vmem:[%s337 + $0x1e0] sm:$0xff] %vm4704, %v4636
        %4766 = vst.msk [vmem:[%s337 + $0x1e8] sm:$0xff] %vm4704, %v4637
        %4767 = vst.msk [vmem:[%s337 + $0x1f0] sm:$0xff] %vm4704, %v4638
        %4768 = vst.msk [vmem:[%s337 + $0x1f8] sm:$0xff] %vm4704, %v4639
        %4769 = vst.msk [vmem:[%s337 + $0x200] sm:$0xff] %vm4704, %v4640
        %4770 = vst.msk [vmem:[%s337 + $0x208] sm:$0xff] %vm4704, %v4641
        %4771 = vst.msk [vmem:[%s337 + $0x210] sm:$0xff] %vm4704, %v4642
        %4772 = vst.msk [vmem:[%s337 + $0x218] sm:$0xff] %vm4704, %v4643
        %4773 = vst.msk [vmem:[%s337 + $0x220] sm:$0xff] %vm4704, %v4644
        %4774 = vst.msk [vmem:[%s337 + $0x228] sm:$0xff] %vm4704, %v4645
        %4775 = vst.msk [vmem:[%s337 + $0x230] sm:$0xff] %vm4704, %v4646
        %4776 = vst.msk [vmem:[%s337 + $0x238] sm:$0xff] %vm4704, %v4647
        %4777 = vst.msk [vmem:[%s337 + $0x240] sm:$0xff] %vm4704, %v4648
        %4778 = vst.msk [vmem:[%s337 + $0x248] sm:$0xff] %vm4704, %v4649
        %4779 = vst.msk [vmem:[%s337 + $0x250] sm:$0xff] %vm4704, %v4650
        %4780 = vst.msk [vmem:[%s337 + $0x258] sm:$0xff] %vm4704, %v4651
        %4781 = vst.msk [vmem:[%s337 + $0x260] sm:$0xff] %vm4704, %v4652
        %4782 = vst.msk [vmem:[%s337 + $0x268] sm:$0xff] %vm4704, %v4653
        %4783 = vst.msk [vmem:[%s337 + $0x270] sm:$0xff] %vm4704, %v4654
        %4784 = vst.msk [vmem:[%s337 + $0x278] sm:$0xff] %vm4704, %v4655
        %4785 = vst.msk [vmem:[%s337 + $0x280] sm:$0xff] %vm4704, %v4656
        %4786 = vst.msk [vmem:[%s337 + $0x288] sm:$0xff] %vm4704, %v4657
        %4787 = vst.msk [vmem:[%s337 + $0x290] sm:$0xff] %vm4704, %v4658
        %4788 = vst.msk [vmem:[%s337 + $0x298] sm:$0xff] %vm4704, %v4659
        %4789 = vst.msk [vmem:[%s337 + $0x2a0] sm:$0xff] %vm4704, %v4660
        %4790 = vst.msk [vmem:[%s337 + $0x2a8] sm:$0xff] %vm4704, %v4661
        %4791 = vst.msk [vmem:[%s337 + $0x2b0] sm:$0xff] %vm4704, %v4662
        %4792 = vst.msk [vmem:[%s337 + $0x2b8] sm:$0xff] %vm4704, %v4663
        %4793 = vst.msk [vmem:[%s337 + $0x2c0] sm:$0xff] %vm4704, %v4664
        %4794 = vst.msk [vmem:[%s337 + $0x2c8] sm:$0xff] %vm4704, %v4665
        %4795 = vst.msk [vmem:[%s337 + $0x2d0] sm:$0xff] %vm4704, %v4666
        %4796 = vst.msk [vmem:[%s337 + $0x2d8] sm:$0xff] %vm4704, %v4667
        %4797 = vst.msk [vmem:[%s337 + $0x2e0] sm:$0xff] %vm4704, %v4668
        %4798 = vst.msk [vmem:[%s337 + $0x2e8] sm:$0xff] %vm4704, %v4669
        %4799 = vst.msk [vmem:[%s337 + $0x2f0] sm:$0xff] %vm4704, %v4670
        %4800 = vst.msk [vmem:[%s337 + $0x2f8] sm:$0xff] %vm4704, %v4671
        %4801 = vst.msk [vmem:[%s337 + $0x300] sm:$0xff] %vm4704, %v4672
        %4802 = vst.msk [vmem:[%s337 + $0x308] sm:$0xff] %vm4704, %v4673
        %4803 = vst.msk [vmem:[%s337 + $0x310] sm:$0xff] %vm4704, %v4674
        %4804 = vst.msk [vmem:[%s337 + $0x318] sm:$0xff] %vm4704, %v4675
        %4805 = vst.msk [vmem:[%s337 + $0x320] sm:$0xff] %vm4704, %v4676
        %4806 = vst.msk [vmem:[%s337 + $0x328] sm:$0xff] %vm4704, %v4677
        %4807 = vst.msk [vmem:[%s337 + $0x330] sm:$0xff] %vm4704, %v4678
        %4808 = vst.msk [vmem:[%s337 + $0x338] sm:$0xff] %vm4704, %v4679
        %4809 = vst.msk [vmem:[%s337 + $0x340] sm:$0xff] %vm4704, %v4680
        %4810 = vst.msk [vmem:[%s337 + $0x348] sm:$0xff] %vm4704, %v4681
        %4811 = vst.msk [vmem:[%s337 + $0x350] sm:$0xff] %vm4704, %v4682
        %4812 = vst.msk [vmem:[%s337 + $0x358] sm:$0xff] %vm4704, %v4683
        %4813 = vst.msk [vmem:[%s337 + $0x360] sm:$0xff] %vm4704, %v4684
        %4814 = vst.msk [vmem:[%s337 + $0x368] sm:$0xff] %vm4704, %v4685
        %4815 = vst.msk [vmem:[%s337 + $0x370] sm:$0xff] %vm4704, %v4686
        %4816 = vst.msk [vmem:[%s337 + $0x378] sm:$0xff] %vm4704, %v4687
        %4817 = vst.msk [vmem:[%s337 + $0x380] sm:$0xff] %vm4704, %v4688
        %4818 = vst.msk [vmem:[%s337 + $0x388] sm:$0xff] %vm4704, %v4689
        %4819 = vst.msk [vmem:[%s337 + $0x390] sm:$0xff] %vm4704, %v4690
        %4820 = vst.msk [vmem:[%s337 + $0x398] sm:$0xff] %vm4704, %v4691
        %4821 = vst.msk [vmem:[%s337 + $0x3a0] sm:$0xff] %vm4704, %v4692
        %4822 = vst.msk [vmem:[%s337 + $0x3a8] sm:$0xff] %vm4704, %v4693
        %4823 = vst.msk [vmem:[%s337 + $0x3b0] sm:$0xff] %vm4704, %v4694
        %4824 = vst.msk [vmem:[%s337 + $0x3b8] sm:$0xff] %vm4704, %v4695
        %4825 = vst.msk [vmem:[%s337 + $0x3c0] sm:$0xff] %vm4704, %v4696
        %4826 = vst.msk [vmem:[%s337 + $0x3c8] sm:$0xff] %vm4704, %v4697
        %4827 = vst.msk [vmem:[%s337 + $0x3d0] sm:$0xff] %vm4704, %v4698
        %4828 = vst.msk [vmem:[%s337 + $0x3d8] sm:$0xff] %vm4704, %v4699
        %4829 = vst.msk [vmem:[%s337 + $0x3e0] sm:$0xff] %vm4704, %v4700
        %4830 = vst.msk [vmem:[%s337 + $0x3e8] sm:$0xff] %vm4704, %v4701
        %4831 = vst.msk [vmem:[%s337 + $0x3f0] sm:$0xff] %vm4704, %v4702
        %4832 = vst.msk [vmem:[%s337 + $0x3f8] sm:$0xff] %vm4704, %v4703
        %s4833 = sand.u32 %s171, 1
        %s4834 = sand.u32 %s171, 1
        %s4835 = smul.addr %s4834, 1024
        %s4836 = scalar_lea.vmem [#allocation2], %s4835
        // Predicated region
        $region45: #{cnn_forward.3} parent=43 // pred_check
          %p4837 = pneg %p181
        $region46: #{cnn_forward.3} parent=43 // pred_check_branch
          %4839 = sbr.rel (%p4837) target = $region48
        $region47: #{cnn_forward.3} parent=43 // pred_region
          %s4840 = smul.u32 128, %s17
          %s4841 = ssub.s32 144, %s4840
          %p4842 = scmp.lt.s32.totalorder %s4841, 128
          %s4843 = scalar_select %p4842, %s4841, 128
          %s4844 = smul.u32 8, %s4843
          %p4845 = scmp.ne.s32.totalorder 0, %s4844
          %s4846 = smul.addr %s4840, 8
          %s4847 = scalar_lea.vmem %s6, %s4846
          // Predicated region
          $region49: #{cnn_forward.3} parent=47 // pred_check
            %p4848 = pneg %p4845
          $region50: #{cnn_forward.3} parent=47 // pred_check_branch
            %4850 = sbr.rel (%p4848) target = $region52
          $region51: #{cnn_forward.3} parent=47 // pred_region
            // Predicated region
            $region53: #{cnn_forward.3} parent=51 // pred_check
              _
            $region54: #{cnn_forward.3} parent=51 // pred_check_branch
              %4852 = sbr.rel (0) target = $region56
            $region55: #{cnn_forward.3} parent=51 // pred_region
              // Predicated region
              $region75: #{cnn_forward.3} parent=55 // pred_check
                _
              $region76: #{cnn_forward.3} parent=55 // pred_check_branch
                %4964 = sbr.rel (0) target = $region78
              $region77: #{cnn_forward.3} parent=55 // pred_region
                %s4965 = sshrl.u32 %s4843, 5
                // While loop
                $region79: #{cnn_forward.3} parent=77 // loop_pre_header
                  _
                $region80: #{cnn_forward.3} parent=77 // loop_header
                  %s4967 = sphi 0, %s4969
                  %p4968 = scmp.ge.s32.totalorder %s4967, %s4965
                  %s4972 = sphi 0, %s5041
                  %s4973 = sphi %s4836, %s5044
                  %s4974 = sphi %s4847, %s5045
                $region81: #{cnn_forward.3} parent=77 // loop_header_branch
                  %4971 = sbr.rel (%p4968) target = $region85
                $region82: #{cnn_forward.3} parent=77 // loop_body
                  %v4975 = vld [vmem:[%s4973] sm:$0xff]
                  %4976 = vst [vmem:[%s4974] sm:$0xff] %v4975
                  %v4977 = vld [vmem:[%s4973 + $0x8] sm:$0xff]
                  %4978 = vst [vmem:[%s4974 + $0x8] sm:$0xff] %v4977
                  %v4979 = vld [vmem:[%s4973 + $0x10] sm:$0xff]
                  %4980 = vst [vmem:[%s4974 + $0x10] sm:$0xff] %v4979
                  %v4981 = vld [vmem:[%s4973 + $0x18] sm:$0xff]
                  %4982 = vst [vmem:[%s4974 + $0x18] sm:$0xff] %v4981
                  %v4983 = vld [vmem:[%s4973 + $0x20] sm:$0xff]
                  %4984 = vst [vmem:[%s4974 + $0x20] sm:$0xff] %v4983
                  %v4985 = vld [vmem:[%s4973 + $0x28] sm:$0xff]
                  %4986 = vst [vmem:[%s4974 + $0x28] sm:$0xff] %v4985
                  %v4987 = vld [vmem:[%s4973 + $0x30] sm:$0xff]
                  %4988 = vst [vmem:[%s4974 + $0x30] sm:$0xff] %v4987
                  %v4989 = vld [vmem:[%s4973 + $0x38] sm:$0xff]
                  %4990 = vst [vmem:[%s4974 + $0x38] sm:$0xff] %v4989
                  %v4991 = vld [vmem:[%s4973 + $0x40] sm:$0xff]
                  %4992 = vst [vmem:[%s4974 + $0x40] sm:$0xff] %v4991
                  %v4993 = vld [vmem:[%s4973 + $0x48] sm:$0xff]
                  %4994 = vst [vmem:[%s4974 + $0x48] sm:$0xff] %v4993
                  %v4995 = vld [vmem:[%s4973 + $0x50] sm:$0xff]
                  %4996 = vst [vmem:[%s4974 + $0x50] sm:$0xff] %v4995
                  %v4997 = vld [vmem:[%s4973 + $0x58] sm:$0xff]
                  %4998 = vst [vmem:[%s4974 + $0x58] sm:$0xff] %v4997
                  %v4999 = vld [vmem:[%s4973 + $0x60] sm:$0xff]
                  %5000 = vst [vmem:[%s4974 + $0x60] sm:$0xff] %v4999
                  %v5001 = vld [vmem:[%s4973 + $0x68] sm:$0xff]
                  %5002 = vst [vmem:[%s4974 + $0x68] sm:$0xff] %v5001
                  %v5003 = vld [vmem:[%s4973 + $0x70] sm:$0xff]
                  %5004 = vst [vmem:[%s4974 + $0x70] sm:$0xff] %v5003
                  %v5005 = vld [vmem:[%s4973 + $0x78] sm:$0xff]
                  %5006 = vst [vmem:[%s4974 + $0x78] sm:$0xff] %v5005
                  %v5007 = vld [vmem:[%s4973 + $0x80] sm:$0xff]
                  %5008 = vst [vmem:[%s4974 + $0x80] sm:$0xff] %v5007
                  %v5009 = vld [vmem:[%s4973 + $0x88] sm:$0xff]
                  %5010 = vst [vmem:[%s4974 + $0x88] sm:$0xff] %v5009
                  %v5011 = vld [vmem:[%s4973 + $0x90] sm:$0xff]
                  %5012 = vst [vmem:[%s4974 + $0x90] sm:$0xff] %v5011
                  %v5013 = vld [vmem:[%s4973 + $0x98] sm:$0xff]
                  %5014 = vst [vmem:[%s4974 + $0x98] sm:$0xff] %v5013
                  %v5015 = vld [vmem:[%s4973 + $0xa0] sm:$0xff]
                  %5016 = vst [vmem:[%s4974 + $0xa0] sm:$0xff] %v5015
                  %v5017 = vld [vmem:[%s4973 + $0xa8] sm:$0xff]
                  %5018 = vst [vmem:[%s4974 + $0xa8] sm:$0xff] %v5017
                  %v5019 = vld [vmem:[%s4973 + $0xb0] sm:$0xff]
                  %5020 = vst [vmem:[%s4974 + $0xb0] sm:$0xff] %v5019
                  %v5021 = vld [vmem:[%s4973 + $0xb8] sm:$0xff]
                  %5022 = vst [vmem:[%s4974 + $0xb8] sm:$0xff] %v5021
                  %v5023 = vld [vmem:[%s4973 + $0xc0] sm:$0xff]
                  %5024 = vst [vmem:[%s4974 + $0xc0] sm:$0xff] %v5023
                  %v5025 = vld [vmem:[%s4973 + $0xc8] sm:$0xff]
                  %5026 = vst [vmem:[%s4974 + $0xc8] sm:$0xff] %v5025
                  %v5027 = vld [vmem:[%s4973 + $0xd0] sm:$0xff]
                  %5028 = vst [vmem:[%s4974 + $0xd0] sm:$0xff] %v5027
                  %v5029 = vld [vmem:[%s4973 + $0xd8] sm:$0xff]
                  %5030 = vst [vmem:[%s4974 + $0xd8] sm:$0xff] %v5029
                  %v5031 = vld [vmem:[%s4973 + $0xe0] sm:$0xff]
                  %5032 = vst [vmem:[%s4974 + $0xe0] sm:$0xff] %v5031
                  %v5033 = vld [vmem:[%s4973 + $0xe8] sm:$0xff]
                  %5034 = vst [vmem:[%s4974 + $0xe8] sm:$0xff] %v5033
                  %v5035 = vld [vmem:[%s4973 + $0xf0] sm:$0xff]
                  %5036 = vst [vmem:[%s4974 + $0xf0] sm:$0xff] %v5035
                  %v5037 = vld [vmem:[%s4973 + $0xf8] sm:$0xff]
                  %5038 = vst [vmem:[%s4974 + $0xf8] sm:$0xff] %v5037
                  %s5039 = sadd.s32 1, %s4972
                  %p5040 = scmp.ge.s32.totalorder %s5039, %s4965
                  %s5041 = scalar_select %p5040, 0, %s5039
                  %s5042 = smul.u32 %s5041, 256
                  %s5043 = smul.u32 %s5041, 256
                  %s5044 = scalar_lea.vmem %s4836, %s5042 [#allocation2]
                  %s5045 = scalar_lea.vmem %s4847, %s5043
                $region83: #{cnn_forward.3} parent=77 // loop_footer
                  %s4969 = sadd.s32 %s4967, 1
                $region84: #{cnn_forward.3} parent=77 // loop_footer_branch
                  %4966 = sbr.rel target = $region80
                $region85: #{cnn_forward.3} parent=77 // loop_exit
                  _
                %s5046 = sshrl.u32 %s4843, 5
                %s5047 = sand.u32 %s4843, 31
                %s5048 = smul.u32 %s5046, 32
                %s5049 = smul.u32 8, %s5048
                %s5050 = scalar_lea.vmem %s4836, %s5049 [#allocation2]
                %s5051 = smul.u32 8, %s5048
                %s5052 = scalar_lea.vmem %s4847, %s5051
                // While loop
                $region86: #{cnn_forward.3} parent=77 // loop_pre_header
                  _
                $region87: #{cnn_forward.3} parent=77 // loop_header
                  %s5054 = sphi 0, %s5056
                  %p5055 = scmp.ge.s32.totalorder %s5054, %s5047
                  %s5059 = sphi 0, %s5066
                  %s5060 = sphi %s5050, %s5069
                  %s5061 = sphi %s5052, %s5070
                $region88: #{cnn_forward.3} parent=77 // loop_header_branch
                  %5058 = sbr.rel (%p5055) target = $region92
                $region89: #{cnn_forward.3} parent=77 // loop_body
                  %v5062 = vld [vmem:[%s5060] sm:$0xff]
                  %5063 = vst [vmem:[%s5061] sm:$0xff] %v5062
                  %s5064 = sadd.s32 1, %s5059
                  %p5065 = scmp.ge.s32.totalorder %s5064, %s5047
                  %s5066 = scalar_select %p5065, 0, %s5064
                  %s5067 = smul.u32 %s5066, 8
                  %s5068 = smul.u32 %s5066, 8
                  %s5069 = scalar_lea.vmem %s5050, %s5067 [#allocation2]
                  %s5070 = scalar_lea.vmem %s5052, %s5068
                $region90: #{cnn_forward.3} parent=77 // loop_footer
                  %s5056 = sadd.s32 %s5054, 1
                $region91: #{cnn_forward.3} parent=77 // loop_footer_branch
                  %5053 = sbr.rel target = $region87
                $region92: #{cnn_forward.3} parent=77 // loop_exit
                  _
              $region78: #{cnn_forward.3} parent=55 // pred_fallthru
                _
              // Predicated region
              $region93: #{cnn_forward.3} parent=55 // pred_check
                _
              $region94: #{cnn_forward.3} parent=55 // pred_check_branch
                %5072 = sbr.rel target = $region96
              $region95: #{cnn_forward.3} parent=55 // pred_region
                _
              $region96: #{cnn_forward.3} parent=55 // pred_fallthru
                _
            $region56: #{cnn_forward.3} parent=51 // pred_fallthru
              _
            // Predicated region
            $region57: #{cnn_forward.3} parent=51 // pred_check
              _
            $region58: #{cnn_forward.3} parent=51 // pred_check_branch
              %4854 = sbr.rel target = $region60
            $region59: #{cnn_forward.3} parent=51 // pred_region
              %s4856 = ssub.s32 256, 1
              %s4857 = sshrl.u32 %s4843, 5
              // While loop
              $region61: #{cnn_forward.3} parent=59 // loop_pre_header
                _
              $region62: #{cnn_forward.3} parent=59 // loop_header
                %s4859 = sphi 0, %s4861
                %p4860 = scmp.ge.s32.totalorder %s4859, %s4857
                %s4864 = sphi 0, %s4933
                %s4865 = sphi %s4836, %s4936
                %s4866 = sphi %s4847, %s4937
              $region63: #{cnn_forward.3} parent=59 // loop_header_branch
                %4863 = sbr.rel (%p4860) target = $region67
              $region64: #{cnn_forward.3} parent=59 // loop_body
                %v4867 = vld [vmem:[%s4865] sm:%s4856]
                %4868 = vst [vmem:[%s4866] sm:%s4856] %v4867
                %v4869 = vld [vmem:[%s4865 + $0x8] sm:%s4856]
                %4870 = vst [vmem:[%s4866 + $0x8] sm:%s4856] %v4869
                %v4871 = vld [vmem:[%s4865 + $0x10] sm:%s4856]
                %4872 = vst [vmem:[%s4866 + $0x10] sm:%s4856] %v4871
                %v4873 = vld [vmem:[%s4865 + $0x18] sm:%s4856]
                %4874 = vst [vmem:[%s4866 + $0x18] sm:%s4856] %v4873
                %v4875 = vld [vmem:[%s4865 + $0x20] sm:%s4856]
                %4876 = vst [vmem:[%s4866 + $0x20] sm:%s4856] %v4875
                %v4877 = vld [vmem:[%s4865 + $0x28] sm:%s4856]
                %4878 = vst [vmem:[%s4866 + $0x28] sm:%s4856] %v4877
                %v4879 = vld [vmem:[%s4865 + $0x30] sm:%s4856]
                %4880 = vst [vmem:[%s4866 + $0x30] sm:%s4856] %v4879
                %v4881 = vld [vmem:[%s4865 + $0x38] sm:%s4856]
                %4882 = vst [vmem:[%s4866 + $0x38] sm:%s4856] %v4881
                %v4883 = vld [vmem:[%s4865 + $0x40] sm:%s4856]
                %4884 = vst [vmem:[%s4866 + $0x40] sm:%s4856] %v4883
                %v4885 = vld [vmem:[%s4865 + $0x48] sm:%s4856]
                %4886 = vst [vmem:[%s4866 + $0x48] sm:%s4856] %v4885
                %v4887 = vld [vmem:[%s4865 + $0x50] sm:%s4856]
                %4888 = vst [vmem:[%s4866 + $0x50] sm:%s4856] %v4887
                %v4889 = vld [vmem:[%s4865 + $0x58] sm:%s4856]
                %4890 = vst [vmem:[%s4866 + $0x58] sm:%s4856] %v4889
                %v4891 = vld [vmem:[%s4865 + $0x60] sm:%s4856]
                %4892 = vst [vmem:[%s4866 + $0x60] sm:%s4856] %v4891
                %v4893 = vld [vmem:[%s4865 + $0x68] sm:%s4856]
                %4894 = vst [vmem:[%s4866 + $0x68] sm:%s4856] %v4893
                %v4895 = vld [vmem:[%s4865 + $0x70] sm:%s4856]
                %4896 = vst [vmem:[%s4866 + $0x70] sm:%s4856] %v4895
                %v4897 = vld [vmem:[%s4865 + $0x78] sm:%s4856]
                %4898 = vst [vmem:[%s4866 + $0x78] sm:%s4856] %v4897
                %v4899 = vld [vmem:[%s4865 + $0x80] sm:%s4856]
                %4900 = vst [vmem:[%s4866 + $0x80] sm:%s4856] %v4899
                %v4901 = vld [vmem:[%s4865 + $0x88] sm:%s4856]
                %4902 = vst [vmem:[%s4866 + $0x88] sm:%s4856] %v4901
                %v4903 = vld [vmem:[%s4865 + $0x90] sm:%s4856]
                %4904 = vst [vmem:[%s4866 + $0x90] sm:%s4856] %v4903
                %v4905 = vld [vmem:[%s4865 + $0x98] sm:%s4856]
                %4906 = vst [vmem:[%s4866 + $0x98] sm:%s4856] %v4905
                %v4907 = vld [vmem:[%s4865 + $0xa0] sm:%s4856]
                %4908 = vst [vmem:[%s4866 + $0xa0] sm:%s4856] %v4907
                %v4909 = vld [vmem:[%s4865 + $0xa8] sm:%s4856]
                %4910 = vst [vmem:[%s4866 + $0xa8] sm:%s4856] %v4909
                %v4911 = vld [vmem:[%s4865 + $0xb0] sm:%s4856]
                %4912 = vst [vmem:[%s4866 + $0xb0] sm:%s4856] %v4911
                %v4913 = vld [vmem:[%s4865 + $0xb8] sm:%s4856]
                %4914 = vst [vmem:[%s4866 + $0xb8] sm:%s4856] %v4913
                %v4915 = vld [vmem:[%s4865 + $0xc0] sm:%s4856]
                %4916 = vst [vmem:[%s4866 + $0xc0] sm:%s4856] %v4915
                %v4917 = vld [vmem:[%s4865 + $0xc8] sm:%s4856]
                %4918 = vst [vmem:[%s4866 + $0xc8] sm:%s4856] %v4917
                %v4919 = vld [vmem:[%s4865 + $0xd0] sm:%s4856]
                %4920 = vst [vmem:[%s4866 + $0xd0] sm:%s4856] %v4919
                %v4921 = vld [vmem:[%s4865 + $0xd8] sm:%s4856]
                %4922 = vst [vmem:[%s4866 + $0xd8] sm:%s4856] %v4921
                %v4923 = vld [vmem:[%s4865 + $0xe0] sm:%s4856]
                %4924 = vst [vmem:[%s4866 + $0xe0] sm:%s4856] %v4923
                %v4925 = vld [vmem:[%s4865 + $0xe8] sm:%s4856]
                %4926 = vst [vmem:[%s4866 + $0xe8] sm:%s4856] %v4925
                %v4927 = vld [vmem:[%s4865 + $0xf0] sm:%s4856]
                %4928 = vst [vmem:[%s4866 + $0xf0] sm:%s4856] %v4927
                %v4929 = vld [vmem:[%s4865 + $0xf8] sm:%s4856]
                %4930 = vst [vmem:[%s4866 + $0xf8] sm:%s4856] %v4929
                %s4931 = sadd.s32 1, %s4864
                %p4932 = scmp.ge.s32.totalorder %s4931, %s4857
                %s4933 = scalar_select %p4932, 0, %s4931
                %s4934 = smul.u32 %s4933, 256
                %s4935 = smul.u32 %s4933, 256
                %s4936 = scalar_lea.vmem %s4836, %s4934 [#allocation2]
                %s4937 = scalar_lea.vmem %s4847, %s4935
              $region65: #{cnn_forward.3} parent=59 // loop_footer
                %s4861 = sadd.s32 %s4859, 1
              $region66: #{cnn_forward.3} parent=59 // loop_footer_branch
                %4858 = sbr.rel target = $region62
              $region67: #{cnn_forward.3} parent=59 // loop_exit
                _
              %s4938 = sshrl.u32 %s4843, 5
              %s4939 = sand.u32 %s4843, 31
              %s4940 = smul.u32 %s4938, 32
              %s4941 = smul.u32 8, %s4940
              %s4942 = scalar_lea.vmem %s4836, %s4941 [#allocation2]
              %s4943 = smul.u32 8, %s4940
              %s4944 = scalar_lea.vmem %s4847, %s4943
              // While loop
              $region68: #{cnn_forward.3} parent=59 // loop_pre_header
                _
              $region69: #{cnn_forward.3} parent=59 // loop_header
                %s4946 = sphi 0, %s4948
                %p4947 = scmp.ge.s32.totalorder %s4946, %s4939
                %s4951 = sphi 0, %s4958
                %s4952 = sphi %s4942, %s4961
                %s4953 = sphi %s4944, %s4962
              $region70: #{cnn_forward.3} parent=59 // loop_header_branch
                %4950 = sbr.rel (%p4947) target = $region74
              $region71: #{cnn_forward.3} parent=59 // loop_body
                %v4954 = vld [vmem:[%s4952] sm:%s4856]
                %4955 = vst [vmem:[%s4953] sm:%s4856] %v4954
                %s4956 = sadd.s32 1, %s4951
                %p4957 = scmp.ge.s32.totalorder %s4956, %s4939
                %s4958 = scalar_select %p4957, 0, %s4956
                %s4959 = smul.u32 %s4958, 8
                %s4960 = smul.u32 %s4958, 8
                %s4961 = scalar_lea.vmem %s4942, %s4959 [#allocation2]
                %s4962 = scalar_lea.vmem %s4944, %s4960
              $region72: #{cnn_forward.3} parent=59 // loop_footer
                %s4948 = sadd.s32 %s4946, 1
              $region73: #{cnn_forward.3} parent=59 // loop_footer_branch
                %4945 = sbr.rel target = $region69
              $region74: #{cnn_forward.3} parent=59 // loop_exit
                _
            $region60: #{cnn_forward.3} parent=51 // pred_fallthru
              _
          $region52: #{cnn_forward.3} parent=47 // pred_fallthru
            _
          %5073 = vnop
        $region48: #{cnn_forward.3} parent=43 // pred_fallthru
          _
      $region44: #{cnn_forward.3} parent=5 // pred_fallthru
        _
      %p5074 = scmp.le.s32.totalorder 2, %s12
      // Predicated region
      $region97: #{cnn_forward.3} parent=5 // pred_check
        %p5075 = pneg %p5074
      $region98: #{cnn_forward.3} parent=5 // pred_check_branch
        %5077 = sbr.rel (%p5075) target = $region100
      $region99: #{cnn_forward.3} parent=5 // pred_region
        %s5078 = ssub.s32 %s12, 2
        // Predicated region
        $region101: #{cnn_forward.3} parent=99 // pred_check
          %p5079 = pneg %p187
        $region102: #{cnn_forward.3} parent=99 // pred_check_branch
          %5081 = sbr.rel (%p5079) target = $region104
        $region103: #{cnn_forward.3} parent=99 // pred_region
          %s5082 = sand.u32 %s172, 1
          %s5083 = sand.u32 %s172, 1
          %s5084 = smul.addr %s5083, 1024
          %s5085 = scalar_lea.vmem [#allocation2], %s5084
        $region104: #{cnn_forward.3} parent=99 // pred_fallthru
          _
      $region100: #{cnn_forward.3} parent=5 // pred_fallthru
        _
    $region6: #{cnn_forward.3} parent=1 // loop_footer
      %s16 = sadd.s32 1, %s12
    $region7: #{cnn_forward.3} parent=1 // loop_footer_branch
      %11 = sbr.rel target = $region3
    $region8: #{cnn_forward.3} parent=1 // loop_exit
      _

// kernel: cnn_forward.4
$region0: #{cnn_forward.4}
  #allocation0 [shape = 'u32[]', space=smem, size = 0x4, offset = 0x4, fixed_abs, tag = 'smem constant byte address 0x4 - core index']
  #allocation1 [shape = 'u32[72,128]{1,0:T(1,128)}', space=vmem, size = 0x9000, scoped, tag = 'internal scratch']
  %s0 = inlined_call_operand.vmem [shape: f32[128,250], index: 0, kind: input, shape index: {}]
  %s1 = inlined_call_operand.vmem [shape: f32[128,250], index: 1, kind: input, shape index: {}]
  %s2 = inlined_call_operand.vmem [shape: f32[128,250], index: 2, kind: input, shape index: {}]
  %s3 = inlined_call_operand.vmem [shape: f32[128,250], index: 3, kind: input, shape index: {}]
  %s4 = inlined_call_operand.vmem [shape: f32[250,50], index: 4, kind: input, shape index: {}]
  %s5 = inlined_call_operand.vmem [shape: f32[1,50], index: 5, kind: input, shape index: {}]
  %s6 = inlined_call_operand.vmem [shape: f32[128,50], index: 6, kind: output, shape index: {}]
  %s7 = sld [smem:[#allocation0]]
  $region34: #{cnn_forward.4} parent=0
    _
  %s9 = ssub.s32 1, %s7
  %s10 = scalar_select 0, %s9, %s7
  // Predicated region
  $region2: #{cnn_forward.4} parent=0 // pred_check
    _
  $region3: #{cnn_forward.4} parent=0 // pred_check_branch
    %12 = sbr.rel (0) target = $region5
  $region4: #{cnn_forward.4} parent=0 // pred_region
    _
  $region5: #{cnn_forward.4} parent=0 // pred_fallthru
    _
  // Predicated region
  $region6: #{cnn_forward.4} parent=0 // pred_check
    _
  $region7: #{cnn_forward.4} parent=0 // pred_check_branch
    %14 = sbr.rel (0) target = $region9
  $region8: #{cnn_forward.4} parent=0 // pred_region
    _
  $region9: #{cnn_forward.4} parent=0 // pred_fallthru
    _
  // Predicated region
  $region10: #{cnn_forward.4} parent=0 // pred_check
    _
  $region11: #{cnn_forward.4} parent=0 // pred_check_branch
    %16 = sbr.rel (0) target = $region13
  $region12: #{cnn_forward.4} parent=0 // pred_region
    _
  $region13: #{cnn_forward.4} parent=0 // pred_fallthru
    _
  // Predicated region
  $region14: #{cnn_forward.4} parent=0 // pred_check
    _
  $region15: #{cnn_forward.4} parent=0 // pred_check_branch
    %18 = sbr.rel (0) target = $region17
  $region16: #{cnn_forward.4} parent=0 // pred_region
    _
  $region17: #{cnn_forward.4} parent=0 // pred_fallthru
    _
  // Predicated region
  $region18: #{cnn_forward.4} parent=0 // pred_check
    _
  $region19: #{cnn_forward.4} parent=0 // pred_check_branch
    %20 = sbr.rel (0) target = $region21
  $region20: #{cnn_forward.4} parent=0 // pred_region
    _
  $region21: #{cnn_forward.4} parent=0 // pred_fallthru
    _
  // Predicated region
  $region22: #{cnn_forward.4} parent=0 // pred_check
    _
  $region23: #{cnn_forward.4} parent=0 // pred_check_branch
    %22 = sbr.rel (0) target = $region25
  $region24: #{cnn_forward.4} parent=0 // pred_region
    _
  $region25: #{cnn_forward.4} parent=0 // pred_fallthru
    _
  %v23 = vld [vmem:[%s4] sm:$0xff]
  %v24 = vld [vmem:[%s4 + $0x8] sm:$0xff]
  %v25 = vld [vmem:[%s4 + $0x10] sm:$0xff]
  %v26 = vld [vmem:[%s4 + $0x18] sm:$0xff]
  %v27 = vld [vmem:[%s4 + $0x20] sm:$0xff]
  %v28 = vld [vmem:[%s4 + $0x28] sm:$0xff]
  %v29 = vld [vmem:[%s4 + $0x30] sm:$0xff]
  %v30 = vld [vmem:[%s4 + $0x38] sm:$0xff]
  %v31 = vld [vmem:[%s4 + $0x40] sm:$0xff]
  %v32 = vld [vmem:[%s4 + $0x48] sm:$0xff]
  %v33 = vld [vmem:[%s4 + $0x50] sm:$0xff]
  %v34 = vld [vmem:[%s4 + $0x58] sm:$0xff]
  %v35 = vld [vmem:[%s4 + $0x60] sm:$0xff]
  %v36 = vld [vmem:[%s4 + $0x68] sm:$0xff]
  %v37 = vld [vmem:[%s4 + $0x70] sm:$0xff]
  %v38 = vld [vmem:[%s4 + $0x78] sm:$0xff]
  %v39 = vld [vmem:[%s4 + $0x80] sm:$0xff]
  %v40 = vld [vmem:[%s4 + $0x88] sm:$0xff]
  %v41 = vld [vmem:[%s4 + $0x90] sm:$0xff]
  %v42 = vld [vmem:[%s4 + $0x98] sm:$0xff]
  %v43 = vld [vmem:[%s4 + $0xa0] sm:$0xff]
  %v44 = vld [vmem:[%s4 + $0xa8] sm:$0xff]
  %v45 = vld [vmem:[%s4 + $0xb0] sm:$0xff]
  %v46 = vld [vmem:[%s4 + $0xb8] sm:$0xff]
  %v47 = vld [vmem:[%s4 + $0xc0] sm:$0xff]
  %v48 = vld [vmem:[%s4 + $0xc8] sm:$0xff]
  %v49 = vld [vmem:[%s4 + $0xd0] sm:$0xff]
  %v50 = vld [vmem:[%s4 + $0xd8] sm:$0xff]
  %v51 = vld [vmem:[%s4 + $0xe0] sm:$0xff]
  %v52 = vld [vmem:[%s4 + $0xe8] sm:$0xff]
  %v53 = vld [vmem:[%s4 + $0xf0] sm:$0xff]
  %v54 = vld [vmem:[%s4 + $0xf8] sm:$0x3]
  %v55 = vld [vmem:[%s0] sm:$0xff]
  %v56 = vld [vmem:[%s0 + $0x8] sm:$0xff]
  %v57 = vld [vmem:[%s0 + $0x10] sm:$0xff]
  %v58 = vld [vmem:[%s0 + $0x18] sm:$0xff]
  %v59 = vld [vmem:[%s0 + $0x20] sm:$0xff]
  %v60 = vld [vmem:[%s0 + $0x28] sm:$0xff]
  %v61 = vld [vmem:[%s0 + $0x30] sm:$0xff]
  %v62 = vld [vmem:[%s0 + $0x38] sm:$0xff]
  %v63 = vld [vmem:[%s0 + $0x40] sm:$0xff]
  %v64 = vld [vmem:[%s0 + $0x48] sm:$0xff]
  %v65 = vld [vmem:[%s0 + $0x50] sm:$0xff]
  %v66 = vld [vmem:[%s0 + $0x58] sm:$0xff]
  %v67 = vld [vmem:[%s0 + $0x60] sm:$0xff]
  %v68 = vld [vmem:[%s0 + $0x68] sm:$0xff]
  %v69 = vld [vmem:[%s0 + $0x70] sm:$0xff]
  %v70 = vld [vmem:[%s0 + $0x78] sm:$0xff]
  %v71 = vld [vmem:[%s0 + $0x80] sm:$0xff]
  %v72 = vld [vmem:[%s0 + $0x88] sm:$0xff]
  %v73 = vld [vmem:[%s0 + $0x90] sm:$0xff]
  %v74 = vld [vmem:[%s0 + $0x98] sm:$0xff]
  %v75 = vld [vmem:[%s0 + $0xa0] sm:$0xff]
  %v76 = vld [vmem:[%s0 + $0xa8] sm:$0xff]
  %v77 = vld [vmem:[%s0 + $0xb0] sm:$0xff]
  %v78 = vld [vmem:[%s0 + $0xb8] sm:$0xff]
  %v79 = vld [vmem:[%s0 + $0xc0] sm:$0xff]
  %v80 = vld [vmem:[%s0 + $0xc8] sm:$0xff]
  %v81 = vld [vmem:[%s0 + $0xd0] sm:$0xff]
  %v82 = vld [vmem:[%s0 + $0xd8] sm:$0xff]
  %v83 = vld [vmem:[%s0 + $0xe0] sm:$0xff]
  %v84 = vld [vmem:[%s0 + $0xe8] sm:$0xff]
  %v85 = vld [vmem:[%s0 + $0xf0] sm:$0xff]
  %v86 = vld [vmem:[%s0 + $0xf8] sm:$0xff]
  %vm87 = vcmask 998400
  %v89 = vsel %vm87, %v56, 0
  %v92 = vsel %vm87, %v58, 0
  %v95 = vsel %vm87, %v60, 0
  %v98 = vsel %vm87, %v62, 0
  %v101 = vsel %vm87, %v64, 0
  %v104 = vsel %vm87, %v66, 0
  %v107 = vsel %vm87, %v68, 0
  %v110 = vsel %vm87, %v70, 0
  %v113 = vsel %vm87, %v72, 0
  %v116 = vsel %vm87, %v74, 0
  %v119 = vsel %vm87, %v76, 0
  %v122 = vsel %vm87, %v78, 0
  %v125 = vsel %vm87, %v80, 0
  %v128 = vsel %vm87, %v82, 0
  %v131 = vsel %vm87, %v84, 0
  %v134 = vsel %vm87, %v86, 0
  %vm136 = vcmask 1041408
  %v138 = vsel %vm136, %v54, 0
  %140 = vmatpush.msra.mxu0 %v38
  %141 = vmatpush.msra.mxu0 %v37
  %142 = vmatpush.msra.mxu0 %v36
  %143 = vmatpush.msra.mxu0 %v35
  %144 = vmatpush.msra.mxu0 %v34
  %145 = vmatpush.msra.mxu0 %v33
  %146 = vmatpush.msra.mxu0 %v32
  %147 = vmatpush.msra.mxu0 %v31
  %148 = vmatpush.msra.mxu0 %v30
  %149 = vmatpush.msra.mxu0 %v29
  %150 = vmatpush.msra.mxu0 %v28
  %151 = vmatpush.msra.mxu0 %v27
  %152 = vmatpush.msra.mxu0 %v26
  %153 = vmatpush.msra.mxu0 %v25
  %154 = vmatpush.msra.mxu0 %v24
  %155 = vmatpush.msra.mxu0 %v23
  %156 = vmatmul.f32.gmra.mxu0 %v55
  %v157 = vpop.f32.mrf.mxu0
  %v158 = vadd.f32 0.0, %v157
  %159 = vmatmul.f32.gmra.mxu0 %v57
  %v160 = vpop.f32.mrf.mxu0
  %v161 = vadd.f32 0.0, %v160
  %162 = vmatmul.f32.gmra.mxu0 %v59
  %v163 = vpop.f32.mrf.mxu0
  %v164 = vadd.f32 0.0, %v163
  %165 = vmatmul.f32.gmra.mxu0 %v61
  %v166 = vpop.f32.mrf.mxu0
  %v167 = vadd.f32 0.0, %v166
  %168 = vmatmul.f32.gmra.mxu0 %v63
  %v169 = vpop.f32.mrf.mxu0
  %v170 = vadd.f32 0.0, %v169
  %171 = vmatmul.f32.gmra.mxu0 %v65
  %v172 = vpop.f32.mrf.mxu0
  %v173 = vadd.f32 0.0, %v172
  %174 = vmatmul.f32.gmra.mxu0 %v67
  %v175 = vpop.f32.mrf.mxu0
  %v176 = vadd.f32 0.0, %v175
  %177 = vmatmul.f32.gmra.mxu0 %v69
  %v178 = vpop.f32.mrf.mxu0
  %v179 = vadd.f32 0.0, %v178
  %180 = vmatmul.f32.gmra.mxu0 %v71
  %v181 = vpop.f32.mrf.mxu0
  %v182 = vadd.f32 0.0, %v181
  %183 = vmatmul.f32.gmra.mxu0 %v73
  %v184 = vpop.f32.mrf.mxu0
  %v185 = vadd.f32 0.0, %v184
  %186 = vmatmul.f32.gmra.mxu0 %v75
  %v187 = vpop.f32.mrf.mxu0
  %v188 = vadd.f32 0.0, %v187
  %189 = vmatmul.f32.gmra.mxu0 %v77
  %v190 = vpop.f32.mrf.mxu0
  %v191 = vadd.f32 0.0, %v190
  %192 = vmatmul.f32.gmra.mxu0 %v79
  %v193 = vpop.f32.mrf.mxu0
  %v194 = vadd.f32 0.0, %v193
  %195 = vmatmul.f32.gmra.mxu0 %v81
  %v196 = vpop.f32.mrf.mxu0
  %v197 = vadd.f32 0.0, %v196
  %198 = vmatmul.f32.gmra.mxu0 %v83
  %v199 = vpop.f32.mrf.mxu0
  %v200 = vadd.f32 0.0, %v199
  %201 = vmatmul.f32.gmra.mxu0 %v85
  %v202 = vpop.f32.mrf.mxu0
  %v203 = vadd.f32 0.0, %v202
  %204 = vdwg.mxu0
  %205 = vmatpush.msra.mxu0 %v138
  %206 = vmatpush.msra.mxu0 %v53
  %207 = vmatpush.msra.mxu0 %v52
  %208 = vmatpush.msra.mxu0 %v51
  %209 = vmatpush.msra.mxu0 %v50
  %210 = vmatpush.msra.mxu0 %v49
  %211 = vmatpush.msra.mxu0 %v48
  %212 = vmatpush.msra.mxu0 %v47
  %213 = vmatpush.msra.mxu0 %v46
  %214 = vmatpush.msra.mxu0 %v45
  %215 = vmatpush.msra.mxu0 %v44
  %216 = vmatpush.msra.mxu0 %v43
  %217 = vmatpush.msra.mxu0 %v42
  %218 = vmatpush.msra.mxu0 %v41
  %219 = vmatpush.msra.mxu0 %v40
  %220 = vmatpush.msra.mxu0 %v39
  %221 = vmatmul.f32.gmra.mxu0 %v89
  %v222 = vpop.f32.mrf.mxu0
  %v223 = vadd.f32 %v158, %v222
  %224 = vmatmul.f32.gmra.mxu0 %v92
  %v225 = vpop.f32.mrf.mxu0
  %v226 = vadd.f32 %v161, %v225
  %227 = vmatmul.f32.gmra.mxu0 %v95
  %v228 = vpop.f32.mrf.mxu0
  %v229 = vadd.f32 %v164, %v228
  %230 = vmatmul.f32.gmra.mxu0 %v98
  %v231 = vpop.f32.mrf.mxu0
  %v232 = vadd.f32 %v167, %v231
  %233 = vmatmul.f32.gmra.mxu0 %v101
  %v234 = vpop.f32.mrf.mxu0
  %v235 = vadd.f32 %v170, %v234
  %236 = vmatmul.f32.gmra.mxu0 %v104
  %v237 = vpop.f32.mrf.mxu0
  %v238 = vadd.f32 %v173, %v237
  %239 = vmatmul.f32.gmra.mxu0 %v107
  %v240 = vpop.f32.mrf.mxu0
  %v241 = vadd.f32 %v176, %v240
  %242 = vmatmul.f32.gmra.mxu0 %v110
  %v243 = vpop.f32.mrf.mxu0
  %v244 = vadd.f32 %v179, %v243
  %245 = vmatmul.f32.gmra.mxu0 %v113
  %v246 = vpop.f32.mrf.mxu0
  %v247 = vadd.f32 %v182, %v246
  %248 = vmatmul.f32.gmra.mxu0 %v116
  %v249 = vpop.f32.mrf.mxu0
  %v250 = vadd.f32 %v185, %v249
  %251 = vmatmul.f32.gmra.mxu0 %v119
  %v252 = vpop.f32.mrf.mxu0
  %v253 = vadd.f32 %v188, %v252
  %254 = vmatmul.f32.gmra.mxu0 %v122
  %v255 = vpop.f32.mrf.mxu0
  %v256 = vadd.f32 %v191, %v255
  %257 = vmatmul.f32.gmra.mxu0 %v125
  %v258 = vpop.f32.mrf.mxu0
  %v259 = vadd.f32 %v194, %v258
  %260 = vmatmul.f32.gmra.mxu0 %v128
  %v261 = vpop.f32.mrf.mxu0
  %v262 = vadd.f32 %v197, %v261
  %263 = vmatmul.f32.gmra.mxu0 %v131
  %v264 = vpop.f32.mrf.mxu0
  %v265 = vadd.f32 %v200, %v264
  %266 = vmatmul.f32.gmra.mxu0 %v134
  %v267 = vpop.f32.mrf.mxu0
  %v268 = vadd.f32 %v203, %v267
  %269 = vdwg.mxu0
  %v270 = vld [vmem:[%s1] sm:$0xff]
  %v271 = vld [vmem:[%s1 + $0x8] sm:$0xff]
  %v272 = vld [vmem:[%s1 + $0x10] sm:$0xff]
  %v273 = vld [vmem:[%s1 + $0x18] sm:$0xff]
  %v274 = vld [vmem:[%s1 + $0x20] sm:$0xff]
  %v275 = vld [vmem:[%s1 + $0x28] sm:$0xff]
  %v276 = vld [vmem:[%s1 + $0x30] sm:$0xff]
  %v277 = vld [vmem:[%s1 + $0x38] sm:$0xff]
  %v278 = vld [vmem:[%s1 + $0x40] sm:$0xff]
  %v279 = vld [vmem:[%s1 + $0x48] sm:$0xff]
  %v280 = vld [vmem:[%s1 + $0x50] sm:$0xff]
  %v281 = vld [vmem:[%s1 + $0x58] sm:$0xff]
  %v282 = vld [vmem:[%s1 + $0x60] sm:$0xff]
  %v283 = vld [vmem:[%s1 + $0x68] sm:$0xff]
  %v284 = vld [vmem:[%s1 + $0x70] sm:$0xff]
  %v285 = vld [vmem:[%s1 + $0x78] sm:$0xff]
  %v286 = vld [vmem:[%s1 + $0x80] sm:$0xff]
  %v287 = vld [vmem:[%s1 + $0x88] sm:$0xff]
  %v288 = vld [vmem:[%s1 + $0x90] sm:$0xff]
  %v289 = vld [vmem:[%s1 + $0x98] sm:$0xff]
  %v290 = vld [vmem:[%s1 + $0xa0] sm:$0xff]
  %v291 = vld [vmem:[%s1 + $0xa8] sm:$0xff]
  %v292 = vld [vmem:[%s1 + $0xb0] sm:$0xff]
  %v293 = vld [vmem:[%s1 + $0xb8] sm:$0xff]
  %v294 = vld [vmem:[%s1 + $0xc0] sm:$0xff]
  %v295 = vld [vmem:[%s1 + $0xc8] sm:$0xff]
  %v296 = vld [vmem:[%s1 + $0xd0] sm:$0xff]
  %v297 = vld [vmem:[%s1 + $0xd8] sm:$0xff]
  %v298 = vld [vmem:[%s1 + $0xe0] sm:$0xff]
  %v299 = vld [vmem:[%s1 + $0xe8] sm:$0xff]
  %v300 = vld [vmem:[%s1 + $0xf0] sm:$0xff]
  %v301 = vld [vmem:[%s1 + $0xf8] sm:$0xff]
  %v303 = vsel %vm87, %v271, 0
  %v306 = vsel %vm87, %v273, 0
  %v309 = vsel %vm87, %v275, 0
  %v312 = vsel %vm87, %v277, 0
  %v315 = vsel %vm87, %v279, 0
  %v318 = vsel %vm87, %v281, 0
  %v321 = vsel %vm87, %v283, 0
  %v324 = vsel %vm87, %v285, 0
  %v327 = vsel %vm87, %v287, 0
  %v330 = vsel %vm87, %v289, 0
  %v333 = vsel %vm87, %v291, 0
  %v336 = vsel %vm87, %v293, 0
  %v339 = vsel %vm87, %v295, 0
  %v342 = vsel %vm87, %v297, 0
  %v345 = vsel %vm87, %v299, 0
  %v348 = vsel %vm87, %v301, 0
  %350 = vmatpush.msra.mxu0 %v38
  %351 = vmatpush.msra.mxu0 %v37
  %352 = vmatpush.msra.mxu0 %v36
  %353 = vmatpush.msra.mxu0 %v35
  %354 = vmatpush.msra.mxu0 %v34
  %355 = vmatpush.msra.mxu0 %v33
  %356 = vmatpush.msra.mxu0 %v32
  %357 = vmatpush.msra.mxu0 %v31
  %358 = vmatpush.msra.mxu0 %v30
  %359 = vmatpush.msra.mxu0 %v29
  %360 = vmatpush.msra.mxu0 %v28
  %361 = vmatpush.msra.mxu0 %v27
  %362 = vmatpush.msra.mxu0 %v26
  %363 = vmatpush.msra.mxu0 %v25
  %364 = vmatpush.msra.mxu0 %v24
  %365 = vmatpush.msra.mxu0 %v23
  %366 = vmatmul.f32.gmra.mxu0 %v270
  %v367 = vpop.f32.mrf.mxu0
  %v368 = vadd.f32 0.0, %v367
  %369 = vmatmul.f32.gmra.mxu0 %v272
  %v370 = vpop.f32.mrf.mxu0
  %v371 = vadd.f32 0.0, %v370
  %372 = vmatmul.f32.gmra.mxu0 %v274
  %v373 = vpop.f32.mrf.mxu0
  %v374 = vadd.f32 0.0, %v373
  %375 = vmatmul.f32.gmra.mxu0 %v276
  %v376 = vpop.f32.mrf.mxu0
  %v377 = vadd.f32 0.0, %v376
  %378 = vmatmul.f32.gmra.mxu0 %v278
  %v379 = vpop.f32.mrf.mxu0
  %v380 = vadd.f32 0.0, %v379
  %381 = vmatmul.f32.gmra.mxu0 %v280
  %v382 = vpop.f32.mrf.mxu0
  %v383 = vadd.f32 0.0, %v382
  %384 = vmatmul.f32.gmra.mxu0 %v282
  %v385 = vpop.f32.mrf.mxu0
  %v386 = vadd.f32 0.0, %v385
  %387 = vmatmul.f32.gmra.mxu0 %v284
  %v388 = vpop.f32.mrf.mxu0
  %v389 = vadd.f32 0.0, %v388
  %390 = vmatmul.f32.gmra.mxu0 %v286
  %v391 = vpop.f32.mrf.mxu0
  %v392 = vadd.f32 0.0, %v391
  %393 = vmatmul.f32.gmra.mxu0 %v288
  %v394 = vpop.f32.mrf.mxu0
  %v395 = vadd.f32 0.0, %v394
  %396 = vmatmul.f32.gmra.mxu0 %v290
  %v397 = vpop.f32.mrf.mxu0
  %v398 = vadd.f32 0.0, %v397
  %399 = vmatmul.f32.gmra.mxu0 %v292
  %v400 = vpop.f32.mrf.mxu0
  %v401 = vadd.f32 0.0, %v400
  %402 = vmatmul.f32.gmra.mxu0 %v294
  %v403 = vpop.f32.mrf.mxu0
  %v404 = vadd.f32 0.0, %v403
  %405 = vmatmul.f32.gmra.mxu0 %v296
  %v406 = vpop.f32.mrf.mxu0
  %v407 = vadd.f32 0.0, %v406
  %408 = vmatmul.f32.gmra.mxu0 %v298
  %v409 = vpop.f32.mrf.mxu0
  %v410 = vadd.f32 0.0, %v409
  %411 = vmatmul.f32.gmra.mxu0 %v300
  %v412 = vpop.f32.mrf.mxu0
  %v413 = vadd.f32 0.0, %v412
  %414 = vdwg.mxu0
  %415 = vmatpush.msra.mxu0 %v138
  %416 = vmatpush.msra.mxu0 %v53
  %417 = vmatpush.msra.mxu0 %v52
  %418 = vmatpush.msra.mxu0 %v51
  %419 = vmatpush.msra.mxu0 %v50
  %420 = vmatpush.msra.mxu0 %v49
  %421 = vmatpush.msra.mxu0 %v48
  %422 = vmatpush.msra.mxu0 %v47
  %423 = vmatpush.msra.mxu0 %v46
  %424 = vmatpush.msra.mxu0 %v45
  %425 = vmatpush.msra.mxu0 %v44
  %426 = vmatpush.msra.mxu0 %v43
  %427 = vmatpush.msra.mxu0 %v42
  %428 = vmatpush.msra.mxu0 %v41
  %429 = vmatpush.msra.mxu0 %v40
  %430 = vmatpush.msra.mxu0 %v39
  %431 = vmatmul.f32.gmra.mxu0 %v303
  %v432 = vpop.f32.mrf.mxu0
  %v433 = vadd.f32 %v368, %v432
  %434 = vmatmul.f32.gmra.mxu0 %v306
  %v435 = vpop.f32.mrf.mxu0
  %v436 = vadd.f32 %v371, %v435
  %437 = vmatmul.f32.gmra.mxu0 %v309
  %v438 = vpop.f32.mrf.mxu0
  %v439 = vadd.f32 %v374, %v438
  %440 = vmatmul.f32.gmra.mxu0 %v312
  %v441 = vpop.f32.mrf.mxu0
  %v442 = vadd.f32 %v377, %v441
  %443 = vmatmul.f32.gmra.mxu0 %v315
  %v444 = vpop.f32.mrf.mxu0
  %v445 = vadd.f32 %v380, %v444
  %446 = vmatmul.f32.gmra.mxu0 %v318
  %v447 = vpop.f32.mrf.mxu0
  %v448 = vadd.f32 %v383, %v447
  %449 = vmatmul.f32.gmra.mxu0 %v321
  %v450 = vpop.f32.mrf.mxu0
  %v451 = vadd.f32 %v386, %v450
  %452 = vmatmul.f32.gmra.mxu0 %v324
  %v453 = vpop.f32.mrf.mxu0
  %v454 = vadd.f32 %v389, %v453
  %455 = vmatmul.f32.gmra.mxu0 %v327
  %v456 = vpop.f32.mrf.mxu0
  %v457 = vadd.f32 %v392, %v456
  %458 = vmatmul.f32.gmra.mxu0 %v330
  %v459 = vpop.f32.mrf.mxu0
  %v460 = vadd.f32 %v395, %v459
  %461 = vmatmul.f32.gmra.mxu0 %v333
  %v462 = vpop.f32.mrf.mxu0
  %v463 = vadd.f32 %v398, %v462
  %464 = vmatmul.f32.gmra.mxu0 %v336
  %v465 = vpop.f32.mrf.mxu0
  %v466 = vadd.f32 %v401, %v465
  %467 = vmatmul.f32.gmra.mxu0 %v339
  %v468 = vpop.f32.mrf.mxu0
  %v469 = vadd.f32 %v404, %v468
  %470 = vmatmul.f32.gmra.mxu0 %v342
  %v471 = vpop.f32.mrf.mxu0
  %v472 = vadd.f32 %v407, %v471
  %473 = vmatmul.f32.gmra.mxu0 %v345
  %v474 = vpop.f32.mrf.mxu0
  %v475 = vadd.f32 %v410, %v474
  %476 = vmatmul.f32.gmra.mxu0 %v348
  %v477 = vpop.f32.mrf.mxu0
  %v478 = vadd.f32 %v413, %v477
  %479 = vdwg.mxu0
  %v480 = vld [vmem:[%s2] sm:$0xff]
  %v481 = vld [vmem:[%s2 + $0x8] sm:$0xff]
  %v482 = vld [vmem:[%s2 + $0x10] sm:$0xff]
  %v483 = vld [vmem:[%s2 + $0x18] sm:$0xff]
  %v484 = vld [vmem:[%s2 + $0x20] sm:$0xff]
  %v485 = vld [vmem:[%s2 + $0x28] sm:$0xff]
  %v486 = vld [vmem:[%s2 + $0x30] sm:$0xff]
  %v487 = vld [vmem:[%s2 + $0x38] sm:$0xff]
  %v488 = vld [vmem:[%s2 + $0x40] sm:$0xff]
  %v489 = vld [vmem:[%s2 + $0x48] sm:$0xff]
  %v490 = vld [vmem:[%s2 + $0x50] sm:$0xff]
  %v491 = vld [vmem:[%s2 + $0x58] sm:$0xff]
  %v492 = vld [vmem:[%s2 + $0x60] sm:$0xff]
  %v493 = vld [vmem:[%s2 + $0x68] sm:$0xff]
  %v494 = vld [vmem:[%s2 + $0x70] sm:$0xff]
  %v495 = vld [vmem:[%s2 + $0x78] sm:$0xff]
  %v496 = vld [vmem:[%s2 + $0x80] sm:$0xff]
  %v497 = vld [vmem:[%s2 + $0x88] sm:$0xff]
  %v498 = vld [vmem:[%s2 + $0x90] sm:$0xff]
  %v499 = vld [vmem:[%s2 + $0x98] sm:$0xff]
  %v500 = vld [vmem:[%s2 + $0xa0] sm:$0xff]
  %v501 = vld [vmem:[%s2 + $0xa8] sm:$0xff]
  %v502 = vld [vmem:[%s2 + $0xb0] sm:$0xff]
  %v503 = vld [vmem:[%s2 + $0xb8] sm:$0xff]
  %v504 = vld [vmem:[%s2 + $0xc0] sm:$0xff]
  %v505 = vld [vmem:[%s2 + $0xc8] sm:$0xff]
  %v506 = vld [vmem:[%s2 + $0xd0] sm:$0xff]
  %v507 = vld [vmem:[%s2 + $0xd8] sm:$0xff]
  %v508 = vld [vmem:[%s2 + $0xe0] sm:$0xff]
  %v509 = vld [vmem:[%s2 + $0xe8] sm:$0xff]
  %v510 = vld [vmem:[%s2 + $0xf0] sm:$0xff]
  %v511 = vld [vmem:[%s2 + $0xf8] sm:$0xff]
  %v513 = vsel %vm87, %v481, 0
  %v516 = vsel %vm87, %v483, 0
  %v519 = vsel %vm87, %v485, 0
  %v522 = vsel %vm87, %v487, 0
  %v525 = vsel %vm87, %v489, 0
  %v528 = vsel %vm87, %v491, 0
  %v531 = vsel %vm87, %v493, 0
  %v534 = vsel %vm87, %v495, 0
  %v537 = vsel %vm87, %v497, 0
  %v540 = vsel %vm87, %v499, 0
  %v543 = vsel %vm87, %v501, 0
  %v546 = vsel %vm87, %v503, 0
  %v549 = vsel %vm87, %v505, 0
  %v552 = vsel %vm87, %v507, 0
  %v555 = vsel %vm87, %v509, 0
  %v558 = vsel %vm87, %v511, 0
  %560 = vmatpush.msra.mxu0 %v38
  %561 = vmatpush.msra.mxu0 %v37
  %562 = vmatpush.msra.mxu0 %v36
  %563 = vmatpush.msra.mxu0 %v35
  %564 = vmatpush.msra.mxu0 %v34
  %565 = vmatpush.msra.mxu0 %v33
  %566 = vmatpush.msra.mxu0 %v32
  %567 = vmatpush.msra.mxu0 %v31
  %568 = vmatpush.msra.mxu0 %v30
  %569 = vmatpush.msra.mxu0 %v29
  %570 = vmatpush.msra.mxu0 %v28
  %571 = vmatpush.msra.mxu0 %v27
  %572 = vmatpush.msra.mxu0 %v26
  %573 = vmatpush.msra.mxu0 %v25
  %574 = vmatpush.msra.mxu0 %v24
  %575 = vmatpush.msra.mxu0 %v23
  %576 = vmatmul.f32.gmra.mxu0 %v480
  %v577 = vpop.f32.mrf.mxu0
  %v578 = vadd.f32 0.0, %v577
  %579 = vmatmul.f32.gmra.mxu0 %v482
  %v580 = vpop.f32.mrf.mxu0
  %v581 = vadd.f32 0.0, %v580
  %582 = vmatmul.f32.gmra.mxu0 %v484
  %v583 = vpop.f32.mrf.mxu0
  %v584 = vadd.f32 0.0, %v583
  %585 = vmatmul.f32.gmra.mxu0 %v486
  %v586 = vpop.f32.mrf.mxu0
  %v587 = vadd.f32 0.0, %v586
  %588 = vmatmul.f32.gmra.mxu0 %v488
  %v589 = vpop.f32.mrf.mxu0
  %v590 = vadd.f32 0.0, %v589
  %591 = vmatmul.f32.gmra.mxu0 %v490
  %v592 = vpop.f32.mrf.mxu0
  %v593 = vadd.f32 0.0, %v592
  %594 = vmatmul.f32.gmra.mxu0 %v492
  %v595 = vpop.f32.mrf.mxu0
  %v596 = vadd.f32 0.0, %v595
  %597 = vmatmul.f32.gmra.mxu0 %v494
  %v598 = vpop.f32.mrf.mxu0
  %v599 = vadd.f32 0.0, %v598
  %600 = vmatmul.f32.gmra.mxu0 %v496
  %v601 = vpop.f32.mrf.mxu0
  %v602 = vadd.f32 0.0, %v601
  %603 = vmatmul.f32.gmra.mxu0 %v498
  %v604 = vpop.f32.mrf.mxu0
  %v605 = vadd.f32 0.0, %v604
  %606 = vmatmul.f32.gmra.mxu0 %v500
  %v607 = vpop.f32.mrf.mxu0
  %v608 = vadd.f32 0.0, %v607
  %609 = vmatmul.f32.gmra.mxu0 %v502
  %v610 = vpop.f32.mrf.mxu0
  %v611 = vadd.f32 0.0, %v610
  %612 = vmatmul.f32.gmra.mxu0 %v504
  %v613 = vpop.f32.mrf.mxu0
  %v614 = vadd.f32 0.0, %v613
  %615 = vmatmul.f32.gmra.mxu0 %v506
  %v616 = vpop.f32.mrf.mxu0
  %v617 = vadd.f32 0.0, %v616
  %618 = vmatmul.f32.gmra.mxu0 %v508
  %v619 = vpop.f32.mrf.mxu0
  %v620 = vadd.f32 0.0, %v619
  %621 = vmatmul.f32.gmra.mxu0 %v510
  %v622 = vpop.f32.mrf.mxu0
  %v623 = vadd.f32 0.0, %v622
  %624 = vdwg.mxu0
  %625 = vmatpush.msra.mxu0 %v138
  %626 = vmatpush.msra.mxu0 %v53
  %627 = vmatpush.msra.mxu0 %v52
  %628 = vmatpush.msra.mxu0 %v51
  %629 = vmatpush.msra.mxu0 %v50
  %630 = vmatpush.msra.mxu0 %v49
  %631 = vmatpush.msra.mxu0 %v48
  %632 = vmatpush.msra.mxu0 %v47
  %633 = vmatpush.msra.mxu0 %v46
  %634 = vmatpush.msra.mxu0 %v45
  %635 = vmatpush.msra.mxu0 %v44
  %636 = vmatpush.msra.mxu0 %v43
  %637 = vmatpush.msra.mxu0 %v42
  %638 = vmatpush.msra.mxu0 %v41
  %639 = vmatpush.msra.mxu0 %v40
  %640 = vmatpush.msra.mxu0 %v39
  %641 = vmatmul.f32.gmra.mxu0 %v513
  %v642 = vpop.f32.mrf.mxu0
  %v643 = vadd.f32 %v578, %v642
  %644 = vmatmul.f32.gmra.mxu0 %v516
  %v645 = vpop.f32.mrf.mxu0
  %v646 = vadd.f32 %v581, %v645
  %647 = vmatmul.f32.gmra.mxu0 %v519
  %v648 = vpop.f32.mrf.mxu0
  %v649 = vadd.f32 %v584, %v648
  %650 = vmatmul.f32.gmra.mxu0 %v522
  %v651 = vpop.f32.mrf.mxu0
  %v652 = vadd.f32 %v587, %v651
  %653 = vmatmul.f32.gmra.mxu0 %v525
  %v654 = vpop.f32.mrf.mxu0
  %v655 = vadd.f32 %v590, %v654
  %656 = vmatmul.f32.gmra.mxu0 %v528
  %v657 = vpop.f32.mrf.mxu0
  %v658 = vadd.f32 %v593, %v657
  %659 = vmatmul.f32.gmra.mxu0 %v531
  %v660 = vpop.f32.mrf.mxu0
  %v661 = vadd.f32 %v596, %v660
  %662 = vmatmul.f32.gmra.mxu0 %v534
  %v663 = vpop.f32.mrf.mxu0
  %v664 = vadd.f32 %v599, %v663
  %665 = vmatmul.f32.gmra.mxu0 %v537
  %v666 = vpop.f32.mrf.mxu0
  %v667 = vadd.f32 %v602, %v666
  %668 = vmatmul.f32.gmra.mxu0 %v540
  %v669 = vpop.f32.mrf.mxu0
  %v670 = vadd.f32 %v605, %v669
  %671 = vmatmul.f32.gmra.mxu0 %v543
  %v672 = vpop.f32.mrf.mxu0
  %v673 = vadd.f32 %v608, %v672
  %674 = vmatmul.f32.gmra.mxu0 %v546
  %v675 = vpop.f32.mrf.mxu0
  %v676 = vadd.f32 %v611, %v675
  %677 = vmatmul.f32.gmra.mxu0 %v549
  %v678 = vpop.f32.mrf.mxu0
  %v679 = vadd.f32 %v614, %v678
  %680 = vmatmul.f32.gmra.mxu0 %v552
  %v681 = vpop.f32.mrf.mxu0
  %v682 = vadd.f32 %v617, %v681
  %683 = vmatmul.f32.gmra.mxu0 %v555
  %v684 = vpop.f32.mrf.mxu0
  %v685 = vadd.f32 %v620, %v684
  %686 = vmatmul.f32.gmra.mxu0 %v558
  %v687 = vpop.f32.mrf.mxu0
  %v688 = vadd.f32 %v623, %v687
  %689 = vdwg.mxu0
  %v690 = vld [vmem:[%s3] sm:$0xff]
  %v691 = vld [vmem:[%s3 + $0x8] sm:$0xff]
  %v692 = vld [vmem:[%s3 + $0x10] sm:$0xff]
  %v693 = vld [vmem:[%s3 + $0x18] sm:$0xff]
  %v694 = vld [vmem:[%s3 + $0x20] sm:$0xff]
  %v695 = vld [vmem:[%s3 + $0x28] sm:$0xff]
  %v696 = vld [vmem:[%s3 + $0x30] sm:$0xff]
  %v697 = vld [vmem:[%s3 + $0x38] sm:$0xff]
  %v698 = vld [vmem:[%s3 + $0x40] sm:$0xff]
  %v699 = vld [vmem:[%s3 + $0x48] sm:$0xff]
  %v700 = vld [vmem:[%s3 + $0x50] sm:$0xff]
  %v701 = vld [vmem:[%s3 + $0x58] sm:$0xff]
  %v702 = vld [vmem:[%s3 + $0x60] sm:$0xff]
  %v703 = vld [vmem:[%s3 + $0x68] sm:$0xff]
  %v704 = vld [vmem:[%s3 + $0x70] sm:$0xff]
  %v705 = vld [vmem:[%s3 + $0x78] sm:$0xff]
  %v706 = vld [vmem:[%s3 + $0x80] sm:$0xff]
  %v707 = vld [vmem:[%s3 + $0x88] sm:$0xff]
  %v708 = vld [vmem:[%s3 + $0x90] sm:$0xff]
  %v709 = vld [vmem:[%s3 + $0x98] sm:$0xff]
  %v710 = vld [vmem:[%s3 + $0xa0] sm:$0xff]
  %v711 = vld [vmem:[%s3 + $0xa8] sm:$0xff]
  %v712 = vld [vmem:[%s3 + $0xb0] sm:$0xff]
  %v713 = vld [vmem:[%s3 + $0xb8] sm:$0xff]
  %v714 = vld [vmem:[%s3 + $0xc0] sm:$0xff]
  %v715 = vld [vmem:[%s3 + $0xc8] sm:$0xff]
  %v716 = vld [vmem:[%s3 + $0xd0] sm:$0xff]
  %v717 = vld [vmem:[%s3 + $0xd8] sm:$0xff]
  %v718 = vld [vmem:[%s3 + $0xe0] sm:$0xff]
  %v719 = vld [vmem:[%s3 + $0xe8] sm:$0xff]
  %v720 = vld [vmem:[%s3 + $0xf0] sm:$0xff]
  %v721 = vld [vmem:[%s3 + $0xf8] sm:$0xff]
  %v723 = vsel %vm87, %v691, 0
  %v726 = vsel %vm87, %v693, 0
  %v729 = vsel %vm87, %v695, 0
  %v732 = vsel %vm87, %v697, 0
  %v735 = vsel %vm87, %v699, 0
  %v738 = vsel %vm87, %v701, 0
  %v741 = vsel %vm87, %v703, 0
  %v744 = vsel %vm87, %v705, 0
  %v747 = vsel %vm87, %v707, 0
  %v750 = vsel %vm87, %v709, 0
  %v753 = vsel %vm87, %v711, 0
  %v756 = vsel %vm87, %v713, 0
  %v759 = vsel %vm87, %v715, 0
  %v762 = vsel %vm87, %v717, 0
  %v765 = vsel %vm87, %v719, 0
  %v768 = vsel %vm87, %v721, 0
  %770 = vmatpush.msra.mxu0 %v38
  %771 = vmatpush.msra.mxu0 %v37
  %772 = vmatpush.msra.mxu0 %v36
  %773 = vmatpush.msra.mxu0 %v35
  %774 = vmatpush.msra.mxu0 %v34
  %775 = vmatpush.msra.mxu0 %v33
  %776 = vmatpush.msra.mxu0 %v32
  %777 = vmatpush.msra.mxu0 %v31
  %778 = vmatpush.msra.mxu0 %v30
  %779 = vmatpush.msra.mxu0 %v29
  %780 = vmatpush.msra.mxu0 %v28
  %781 = vmatpush.msra.mxu0 %v27
  %782 = vmatpush.msra.mxu0 %v26
  %783 = vmatpush.msra.mxu0 %v25
  %784 = vmatpush.msra.mxu0 %v24
  %785 = vmatpush.msra.mxu0 %v23
  %786 = vmatmul.f32.gmra.mxu0 %v690
  %v787 = vpop.f32.mrf.mxu0
  %v788 = vadd.f32 0.0, %v787
  %789 = vmatmul.f32.gmra.mxu0 %v692
  %v790 = vpop.f32.mrf.mxu0
  %v791 = vadd.f32 0.0, %v790
  %792 = vmatmul.f32.gmra.mxu0 %v694
  %v793 = vpop.f32.mrf.mxu0
  %v794 = vadd.f32 0.0, %v793
  %795 = vmatmul.f32.gmra.mxu0 %v696
  %v796 = vpop.f32.mrf.mxu0
  %v797 = vadd.f32 0.0, %v796
  %798 = vmatmul.f32.gmra.mxu0 %v698
  %v799 = vpop.f32.mrf.mxu0
  %v800 = vadd.f32 0.0, %v799
  %801 = vmatmul.f32.gmra.mxu0 %v700
  %v802 = vpop.f32.mrf.mxu0
  %v803 = vadd.f32 0.0, %v802
  %804 = vmatmul.f32.gmra.mxu0 %v702
  %v805 = vpop.f32.mrf.mxu0
  %v806 = vadd.f32 0.0, %v805
  %807 = vmatmul.f32.gmra.mxu0 %v704
  %v808 = vpop.f32.mrf.mxu0
  %v809 = vadd.f32 0.0, %v808
  %810 = vmatmul.f32.gmra.mxu0 %v706
  %v811 = vpop.f32.mrf.mxu0
  %v812 = vadd.f32 0.0, %v811
  %813 = vmatmul.f32.gmra.mxu0 %v708
  %v814 = vpop.f32.mrf.mxu0
  %v815 = vadd.f32 0.0, %v814
  %816 = vmatmul.f32.gmra.mxu0 %v710
  %v817 = vpop.f32.mrf.mxu0
  %v818 = vadd.f32 0.0, %v817
  %819 = vmatmul.f32.gmra.mxu0 %v712
  %v820 = vpop.f32.mrf.mxu0
  %v821 = vadd.f32 0.0, %v820
  %822 = vmatmul.f32.gmra.mxu0 %v714
  %v823 = vpop.f32.mrf.mxu0
  %v824 = vadd.f32 0.0, %v823
  %825 = vmatmul.f32.gmra.mxu0 %v716
  %v826 = vpop.f32.mrf.mxu0
  %v827 = vadd.f32 0.0, %v826
  %828 = vmatmul.f32.gmra.mxu0 %v718
  %v829 = vpop.f32.mrf.mxu0
  %v830 = vadd.f32 0.0, %v829
  %831 = vmatmul.f32.gmra.mxu0 %v720
  %v832 = vpop.f32.mrf.mxu0
  %v833 = vadd.f32 0.0, %v832
  %834 = vdwg.mxu0
  %835 = vmatpush.msra.mxu0 %v138
  %836 = vmatpush.msra.mxu0 %v53
  %837 = vmatpush.msra.mxu0 %v52
  %838 = vmatpush.msra.mxu0 %v51
  %839 = vmatpush.msra.mxu0 %v50
  %840 = vmatpush.msra.mxu0 %v49
  %841 = vmatpush.msra.mxu0 %v48
  %842 = vmatpush.msra.mxu0 %v47
  %843 = vmatpush.msra.mxu0 %v46
  %844 = vmatpush.msra.mxu0 %v45
  %845 = vmatpush.msra.mxu0 %v44
  %846 = vmatpush.msra.mxu0 %v43
  %847 = vmatpush.msra.mxu0 %v42
  %848 = vmatpush.msra.mxu0 %v41
  %849 = vmatpush.msra.mxu0 %v40
  %850 = vmatpush.msra.mxu0 %v39
  %851 = vmatmul.f32.gmra.mxu0 %v723
  %v852 = vpop.f32.mrf.mxu0
  %v853 = vadd.f32 %v788, %v852
  %854 = vmatmul.f32.gmra.mxu0 %v726
  %v855 = vpop.f32.mrf.mxu0
  %v856 = vadd.f32 %v791, %v855
  %857 = vmatmul.f32.gmra.mxu0 %v729
  %v858 = vpop.f32.mrf.mxu0
  %v859 = vadd.f32 %v794, %v858
  %860 = vmatmul.f32.gmra.mxu0 %v732
  %v861 = vpop.f32.mrf.mxu0
  %v862 = vadd.f32 %v797, %v861
  %863 = vmatmul.f32.gmra.mxu0 %v735
  %v864 = vpop.f32.mrf.mxu0
  %v865 = vadd.f32 %v800, %v864
  %866 = vmatmul.f32.gmra.mxu0 %v738
  %v867 = vpop.f32.mrf.mxu0
  %v868 = vadd.f32 %v803, %v867
  %869 = vmatmul.f32.gmra.mxu0 %v741
  %v870 = vpop.f32.mrf.mxu0
  %v871 = vadd.f32 %v806, %v870
  %872 = vmatmul.f32.gmra.mxu0 %v744
  %v873 = vpop.f32.mrf.mxu0
  %v874 = vadd.f32 %v809, %v873
  %875 = vmatmul.f32.gmra.mxu0 %v747
  %v876 = vpop.f32.mrf.mxu0
  %v877 = vadd.f32 %v812, %v876
  %878 = vmatmul.f32.gmra.mxu0 %v750
  %v879 = vpop.f32.mrf.mxu0
  %v880 = vadd.f32 %v815, %v879
  %881 = vmatmul.f32.gmra.mxu0 %v753
  %v882 = vpop.f32.mrf.mxu0
  %v883 = vadd.f32 %v818, %v882
  %884 = vmatmul.f32.gmra.mxu0 %v756
  %v885 = vpop.f32.mrf.mxu0
  %v886 = vadd.f32 %v821, %v885
  %887 = vmatmul.f32.gmra.mxu0 %v759
  %v888 = vpop.f32.mrf.mxu0
  %v889 = vadd.f32 %v824, %v888
  %890 = vmatmul.f32.gmra.mxu0 %v762
  %v891 = vpop.f32.mrf.mxu0
  %v892 = vadd.f32 %v827, %v891
  %893 = vmatmul.f32.gmra.mxu0 %v765
  %v894 = vpop.f32.mrf.mxu0
  %v895 = vadd.f32 %v830, %v894
  %896 = vmatmul.f32.gmra.mxu0 %v768
  %v897 = vpop.f32.mrf.mxu0
  %v898 = vadd.f32 %v833, %v897
  %899 = vdwg.mxu0
  %v900 = vmax.f32 %v223, %v433
  %v901 = vmax.f32 %v226, %v436
  %v902 = vmax.f32 %v229, %v439
  %v903 = vmax.f32 %v232, %v442
  %v904 = vmax.f32 %v235, %v445
  %v905 = vmax.f32 %v238, %v448
  %v906 = vmax.f32 %v241, %v451
  %v907 = vmax.f32 %v244, %v454
  %v908 = vmax.f32 %v247, %v457
  %v909 = vmax.f32 %v250, %v460
  %v910 = vmax.f32 %v253, %v463
  %v911 = vmax.f32 %v256, %v466
  %v912 = vmax.f32 %v259, %v469
  %v913 = vmax.f32 %v262, %v472
  %v914 = vmax.f32 %v265, %v475
  %v915 = vmax.f32 %v268, %v478
  %v916 = vmax.f32 %v643, %v853
  %v917 = vmax.f32 %v646, %v856
  %v918 = vmax.f32 %v649, %v859
  %v919 = vmax.f32 %v652, %v862
  %v920 = vmax.f32 %v655, %v865
  %v921 = vmax.f32 %v658, %v868
  %v922 = vmax.f32 %v661, %v871
  %v923 = vmax.f32 %v664, %v874
  %v924 = vmax.f32 %v667, %v877
  %v925 = vmax.f32 %v670, %v880
  %v926 = vmax.f32 %v673, %v883
  %v927 = vmax.f32 %v676, %v886
  %v928 = vmax.f32 %v679, %v889
  %v929 = vmax.f32 %v682, %v892
  %v930 = vmax.f32 %v685, %v895
  %v931 = vmax.f32 %v688, %v898
  %v932 = vmax.f32 %v900, %v916
  %v933 = vmax.f32 %v901, %v917
  %v934 = vmax.f32 %v902, %v918
  %v935 = vmax.f32 %v903, %v919
  %v936 = vmax.f32 %v904, %v920
  %v937 = vmax.f32 %v905, %v921
  %v938 = vmax.f32 %v906, %v922
  %v939 = vmax.f32 %v907, %v923
  %v940 = vmax.f32 %v908, %v924
  %v941 = vmax.f32 %v909, %v925
  %v942 = vmax.f32 %v910, %v926
  %v943 = vmax.f32 %v911, %v927
  %v944 = vmax.f32 %v912, %v928
  %v945 = vmax.f32 %v913, %v929
  %v946 = vmax.f32 %v914, %v930
  %v947 = vmax.f32 %v915, %v931
  %v948 = vld [vmem:[%s5] sm:$0x1]
  %v950 = vperm.slane %v948, 0
  %v952 = vadd.f32 %v932, %v950
  %v953 = vadd.f32 %v933, %v950
  %v954 = vadd.f32 %v934, %v950
  %v955 = vadd.f32 %v935, %v950
  %v956 = vadd.f32 %v936, %v950
  %v957 = vadd.f32 %v937, %v950
  %v958 = vadd.f32 %v938, %v950
  %v959 = vadd.f32 %v939, %v950
  %v960 = vadd.f32 %v940, %v950
  %v961 = vadd.f32 %v941, %v950
  %v962 = vadd.f32 %v942, %v950
  %v963 = vadd.f32 %v943, %v950
  %v964 = vadd.f32 %v944, %v950
  %v965 = vadd.f32 %v945, %v950
  %v966 = vadd.f32 %v946, %v950
  %v967 = vadd.f32 %v947, %v950
  %v968 = vmax.f32 %v952, 0.0
  %v969 = vmax.f32 %v953, 0.0
  %v970 = vmax.f32 %v954, 0.0
  %v971 = vmax.f32 %v955, 0.0
  %v972 = vmax.f32 %v956, 0.0
  %v973 = vmax.f32 %v957, 0.0
  %v974 = vmax.f32 %v958, 0.0
  %v975 = vmax.f32 %v959, 0.0
  %v976 = vmax.f32 %v960, 0.0
  %v977 = vmax.f32 %v961, 0.0
  %v978 = vmax.f32 %v962, 0.0
  %v979 = vmax.f32 %v963, 0.0
  %v980 = vmax.f32 %v964, 0.0
  %v981 = vmax.f32 %v965, 0.0
  %v982 = vmax.f32 %v966, 0.0
  %v983 = vmax.f32 %v967, 0.0
  %vm984 = vcmask 408576
  %985 = vst.msk [vmem:[%s6] sm:$0xff] %vm984, %v968
  %986 = vst.msk [vmem:[%s6 + $0x8] sm:$0xff] %vm984, %v969
  %987 = vst.msk [vmem:[%s6 + $0x10] sm:$0xff] %vm984, %v970
  %988 = vst.msk [vmem:[%s6 + $0x18] sm:$0xff] %vm984, %v971
  %989 = vst.msk [vmem:[%s6 + $0x20] sm:$0xff] %vm984, %v972
  %990 = vst.msk [vmem:[%s6 + $0x28] sm:$0xff] %vm984, %v973
  %991 = vst.msk [vmem:[%s6 + $0x30] sm:$0xff] %vm984, %v974
  %992 = vst.msk [vmem:[%s6 + $0x38] sm:$0xff] %vm984, %v975
  %993 = vst.msk [vmem:[%s6 + $0x40] sm:$0xff] %vm984, %v976
  %994 = vst.msk [vmem:[%s6 + $0x48] sm:$0xff] %vm984, %v977
  %995 = vst.msk [vmem:[%s6 + $0x50] sm:$0xff] %vm984, %v978
  %996 = vst.msk [vmem:[%s6 + $0x58] sm:$0xff] %vm984, %v979
  %997 = vst.msk [vmem:[%s6 + $0x60] sm:$0xff] %vm984, %v980
  %998 = vst.msk [vmem:[%s6 + $0x68] sm:$0xff] %vm984, %v981
  %999 = vst.msk [vmem:[%s6 + $0x70] sm:$0xff] %vm984, %v982
  %1000 = vst.msk [vmem:[%s6 + $0x78] sm:$0xff] %vm984, %v983
  // Predicated region
  $region26: #{cnn_forward.4} parent=0 // pred_check
    _
  $region27: #{cnn_forward.4} parent=0 // pred_check_branch
    %1002 = sbr.rel (0) target = $region29
  $region28: #{cnn_forward.4} parent=0 // pred_region
    _
  $region29: #{cnn_forward.4} parent=0 // pred_fallthru
    _
  // Predicated region
  $region30: #{cnn_forward.4} parent=0 // pred_check
    _
  $region31: #{cnn_forward.4} parent=0 // pred_check_branch
    %1004 = sbr.rel (0) target = $region33
  $region32: #{cnn_forward.4} parent=0 // pred_region
    _
  $region33: #{cnn_forward.4} parent=0 // pred_fallthru
    _

// kernel: cnn_forward.5
$region0: #{cnn_forward.5}
  #allocation0 [shape = 'u32[]', space=smem, size = 0x4, offset = 0x4, fixed_abs, tag = 'smem constant byte address 0x4 - core index']
  #allocation1 [shape = 'u32[72,128]{1,0:T(1,128)}', space=vmem, size = 0x9000, scoped, tag = 'internal scratch']
  %s0 = inlined_call_operand.vmem [shape: f32[8,800], index: 0, kind: input, shape index: {}]
  %s1 = inlined_call_operand.vmem [shape: f32[800,256], index: 1, kind: input, shape index: {}]
  %s2 = inlined_call_operand.vmem [shape: f32[1,256], index: 2, kind: input, shape index: {}]
  %s3 = inlined_call_operand.vmem [shape: f32[256,10], index: 3, kind: input, shape index: {}]
  %s4 = inlined_call_operand.vmem [shape: f32[1,10], index: 4, kind: input, shape index: {}]
  %s5 = inlined_call_operand.hbm [shape: f32[8,10], index: 5, kind: output, shape index: {}]
  %s6 = sld [smem:[#allocation0]]
  $region30: #{cnn_forward.5} parent=0
    _
  %s8 = ssub.s32 1, %s6
  %s9 = scalar_select 0, %s8, %s6
  $region1: #{cnn_forward.5} parent=0
    #allocation2 [shape = 'u8[4096]{0}', space=vmem, size = 0x1000, scoped, tag = 'output window, operand 0, single buffered']
    #allocation3 [shape = 's32[1]{0}', space=sflag, size = 0x4, scoped, tag = 'scoped memory for cnn_forward.5']
    %10 = vsyncpa [#allocation3], 0
    // Predicated region
    $region2: #{cnn_forward.5} parent=1 // pred_check
      _
    $region3: #{cnn_forward.5} parent=1 // pred_check_branch
      %12 = sbr.rel (0) target = $region5
    $region4: #{cnn_forward.5} parent=1 // pred_region
      _
    $region5: #{cnn_forward.5} parent=1 // pred_fallthru
      _
    // Predicated region
    $region6: #{cnn_forward.5} parent=1 // pred_check
      _
    $region7: #{cnn_forward.5} parent=1 // pred_check_branch
      %14 = sbr.rel (0) target = $region9
    $region8: #{cnn_forward.5} parent=1 // pred_region
      _
    $region9: #{cnn_forward.5} parent=1 // pred_fallthru
      _
    // Predicated region
    $region10: #{cnn_forward.5} parent=1 // pred_check
      _
    $region11: #{cnn_forward.5} parent=1 // pred_check_branch
      %16 = sbr.rel (0) target = $region13
    $region12: #{cnn_forward.5} parent=1 // pred_region
      _
    $region13: #{cnn_forward.5} parent=1 // pred_fallthru
      _
    // Predicated region
    $region14: #{cnn_forward.5} parent=1 // pred_check
      _
    $region15: #{cnn_forward.5} parent=1 // pred_check_branch
      %18 = sbr.rel (0) target = $region17
    $region16: #{cnn_forward.5} parent=1 // pred_region
      _
    $region17: #{cnn_forward.5} parent=1 // pred_fallthru
      _
    // Predicated region
    $region18: #{cnn_forward.5} parent=1 // pred_check
      _
    $region19: #{cnn_forward.5} parent=1 // pred_check_branch
      %20 = sbr.rel (0) target = $region21
    $region20: #{cnn_forward.5} parent=1 // pred_region
      _
    $region21: #{cnn_forward.5} parent=1 // pred_fallthru
      _
    %v21 = vld [vmem:[%s0] sm:$0xff]
    %v22 = vld [vmem:[%s0 + $0x8] sm:$0xff]
    %v23 = vld [vmem:[%s0 + $0x10] sm:$0xff]
    %v24 = vld [vmem:[%s0 + $0x18] sm:$0xff]
    %v25 = vld [vmem:[%s0 + $0x20] sm:$0xff]
    %v26 = vld [vmem:[%s0 + $0x28] sm:$0xff]
    %v27 = vld [vmem:[%s0 + $0x30] sm:$0xff]
    %v28 = vld [vmem:[%s1] sm:$0xff]
    %v29 = vld [vmem:[%s1 + $0x8] sm:$0xff]
    %v30 = vld [vmem:[%s1 + $0x10] sm:$0xff]
    %v31 = vld [vmem:[%s1 + $0x18] sm:$0xff]
    %v32 = vld [vmem:[%s1 + $0x20] sm:$0xff]
    %v33 = vld [vmem:[%s1 + $0x28] sm:$0xff]
    %v34 = vld [vmem:[%s1 + $0x30] sm:$0xff]
    %v35 = vld [vmem:[%s1 + $0x38] sm:$0xff]
    %v36 = vld [vmem:[%s1 + $0x40] sm:$0xff]
    %v37 = vld [vmem:[%s1 + $0x48] sm:$0xff]
    %v38 = vld [vmem:[%s1 + $0x50] sm:$0xff]
    %v39 = vld [vmem:[%s1 + $0x58] sm:$0xff]
    %v40 = vld [vmem:[%s1 + $0x60] sm:$0xff]
    %v41 = vld [vmem:[%s1 + $0x68] sm:$0xff]
    %v42 = vld [vmem:[%s1 + $0x70] sm:$0xff]
    %v43 = vld [vmem:[%s1 + $0x78] sm:$0xff]
    %v44 = vld [vmem:[%s1 + $0x80] sm:$0xff]
    %v45 = vld [vmem:[%s1 + $0x88] sm:$0xff]
    %v46 = vld [vmem:[%s1 + $0x90] sm:$0xff]
    %v47 = vld [vmem:[%s1 + $0x98] sm:$0xff]
    %v48 = vld [vmem:[%s1 + $0xa0] sm:$0xff]
    %v49 = vld [vmem:[%s1 + $0xa8] sm:$0xff]
    %v50 = vld [vmem:[%s1 + $0xb0] sm:$0xff]
    %v51 = vld [vmem:[%s1 + $0xb8] sm:$0xff]
    %v52 = vld [vmem:[%s1 + $0xc0] sm:$0xff]
    %v53 = vld [vmem:[%s1 + $0xc8] sm:$0xff]
    %v54 = vld [vmem:[%s1 + $0xd0] sm:$0xff]
    %v55 = vld [vmem:[%s1 + $0xd8] sm:$0xff]
    %v56 = vld [vmem:[%s1 + $0xe0] sm:$0xff]
    %v57 = vld [vmem:[%s1 + $0xe8] sm:$0xff]
    %v58 = vld [vmem:[%s1 + $0xf0] sm:$0xff]
    %v59 = vld [vmem:[%s1 + $0xf8] sm:$0xff]
    %v60 = vld [vmem:[%s1 + $0x100] sm:$0xff]
    %v61 = vld [vmem:[%s1 + $0x108] sm:$0xff]
    %v62 = vld [vmem:[%s1 + $0x110] sm:$0xff]
    %v63 = vld [vmem:[%s1 + $0x118] sm:$0xff]
    %v64 = vld [vmem:[%s1 + $0x120] sm:$0xff]
    %v65 = vld [vmem:[%s1 + $0x128] sm:$0xff]
    %v66 = vld [vmem:[%s1 + $0x130] sm:$0xff]
    %v67 = vld [vmem:[%s1 + $0x138] sm:$0xff]
    %v68 = vld [vmem:[%s1 + $0x140] sm:$0xff]
    %v69 = vld [vmem:[%s1 + $0x148] sm:$0xff]
    %v70 = vld [vmem:[%s1 + $0x150] sm:$0xff]
    %v71 = vld [vmem:[%s1 + $0x158] sm:$0xff]
    %v72 = vld [vmem:[%s1 + $0x160] sm:$0xff]
    %v73 = vld [vmem:[%s1 + $0x168] sm:$0xff]
    %v74 = vld [vmem:[%s1 + $0x170] sm:$0xff]
    %v75 = vld [vmem:[%s1 + $0x178] sm:$0xff]
    %v76 = vld [vmem:[%s1 + $0x180] sm:$0xff]
    %v77 = vld [vmem:[%s1 + $0x188] sm:$0xff]
    %v78 = vld [vmem:[%s1 + $0x190] sm:$0xff]
    %v79 = vld [vmem:[%s1 + $0x198] sm:$0xff]
    %v80 = vld [vmem:[%s1 + $0x1a0] sm:$0xff]
    %v81 = vld [vmem:[%s1 + $0x1a8] sm:$0xff]
    %v82 = vld [vmem:[%s1 + $0x1b0] sm:$0xff]
    %v83 = vld [vmem:[%s1 + $0x1b8] sm:$0xff]
    %v84 = vld [vmem:[%s1 + $0x1c0] sm:$0xff]
    %v85 = vld [vmem:[%s1 + $0x1c8] sm:$0xff]
    %v86 = vld [vmem:[%s1 + $0x1d0] sm:$0xff]
    %v87 = vld [vmem:[%s1 + $0x1d8] sm:$0xff]
    %v88 = vld [vmem:[%s1 + $0x1e0] sm:$0xff]
    %v89 = vld [vmem:[%s1 + $0x1e8] sm:$0xff]
    %v90 = vld [vmem:[%s1 + $0x1f0] sm:$0xff]
    %v91 = vld [vmem:[%s1 + $0x1f8] sm:$0xff]
    %v92 = vld [vmem:[%s1 + $0x200] sm:$0xff]
    %v93 = vld [vmem:[%s1 + $0x208] sm:$0xff]
    %v94 = vld [vmem:[%s1 + $0x210] sm:$0xff]
    %v95 = vld [vmem:[%s1 + $0x218] sm:$0xff]
    %v96 = vld [vmem:[%s1 + $0x220] sm:$0xff]
    %v97 = vld [vmem:[%s1 + $0x228] sm:$0xff]
    %v98 = vld [vmem:[%s1 + $0x230] sm:$0xff]
    %v99 = vld [vmem:[%s1 + $0x238] sm:$0xff]
    %v100 = vld [vmem:[%s1 + $0x240] sm:$0xff]
    %v101 = vld [vmem:[%s1 + $0x248] sm:$0xff]
    %v102 = vld [vmem:[%s1 + $0x250] sm:$0xff]
    %v103 = vld [vmem:[%s1 + $0x258] sm:$0xff]
    %v104 = vld [vmem:[%s1 + $0x260] sm:$0xff]
    %v105 = vld [vmem:[%s1 + $0x268] sm:$0xff]
    %v106 = vld [vmem:[%s1 + $0x270] sm:$0xff]
    %v107 = vld [vmem:[%s1 + $0x278] sm:$0xff]
    %v108 = vld [vmem:[%s1 + $0x280] sm:$0xff]
    %v109 = vld [vmem:[%s1 + $0x288] sm:$0xff]
    %v110 = vld [vmem:[%s1 + $0x290] sm:$0xff]
    %v111 = vld [vmem:[%s1 + $0x298] sm:$0xff]
    %v112 = vld [vmem:[%s1 + $0x2a0] sm:$0xff]
    %v113 = vld [vmem:[%s1 + $0x2a8] sm:$0xff]
    %v114 = vld [vmem:[%s1 + $0x2b0] sm:$0xff]
    %v115 = vld [vmem:[%s1 + $0x2b8] sm:$0xff]
    %v116 = vld [vmem:[%s1 + $0x2c0] sm:$0xff]
    %v117 = vld [vmem:[%s1 + $0x2c8] sm:$0xff]
    %v118 = vld [vmem:[%s1 + $0x2d0] sm:$0xff]
    %v119 = vld [vmem:[%s1 + $0x2d8] sm:$0xff]
    %v120 = vld [vmem:[%s1 + $0x2e0] sm:$0xff]
    %v121 = vld [vmem:[%s1 + $0x2e8] sm:$0xff]
    %v122 = vld [vmem:[%s1 + $0x2f0] sm:$0xff]
    %v123 = vld [vmem:[%s1 + $0x2f8] sm:$0xff]
    %v124 = vld [vmem:[%s1 + $0x300] sm:$0xff]
    %v125 = vld [vmem:[%s1 + $0x308] sm:$0xff]
    %v126 = vld [vmem:[%s1 + $0x310] sm:$0xff]
    %v127 = vld [vmem:[%s1 + $0x318] sm:$0xff]
    %v128 = vld [vmem:[%s1 + $0x320] sm:$0xff]
    %v129 = vld [vmem:[%s1 + $0x328] sm:$0xff]
    %v130 = vld [vmem:[%s1 + $0x330] sm:$0xff]
    %v131 = vld [vmem:[%s1 + $0x338] sm:$0xff]
    %v132 = vld [vmem:[%s1 + $0x340] sm:$0xff]
    %v133 = vld [vmem:[%s1 + $0x348] sm:$0xff]
    %v134 = vld [vmem:[%s1 + $0x350] sm:$0xff]
    %v135 = vld [vmem:[%s1 + $0x358] sm:$0xff]
    %v136 = vld [vmem:[%s1 + $0x360] sm:$0xff]
    %v137 = vld [vmem:[%s1 + $0x368] sm:$0xff]
    %v138 = vld [vmem:[%s1 + $0x370] sm:$0xff]
    %v139 = vld [vmem:[%s1 + $0x378] sm:$0xff]
    %v140 = vld [vmem:[%s1 + $0x380] sm:$0xff]
    %v141 = vld [vmem:[%s1 + $0x388] sm:$0xff]
    %v142 = vld [vmem:[%s1 + $0x390] sm:$0xff]
    %v143 = vld [vmem:[%s1 + $0x398] sm:$0xff]
    %v144 = vld [vmem:[%s1 + $0x3a0] sm:$0xff]
    %v145 = vld [vmem:[%s1 + $0x3a8] sm:$0xff]
    %v146 = vld [vmem:[%s1 + $0x3b0] sm:$0xff]
    %v147 = vld [vmem:[%s1 + $0x3b8] sm:$0xff]
    %v148 = vld [vmem:[%s1 + $0x3c0] sm:$0xff]
    %v149 = vld [vmem:[%s1 + $0x3c8] sm:$0xff]
    %v150 = vld [vmem:[%s1 + $0x3d0] sm:$0xff]
    %v151 = vld [vmem:[%s1 + $0x3d8] sm:$0xff]
    %v152 = vld [vmem:[%s1 + $0x3e0] sm:$0xff]
    %v153 = vld [vmem:[%s1 + $0x3e8] sm:$0xff]
    %v154 = vld [vmem:[%s1 + $0x3f0] sm:$0xff]
    %v155 = vld [vmem:[%s1 + $0x3f8] sm:$0xff]
    %v156 = vld [vmem:[%s1 + $0x400] sm:$0xff]
    %v157 = vld [vmem:[%s1 + $0x408] sm:$0xff]
    %v158 = vld [vmem:[%s1 + $0x410] sm:$0xff]
    %v159 = vld [vmem:[%s1 + $0x418] sm:$0xff]
    %v160 = vld [vmem:[%s1 + $0x420] sm:$0xff]
    %v161 = vld [vmem:[%s1 + $0x428] sm:$0xff]
    %v162 = vld [vmem:[%s1 + $0x430] sm:$0xff]
    %v163 = vld [vmem:[%s1 + $0x438] sm:$0xff]
    %v164 = vld [vmem:[%s1 + $0x440] sm:$0xff]
    %v165 = vld [vmem:[%s1 + $0x448] sm:$0xff]
    %v166 = vld [vmem:[%s1 + $0x450] sm:$0xff]
    %v167 = vld [vmem:[%s1 + $0x458] sm:$0xff]
    %v168 = vld [vmem:[%s1 + $0x460] sm:$0xff]
    %v169 = vld [vmem:[%s1 + $0x468] sm:$0xff]
    %v170 = vld [vmem:[%s1 + $0x470] sm:$0xff]
    %v171 = vld [vmem:[%s1 + $0x478] sm:$0xff]
    %v172 = vld [vmem:[%s1 + $0x480] sm:$0xff]
    %v173 = vld [vmem:[%s1 + $0x488] sm:$0xff]
    %v174 = vld [vmem:[%s1 + $0x490] sm:$0xff]
    %v175 = vld [vmem:[%s1 + $0x498] sm:$0xff]
    %v176 = vld [vmem:[%s1 + $0x4a0] sm:$0xff]
    %v177 = vld [vmem:[%s1 + $0x4a8] sm:$0xff]
    %v178 = vld [vmem:[%s1 + $0x4b0] sm:$0xff]
    %v179 = vld [vmem:[%s1 + $0x4b8] sm:$0xff]
    %v180 = vld [vmem:[%s1 + $0x4c0] sm:$0xff]
    %v181 = vld [vmem:[%s1 + $0x4c8] sm:$0xff]
    %v182 = vld [vmem:[%s1 + $0x4d0] sm:$0xff]
    %v183 = vld [vmem:[%s1 + $0x4d8] sm:$0xff]
    %v184 = vld [vmem:[%s1 + $0x4e0] sm:$0xff]
    %v185 = vld [vmem:[%s1 + $0x4e8] sm:$0xff]
    %v186 = vld [vmem:[%s1 + $0x4f0] sm:$0xff]
    %v187 = vld [vmem:[%s1 + $0x4f8] sm:$0xff]
    %v188 = vld [vmem:[%s1 + $0x500] sm:$0xff]
    %v189 = vld [vmem:[%s1 + $0x508] sm:$0xff]
    %v190 = vld [vmem:[%s1 + $0x510] sm:$0xff]
    %v191 = vld [vmem:[%s1 + $0x518] sm:$0xff]
    %v192 = vld [vmem:[%s1 + $0x520] sm:$0xff]
    %v193 = vld [vmem:[%s1 + $0x528] sm:$0xff]
    %v194 = vld [vmem:[%s1 + $0x530] sm:$0xff]
    %v195 = vld [vmem:[%s1 + $0x538] sm:$0xff]
    %v196 = vld [vmem:[%s1 + $0x540] sm:$0xff]
    %v197 = vld [vmem:[%s1 + $0x548] sm:$0xff]
    %v198 = vld [vmem:[%s1 + $0x550] sm:$0xff]
    %v199 = vld [vmem:[%s1 + $0x558] sm:$0xff]
    %v200 = vld [vmem:[%s1 + $0x560] sm:$0xff]
    %v201 = vld [vmem:[%s1 + $0x568] sm:$0xff]
    %v202 = vld [vmem:[%s1 + $0x570] sm:$0xff]
    %v203 = vld [vmem:[%s1 + $0x578] sm:$0xff]
    %v204 = vld [vmem:[%s1 + $0x580] sm:$0xff]
    %v205 = vld [vmem:[%s1 + $0x588] sm:$0xff]
    %v206 = vld [vmem:[%s1 + $0x590] sm:$0xff]
    %v207 = vld [vmem:[%s1 + $0x598] sm:$0xff]
    %v208 = vld [vmem:[%s1 + $0x5a0] sm:$0xff]
    %v209 = vld [vmem:[%s1 + $0x5a8] sm:$0xff]
    %v210 = vld [vmem:[%s1 + $0x5b0] sm:$0xff]
    %v211 = vld [vmem:[%s1 + $0x5b8] sm:$0xff]
    %v212 = vld [vmem:[%s1 + $0x5c0] sm:$0xff]
    %v213 = vld [vmem:[%s1 + $0x5c8] sm:$0xff]
    %v214 = vld [vmem:[%s1 + $0x5d0] sm:$0xff]
    %v215 = vld [vmem:[%s1 + $0x5d8] sm:$0xff]
    %v216 = vld [vmem:[%s1 + $0x5e0] sm:$0xff]
    %v217 = vld [vmem:[%s1 + $0x5e8] sm:$0xff]
    %v218 = vld [vmem:[%s1 + $0x5f0] sm:$0xff]
    %v219 = vld [vmem:[%s1 + $0x5f8] sm:$0xff]
    %v220 = vld [vmem:[%s1 + $0x600] sm:$0xff]
    %v221 = vld [vmem:[%s1 + $0x608] sm:$0xff]
    %v222 = vld [vmem:[%s1 + $0x610] sm:$0xff]
    %v223 = vld [vmem:[%s1 + $0x618] sm:$0xff]
    %v224 = vld [vmem:[%s1 + $0x620] sm:$0xff]
    %v225 = vld [vmem:[%s1 + $0x628] sm:$0xff]
    %v226 = vld [vmem:[%s1 + $0x630] sm:$0xff]
    %v227 = vld [vmem:[%s1 + $0x638] sm:$0xff]
    %v228 = vld [vmem:[%s2] sm:$0x3]
    %v230 = vperm.slane %v228, 0
    %v231 = vperm.slane %v228, 1
    %vm234 = vcmask 261120
    %v236 = vsel %vm234, %v27, 0
    %238 = vmatpush.msra.mxu0 %v58
    %239 = vmatpush.msra.mxu0 %v56
    %240 = vmatpush.msra.mxu0 %v54
    %241 = vmatpush.msra.mxu0 %v52
    %242 = vmatpush.msra.mxu0 %v50
    %243 = vmatpush.msra.mxu0 %v48
    %244 = vmatpush.msra.mxu0 %v46
    %245 = vmatpush.msra.mxu0 %v44
    %246 = vmatpush.msra.mxu0 %v42
    %247 = vmatpush.msra.mxu0 %v40
    %248 = vmatpush.msra.mxu0 %v38
    %249 = vmatpush.msra.mxu0 %v36
    %250 = vmatpush.msra.mxu0 %v34
    %251 = vmatpush.msra.mxu0 %v32
    %252 = vmatpush.msra.mxu0 %v30
    %253 = vmatpush.msra.mxu0 %v28
    %254 = vmatmul.f32.gmra.mxu0 %v21
    %v255 = vpop.f32.mrf.mxu0
    %v256 = vadd.f32 %v230, %v255
    %257 = vdwg.mxu0
    %258 = vmatpush.msra.mxu0 %v90
    %259 = vmatpush.msra.mxu0 %v88
    %260 = vmatpush.msra.mxu0 %v86
    %261 = vmatpush.msra.mxu0 %v84
    %262 = vmatpush.msra.mxu0 %v82
    %263 = vmatpush.msra.mxu0 %v80
    %264 = vmatpush.msra.mxu0 %v78
    %265 = vmatpush.msra.mxu0 %v76
    %266 = vmatpush.msra.mxu0 %v74
    %267 = vmatpush.msra.mxu0 %v72
    %268 = vmatpush.msra.mxu0 %v70
    %269 = vmatpush.msra.mxu0 %v68
    %270 = vmatpush.msra.mxu0 %v66
    %271 = vmatpush.msra.mxu0 %v64
    %272 = vmatpush.msra.mxu0 %v62
    %273 = vmatpush.msra.mxu0 %v60
    %274 = vmatmul.f32.gmra.mxu0 %v22
    %v275 = vpop.f32.mrf.mxu0
    %v276 = vadd.f32 %v256, %v275
    %277 = vdwg.mxu0
    %278 = vmatpush.msra.mxu0 %v122
    %279 = vmatpush.msra.mxu0 %v120
    %280 = vmatpush.msra.mxu0 %v118
    %281 = vmatpush.msra.mxu0 %v116
    %282 = vmatpush.msra.mxu0 %v114
    %283 = vmatpush.msra.mxu0 %v112
    %284 = vmatpush.msra.mxu0 %v110
    %285 = vmatpush.msra.mxu0 %v108
    %286 = vmatpush.msra.mxu0 %v106
    %287 = vmatpush.msra.mxu0 %v104
    %288 = vmatpush.msra.mxu0 %v102
    %289 = vmatpush.msra.mxu0 %v100
    %290 = vmatpush.msra.mxu0 %v98
    %291 = vmatpush.msra.mxu0 %v96
    %292 = vmatpush.msra.mxu0 %v94
    %293 = vmatpush.msra.mxu0 %v92
    %294 = vmatmul.f32.gmra.mxu0 %v23
    %v295 = vpop.f32.mrf.mxu0
    %v296 = vadd.f32 %v276, %v295
    %297 = vdwg.mxu0
    %298 = vmatpush.msra.mxu0 %v154
    %299 = vmatpush.msra.mxu0 %v152
    %300 = vmatpush.msra.mxu0 %v150
    %301 = vmatpush.msra.mxu0 %v148
    %302 = vmatpush.msra.mxu0 %v146
    %303 = vmatpush.msra.mxu0 %v144
    %304 = vmatpush.msra.mxu0 %v142
    %305 = vmatpush.msra.mxu0 %v140
    %306 = vmatpush.msra.mxu0 %v138
    %307 = vmatpush.msra.mxu0 %v136
    %308 = vmatpush.msra.mxu0 %v134
    %309 = vmatpush.msra.mxu0 %v132
    %310 = vmatpush.msra.mxu0 %v130
    %311 = vmatpush.msra.mxu0 %v128
    %312 = vmatpush.msra.mxu0 %v126
    %313 = vmatpush.msra.mxu0 %v124
    %314 = vmatmul.f32.gmra.mxu0 %v24
    %v315 = vpop.f32.mrf.mxu0
    %v316 = vadd.f32 %v296, %v315
    %317 = vdwg.mxu0
    %318 = vmatpush.msra.mxu0 %v186
    %319 = vmatpush.msra.mxu0 %v184
    %320 = vmatpush.msra.mxu0 %v182
    %321 = vmatpush.msra.mxu0 %v180
    %322 = vmatpush.msra.mxu0 %v178
    %323 = vmatpush.msra.mxu0 %v176
    %324 = vmatpush.msra.mxu0 %v174
    %325 = vmatpush.msra.mxu0 %v172
    %326 = vmatpush.msra.mxu0 %v170
    %327 = vmatpush.msra.mxu0 %v168
    %328 = vmatpush.msra.mxu0 %v166
    %329 = vmatpush.msra.mxu0 %v164
    %330 = vmatpush.msra.mxu0 %v162
    %331 = vmatpush.msra.mxu0 %v160
    %332 = vmatpush.msra.mxu0 %v158
    %333 = vmatpush.msra.mxu0 %v156
    %334 = vmatmul.f32.gmra.mxu0 %v25
    %v335 = vpop.f32.mrf.mxu0
    %v336 = vadd.f32 %v316, %v335
    %337 = vdwg.mxu0
    %338 = vmatpush.msra.mxu0 %v218
    %339 = vmatpush.msra.mxu0 %v216
    %340 = vmatpush.msra.mxu0 %v214
    %341 = vmatpush.msra.mxu0 %v212
    %342 = vmatpush.msra.mxu0 %v210
    %343 = vmatpush.msra.mxu0 %v208
    %344 = vmatpush.msra.mxu0 %v206
    %345 = vmatpush.msra.mxu0 %v204
    %346 = vmatpush.msra.mxu0 %v202
    %347 = vmatpush.msra.mxu0 %v200
    %348 = vmatpush.msra.mxu0 %v198
    %349 = vmatpush.msra.mxu0 %v196
    %350 = vmatpush.msra.mxu0 %v194
    %351 = vmatpush.msra.mxu0 %v192
    %352 = vmatpush.msra.mxu0 %v190
    %353 = vmatpush.msra.mxu0 %v188
    %354 = vmatmul.f32.gmra.mxu0 %v26
    %v355 = vpop.f32.mrf.mxu0
    %v356 = vadd.f32 %v336, %v355
    %357 = vdwg.mxu0
    %358 = vmatpush.msra.mxu0 0.0
    %359 = vmatpush.msra.mxu0 0.0
    %360 = vmatpush.msra.mxu0 0.0
    %361 = vmatpush.msra.mxu0 0.0
    %362 = vmatpush.msra.mxu0 0.0
    %363 = vmatpush.msra.mxu0 0.0
    %364 = vmatpush.msra.mxu0 0.0
    %365 = vmatpush.msra.mxu0 0.0
    %366 = vmatpush.msra.mxu0 0.0
    %367 = vmatpush.msra.mxu0 0.0
    %368 = vmatpush.msra.mxu0 0.0
    %369 = vmatpush.msra.mxu0 0.0
    %370 = vmatpush.msra.mxu0 %v226
    %371 = vmatpush.msra.mxu0 %v224
    %372 = vmatpush.msra.mxu0 %v222
    %373 = vmatpush.msra.mxu0 %v220
    %374 = vmatmul.f32.gmra.mxu0 %v236
    %v375 = vpop.f32.mrf.mxu0
    %v376 = vadd.f32 %v356, %v375
    %377 = vdwg.mxu0
    %378 = vmatpush.msra.mxu0 %v59
    %379 = vmatpush.msra.mxu0 %v57
    %380 = vmatpush.msra.mxu0 %v55
    %381 = vmatpush.msra.mxu0 %v53
    %382 = vmatpush.msra.mxu0 %v51
    %383 = vmatpush.msra.mxu0 %v49
    %384 = vmatpush.msra.mxu0 %v47
    %385 = vmatpush.msra.mxu0 %v45
    %386 = vmatpush.msra.mxu0 %v43
    %387 = vmatpush.msra.mxu0 %v41
    %388 = vmatpush.msra.mxu0 %v39
    %389 = vmatpush.msra.mxu0 %v37
    %390 = vmatpush.msra.mxu0 %v35
    %391 = vmatpush.msra.mxu0 %v33
    %392 = vmatpush.msra.mxu0 %v31
    %393 = vmatpush.msra.mxu0 %v29
    %394 = vmatmul.f32.gmra.mxu0 %v21
    %v395 = vpop.f32.mrf.mxu0
    %v396 = vadd.f32 %v231, %v395
    %397 = vdwg.mxu0
    %398 = vmatpush.msra.mxu0 %v91
    %399 = vmatpush.msra.mxu0 %v89
    %400 = vmatpush.msra.mxu0 %v87
    %401 = vmatpush.msra.mxu0 %v85
    %402 = vmatpush.msra.mxu0 %v83
    %403 = vmatpush.msra.mxu0 %v81
    %404 = vmatpush.msra.mxu0 %v79
    %405 = vmatpush.msra.mxu0 %v77
    %406 = vmatpush.msra.mxu0 %v75
    %407 = vmatpush.msra.mxu0 %v73
    %408 = vmatpush.msra.mxu0 %v71
    %409 = vmatpush.msra.mxu0 %v69
    %410 = vmatpush.msra.mxu0 %v67
    %411 = vmatpush.msra.mxu0 %v65
    %412 = vmatpush.msra.mxu0 %v63
    %413 = vmatpush.msra.mxu0 %v61
    %414 = vmatmul.f32.gmra.mxu0 %v22
    %v415 = vpop.f32.mrf.mxu0
    %v416 = vadd.f32 %v396, %v415
    %417 = vdwg.mxu0
    %418 = vmatpush.msra.mxu0 %v123
    %419 = vmatpush.msra.mxu0 %v121
    %420 = vmatpush.msra.mxu0 %v119
    %421 = vmatpush.msra.mxu0 %v117
    %422 = vmatpush.msra.mxu0 %v115
    %423 = vmatpush.msra.mxu0 %v113
    %424 = vmatpush.msra.mxu0 %v111
    %425 = vmatpush.msra.mxu0 %v109
    %426 = vmatpush.msra.mxu0 %v107
    %427 = vmatpush.msra.mxu0 %v105
    %428 = vmatpush.msra.mxu0 %v103
    %429 = vmatpush.msra.mxu0 %v101
    %430 = vmatpush.msra.mxu0 %v99
    %431 = vmatpush.msra.mxu0 %v97
    %432 = vmatpush.msra.mxu0 %v95
    %433 = vmatpush.msra.mxu0 %v93
    %434 = vmatmul.f32.gmra.mxu0 %v23
    %v435 = vpop.f32.mrf.mxu0
    %v436 = vadd.f32 %v416, %v435
    %437 = vdwg.mxu0
    %438 = vmatpush.msra.mxu0 %v155
    %439 = vmatpush.msra.mxu0 %v153
    %440 = vmatpush.msra.mxu0 %v151
    %441 = vmatpush.msra.mxu0 %v149
    %442 = vmatpush.msra.mxu0 %v147
    %443 = vmatpush.msra.mxu0 %v145
    %444 = vmatpush.msra.mxu0 %v143
    %445 = vmatpush.msra.mxu0 %v141
    %446 = vmatpush.msra.mxu0 %v139
    %447 = vmatpush.msra.mxu0 %v137
    %448 = vmatpush.msra.mxu0 %v135
    %449 = vmatpush.msra.mxu0 %v133
    %450 = vmatpush.msra.mxu0 %v131
    %451 = vmatpush.msra.mxu0 %v129
    %452 = vmatpush.msra.mxu0 %v127
    %453 = vmatpush.msra.mxu0 %v125
    %454 = vmatmul.f32.gmra.mxu0 %v24
    %v455 = vpop.f32.mrf.mxu0
    %v456 = vadd.f32 %v436, %v455
    %457 = vdwg.mxu0
    %458 = vmatpush.msra.mxu0 %v187
    %459 = vmatpush.msra.mxu0 %v185
    %460 = vmatpush.msra.mxu0 %v183
    %461 = vmatpush.msra.mxu0 %v181
    %462 = vmatpush.msra.mxu0 %v179
    %463 = vmatpush.msra.mxu0 %v177
    %464 = vmatpush.msra.mxu0 %v175
    %465 = vmatpush.msra.mxu0 %v173
    %466 = vmatpush.msra.mxu0 %v171
    %467 = vmatpush.msra.mxu0 %v169
    %468 = vmatpush.msra.mxu0 %v167
    %469 = vmatpush.msra.mxu0 %v165
    %470 = vmatpush.msra.mxu0 %v163
    %471 = vmatpush.msra.mxu0 %v161
    %472 = vmatpush.msra.mxu0 %v159
    %473 = vmatpush.msra.mxu0 %v157
    %474 = vmatmul.f32.gmra.mxu0 %v25
    %v475 = vpop.f32.mrf.mxu0
    %v476 = vadd.f32 %v456, %v475
    %477 = vdwg.mxu0
    %478 = vmatpush.msra.mxu0 %v219
    %479 = vmatpush.msra.mxu0 %v217
    %480 = vmatpush.msra.mxu0 %v215
    %481 = vmatpush.msra.mxu0 %v213
    %482 = vmatpush.msra.mxu0 %v211
    %483 = vmatpush.msra.mxu0 %v209
    %484 = vmatpush.msra.mxu0 %v207
    %485 = vmatpush.msra.mxu0 %v205
    %486 = vmatpush.msra.mxu0 %v203
    %487 = vmatpush.msra.mxu0 %v201
    %488 = vmatpush.msra.mxu0 %v199
    %489 = vmatpush.msra.mxu0 %v197
    %490 = vmatpush.msra.mxu0 %v195
    %491 = vmatpush.msra.mxu0 %v193
    %492 = vmatpush.msra.mxu0 %v191
    %493 = vmatpush.msra.mxu0 %v189
    %494 = vmatmul.f32.gmra.mxu0 %v26
    %v495 = vpop.f32.mrf.mxu0
    %v496 = vadd.f32 %v476, %v495
    %497 = vdwg.mxu0
    %498 = vmatpush.msra.mxu0 0.0
    %499 = vmatpush.msra.mxu0 0.0
    %500 = vmatpush.msra.mxu0 0.0
    %501 = vmatpush.msra.mxu0 0.0
    %502 = vmatpush.msra.mxu0 0.0
    %503 = vmatpush.msra.mxu0 0.0
    %504 = vmatpush.msra.mxu0 0.0
    %505 = vmatpush.msra.mxu0 0.0
    %506 = vmatpush.msra.mxu0 0.0
    %507 = vmatpush.msra.mxu0 0.0
    %508 = vmatpush.msra.mxu0 0.0
    %509 = vmatpush.msra.mxu0 0.0
    %510 = vmatpush.msra.mxu0 %v227
    %511 = vmatpush.msra.mxu0 %v225
    %512 = vmatpush.msra.mxu0 %v223
    %513 = vmatpush.msra.mxu0 %v221
    %514 = vmatmul.f32.gmra.mxu0 %v236
    %v515 = vpop.f32.mrf.mxu0
    %v516 = vadd.f32 %v496, %v515
    %517 = vdwg.mxu0
    %v518 = vmax.f32 %v376, 0.0
    %v519 = vmax.f32 %v516, 0.0
    %v520 = vld [vmem:[%s3] sm:$0xff]
    %v521 = vld [vmem:[%s3 + $0x8] sm:$0xff]
    %v522 = vld [vmem:[%s3 + $0x10] sm:$0xff]
    %v523 = vld [vmem:[%s3 + $0x18] sm:$0xff]
    %v524 = vld [vmem:[%s3 + $0x20] sm:$0xff]
    %v525 = vld [vmem:[%s3 + $0x28] sm:$0xff]
    %v526 = vld [vmem:[%s3 + $0x30] sm:$0xff]
    %v527 = vld [vmem:[%s3 + $0x38] sm:$0xff]
    %v528 = vld [vmem:[%s3 + $0x40] sm:$0xff]
    %v529 = vld [vmem:[%s3 + $0x48] sm:$0xff]
    %v530 = vld [vmem:[%s3 + $0x50] sm:$0xff]
    %v531 = vld [vmem:[%s3 + $0x58] sm:$0xff]
    %v532 = vld [vmem:[%s3 + $0x60] sm:$0xff]
    %v533 = vld [vmem:[%s3 + $0x68] sm:$0xff]
    %v534 = vld [vmem:[%s3 + $0x70] sm:$0xff]
    %v535 = vld [vmem:[%s3 + $0x78] sm:$0xff]
    %v536 = vld [vmem:[%s3 + $0x80] sm:$0xff]
    %v537 = vld [vmem:[%s3 + $0x88] sm:$0xff]
    %v538 = vld [vmem:[%s3 + $0x90] sm:$0xff]
    %v539 = vld [vmem:[%s3 + $0x98] sm:$0xff]
    %v540 = vld [vmem:[%s3 + $0xa0] sm:$0xff]
    %v541 = vld [vmem:[%s3 + $0xa8] sm:$0xff]
    %v542 = vld [vmem:[%s3 + $0xb0] sm:$0xff]
    %v543 = vld [vmem:[%s3 + $0xb8] sm:$0xff]
    %v544 = vld [vmem:[%s3 + $0xc0] sm:$0xff]
    %v545 = vld [vmem:[%s3 + $0xc8] sm:$0xff]
    %v546 = vld [vmem:[%s3 + $0xd0] sm:$0xff]
    %v547 = vld [vmem:[%s3 + $0xd8] sm:$0xff]
    %v548 = vld [vmem:[%s3 + $0xe0] sm:$0xff]
    %v549 = vld [vmem:[%s3 + $0xe8] sm:$0xff]
    %v550 = vld [vmem:[%s3 + $0xf0] sm:$0xff]
    %v551 = vld [vmem:[%s3 + $0xf8] sm:$0xff]
    %v552 = vld [vmem:[%s4] sm:$0x1]
    %v554 = vperm.slane %v552, 0
    %556 = vmatpush.msra.mxu0 %v535
    %557 = vmatpush.msra.mxu0 %v534
    %558 = vmatpush.msra.mxu0 %v533
    %559 = vmatpush.msra.mxu0 %v532
    %560 = vmatpush.msra.mxu0 %v531
    %561 = vmatpush.msra.mxu0 %v530
    %562 = vmatpush.msra.mxu0 %v529
    %563 = vmatpush.msra.mxu0 %v528
    %564 = vmatpush.msra.mxu0 %v527
    %565 = vmatpush.msra.mxu0 %v526
    %566 = vmatpush.msra.mxu0 %v525
    %567 = vmatpush.msra.mxu0 %v524
    %568 = vmatpush.msra.mxu0 %v523
    %569 = vmatpush.msra.mxu0 %v522
    %570 = vmatpush.msra.mxu0 %v521
    %571 = vmatpush.msra.mxu0 %v520
    %572 = vmatmul.f32.gmra.mxu0 %v518
    %v573 = vpop.f32.mrf.mxu0
    %v574 = vadd.f32 %v554, %v573
    %575 = vdwg.mxu0
    %576 = vmatpush.msra.mxu0 %v551
    %577 = vmatpush.msra.mxu0 %v550
    %578 = vmatpush.msra.mxu0 %v549
    %579 = vmatpush.msra.mxu0 %v548
    %580 = vmatpush.msra.mxu0 %v547
    %581 = vmatpush.msra.mxu0 %v546
    %582 = vmatpush.msra.mxu0 %v545
    %583 = vmatpush.msra.mxu0 %v544
    %584 = vmatpush.msra.mxu0 %v543
    %585 = vmatpush.msra.mxu0 %v542
    %586 = vmatpush.msra.mxu0 %v541
    %587 = vmatpush.msra.mxu0 %v540
    %588 = vmatpush.msra.mxu0 %v539
    %589 = vmatpush.msra.mxu0 %v538
    %590 = vmatpush.msra.mxu0 %v537
    %591 = vmatpush.msra.mxu0 %v536
    %592 = vmatmul.f32.gmra.mxu0 %v519
    %v593 = vpop.f32.mrf.mxu0
    %v594 = vadd.f32 %v574, %v593
    %595 = vdwg.mxu0
    %vm596 = vcmask 80896
    %v597 = vsel %vm596, %v594, -inf
    %598 = vmax.xlane.f32.xlu0 %v597
    %v599 = vpop.xlane.xlu0 %598
    %v600 = vsub.f32 %v594, %v599
    %v601 = vmul.f32 %v600, 1.442695
    %v602 = vpow.pop %v601
    %v603 = vsel %vm596, %v602, 0.0
    %604 = vadd.xlane.f32.xlu0 %v603
    %v605 = vpop.xlane.xlu0 %604
    %v606 = vlog2.pop %v605
    %v607 = vmul.f32 %v606, 0.6931472
    %v608 = vsub.f32 %v600, %v607
    %609 = vst.msk [vmem:[#allocation2] sm:$0xff] %vm596, %v608
    // Predicated region
    $region22: #{cnn_forward.5} parent=1 // pred_check
      _
    $region23: #{cnn_forward.5} parent=1 // pred_check_branch
      %611 = sbr.rel (0) target = $region25
    $region24: #{cnn_forward.5} parent=1 // pred_region
      %613 = vsyncadd [#allocation3], 0
      %s615 = sshll.u32 [#allocation2], 4
      %s616 = int_to_ptr.vmem [resolvable:$true] %s615
      %s617 = sshll.u32 %s5, 4
      %s618 = int_to_ptr.hbm [resolvable:$true] %s617
      %620 = dma.vmem_to_hbm [thread:$0]  %s616, 128, %s618, [#allocation3]
    $region25: #{cnn_forward.5} parent=1 // pred_fallthru
      _
    // Predicated region
    $region26: #{cnn_forward.5} parent=1 // pred_check
      _
    $region27: #{cnn_forward.5} parent=1 // pred_check_branch
      %622 = sbr.rel (0) target = $region29
    $region28: #{cnn_forward.5} parent=1 // pred_region
      %624 = dma.done [#allocation3], 128
    $region29: #{cnn_forward.5} parent=1 // pred_fallthru
      _
    %625 = vsyncpa [#allocation3], 1

</llo_original>
